<compile_context>
chip_gen: v6e
topology: v6e:2x2x1
jax: 0.10.0
libtpu: 0.0.40
codegen_flags: <defaults>
</compile_context>

<pallas_src>
import numpy as np

import jax
import jax.numpy as jnp
from jax.experimental import pallas as pl
from jax.experimental.pallas import tpu as pltpu


# ---------------------------------------------------------------------------
# Fused Pallas kernel (single grid step, everything VMEM-resident)
# ---------------------------------------------------------------------------
def _unet_block_kernel(x_ref, tdn_ref, tup_ref, pbt_ref, g_ref, b_ref, o_ref):
    """Fused innermost UnetBlock forward.

    x_ref  : (N, C*H*W)          f32  input, image rows, channel-then-spatial on lanes
    tdn_ref: (C*H*W, ni*Ho*Wo)   bf16 folded Conv2d(k4,s2,p1)        operator (weights x gather)
    tup_ref: (ni*Ho*Wo, nf*H*W)  bf16 folded ConvTranspose2d(k4,s2,p1) operator
    pbt_ref: (nf, nf*H*W)        f32  0/1 pooling matrix, row c is 1 on channel c's lane block
    g_ref, b_ref : (1, nf)       f32  BatchNorm affine params
    o_ref  : (N, 2*nf*H*W)       f32  cat([x, model(x)], channel dim), flattened
    """
    n_batch, chw = x_ref.shape
    nf, nfhw = pbt_ref.shape
    hw = nfhw // nf

    x = x_ref[...]                                    # (N, C*HW) f32
    a = jnp.where(x > 0, x, 0.2 * x)                  # LeakyReLU(0.2), f32 VPU

    # ---- Conv2d(C -> ni, k=4, s=2, p=1, bias=False): ONE bf16 MXU matmul (f32 accum) ----
    y = jnp.dot(a.astype(jnp.bfloat16), tdn_ref[...],
                preferred_element_type=jnp.float32)   # (N, ni*HWo)
    r = jnp.maximum(y, 0.0)                           # ReLU, f32

    # ---- ConvTranspose2d(ni -> nf, k=4, s=2, p=1, bias=False): ONE bf16 MXU matmul ------
    u = jnp.dot(r.astype(jnp.bfloat16), tup_ref[...],
                preferred_element_type=jnp.float32)   # (N, nf*HW)

    # ---- BatchNorm2d(nf): training-mode batch stats (biased var, eps=1e-5), all f32 -----
    # Channels are contiguous lane blocks of width HW, so per-channel reductions and the
    # broadcast back to lanes are tiny matmuls against the 0/1 pooling matrix (the MXU has
    # plenty of slack here); no sublane row slicing, no in-kernel reshapes.
    pbt = pbt_ref[...]                                            # (nf, nf*HW)
    row_sum = jnp.sum(u, axis=0, keepdims=True)                   # (1, nf*HW)
    row_sumsq = jnp.sum(u * u, axis=0, keepdims=True)             # (1, nf*HW)
    stacked = jnp.concatenate([row_sum, row_sumsq], axis=0)       # (2, nf*HW)
    chan = jax.lax.dot_general(stacked, pbt, (((1,), (1,)), ((), ())),
                               preferred_element_type=jnp.float32)  # (2, nf)
    inv_cnt = 1.0 / float(n_batch * hw)
    mean = chan[0:1, :] * inv_cnt                                 # (1, nf)
    var = chan[1:2, :] * inv_cnt - mean * mean                    # biased variance
    scale = g_ref[...] * jax.lax.rsqrt(var + 1e-5)                # (1, nf)
    shift = b_ref[...] - mean * scale                             # (1, nf)
    lanes = jnp.dot(jnp.concatenate([scale, shift], axis=0), pbt,
                    preferred_element_type=jnp.float32)           # (2, nf*HW)
    bn = u * lanes[0:1, :] + lanes[1:2, :]                        # (N, nf*HW)

    # ---- fused skip concat: two full-width, 128-lane-aligned stores ---------------------
    o_ref[:, 0:chw] = x
    o_ref[:, chw:chw + nfhw] = bn


# ---------------------------------------------------------------------------
# One-time init-side packing (hoisted out of the jitted forward path)
# ---------------------------------------------------------------------------
def init_unet_block_params(w_down, w_up, gamma, beta, H, W):
    """Fold conv weights + static spatial taps into dense operators (host-side, once)."""
    w_down = np.asarray(w_down, np.float32)   # Conv2d weight        (ni, C,  4, 4)
    w_up = np.asarray(w_up, np.float32)       # ConvTranspose weight (ni, nf, 4, 4)
    ni, C, KH, KW = w_down.shape
    nf = w_up.shape[1]
    Ho, Wo = H // 2, W // 2
    HW, HWo = H * W, Ho * Wo
    K = KH * KW

    # Per-tap 0/1 selection (gather) matrices, built once on the host.
    sel_dn = np.zeros((K, HW, HWo), np.float32)
    sel_up = np.zeros((K, HWo, HW), np.float32)
    oh_o, ow_o = np.meshgrid(np.arange(Ho), np.arange(Wo), indexing="ij")
    q_dn = (oh_o * Wo + ow_o).ravel()
    oh_f, ow_f = np.meshgrid(np.arange(H), np.arange(W), indexing="ij")
    q_up = (oh_f * W + ow_f).ravel()
    for kh in range(KH):
        for kw in range(KW):
            k = kh * KW + kw
            # down conv: output (ho,wo), tap (kh,kw) reads input (2*ho-1+kh, 2*wo-1+kw)
            ih = 2 * oh_o - 1 + kh
            iw = 2 * ow_o - 1 + kw
            ok = ((ih >= 0) & (ih < H) & (iw >= 0) & (iw < W)).ravel()
            p = (ih * W + iw).ravel()
            sel_dn[k, p[ok], q_dn[ok]] = 1.0
            # transposed conv: output (oh,ow), tap (kh,kw) reads input ((oh+1-kh)/2, (ow+1-kw)/2)
            # when the parity matches and it is in range.
            th = oh_f + 1 - kh
            tw = ow_f + 1 - kw
            ok2 = ((th >= 0) & (tw >= 0) & (th % 2 == 0) & (tw % 2 == 0)
                   & (th // 2 < Ho) & (tw // 2 < Wo)).ravel()
            pin = ((th // 2) * Wo + (tw // 2)).ravel()
            sel_up[k, pin[ok2], q_up[ok2]] = 1.0

    # Fold the weights into the selection operators -> one dense matmul per conv.
    wk_dn = w_down.reshape(ni, C, K).transpose(2, 0, 1)                 # (K, ni, C)
    t_dn = np.einsum("kpq,koc->cpoq", sel_dn, wk_dn).reshape(C * HW, ni * HWo)
    wk_up = w_up.reshape(ni, nf, K).transpose(2, 0, 1)                  # (K, ni, nf)
    t_up = np.einsum("kpq,kio->ipoq", sel_up, wk_up).reshape(ni * HWo, nf * HW)

    # BatchNorm channel-pooling matrix (row c is 1 on channel c's lane block).
    pool_t = np.zeros((nf, nf * HW), np.float32)
    for c in range(nf):
        pool_t[c, c * HW:(c + 1) * HW] = 1.0

    return (jnp.asarray(t_dn, jnp.bfloat16),
            jnp.asarray(t_up, jnp.bfloat16),
            jnp.asarray(pool_t, jnp.float32),
            jnp.asarray(np.asarray(gamma, np.float32).reshape(1, nf)),
            jnp.asarray(np.asarray(beta, np.float32).reshape(1, nf)))


# ---------------------------------------------------------------------------
# Jitted forward wrapper
# ---------------------------------------------------------------------------
@jax.jit
def unet_block_forward(x_nchw, t_dn, t_up, bn_pool_t, gamma_row, beta_row):
    """cat([x, BN(ConvT(ReLU(Conv(LeakyReLU(x)))))], dim=1) for the innermost UnetBlock."""
    N, C, H, W = x_nchw.shape
    nf = bn_pool_t.shape[0]
    HW = H * W
    assert C * HW == t_dn.shape[0]
    assert bn_pool_t.shape[1] == nf * HW and t_up.shape[1] == nf * HW

    x_flat = x_nchw.reshape(N, C * HW).astype(jnp.float32)   # free reshape (NCHW is row-major)

    out_flat = pl.pallas_call(
        _unet_block_kernel,
        out_shape=jax.ShapeDtypeStruct((N, C * HW + nf * HW), jnp.float32),
        grid=(1,),
        in_specs=[
            pl.BlockSpec((N, C * HW), lambda i: (0, 0)),
            pl.BlockSpec(t_dn.shape, lambda i: (0, 0)),
            pl.BlockSpec(t_up.shape, lambda i: (0, 0)),
            pl.BlockSpec(bn_pool_t.shape, lambda i: (0, 0)),
            pl.BlockSpec(gamma_row.shape, lambda i: (0, 0)),
            pl.BlockSpec(beta_row.shape, lambda i: (0, 0)),
        ],
        out_specs=pl.BlockSpec((N, C * HW + nf * HW), lambda i: (0, 0)),
        compiler_params=pltpu.CompilerParams(dimension_semantics=("arbitrary",)),
    )(x_flat, t_dn, t_up, bn_pool_t, gamma_row, beta_row)

    return out_flat.reshape(N, C + nf, H, W)


# ---------------------------------------------------------------------------
# Pure-lax reference (correctness check only)
# ---------------------------------------------------------------------------
def _reference(x_nchw, w_down_pt, w_up_pt, gamma, beta):
    x = jnp.transpose(x_nchw, (0, 2, 3, 1))
    a = jnp.where(x > 0, x, 0.2 * x)
    w_d = jnp.transpose(w_down_pt, (2, 3, 1, 0))  # HWIO
    y = jax.lax.conv_general_dilated(
        a, w_d, (2, 2), ((1, 1), (1, 1)),
        dimension_numbers=("NHWC", "HWIO", "NHWC"),
        precision=jax.lax.Precision.HIGHEST)
    r = jnp.maximum(y, 0.0)
    w_u = jnp.transpose(w_up_pt[:, :, ::-1, ::-1], (2, 3, 0, 1))  # HWIO, flipped kernel
    u = jax.lax.conv_general_dilated(
        r, w_u, (1, 1), ((2, 2), (2, 2)), lhs_dilation=(2, 2),
        dimension_numbers=("NHWC", "HWIO", "NHWC"),
        precision=jax.lax.Precision.HIGHEST)
    mean = jnp.mean(u, axis=(0, 1, 2), keepdims=True)
    var = jnp.mean((u - mean) ** 2, axis=(0, 1, 2), keepdims=True)
    u = (u - mean) * jax.lax.rsqrt(var + 1e-5) * gamma.reshape(1, 1, 1, -1) \
        + beta.reshape(1, 1, 1, -1)
    u = jnp.transpose(u, (0, 3, 1, 2))
    return jnp.concatenate([x_nchw, u], axis=1)


if __name__ == "__main__":
    # UnetBlock(nf=4, ni=8, innermost=True); x: (2, 4, 16, 16)
    N, nf, ni, H, W = 2, 4, 8, 16, 16
    key = jax.random.PRNGKey(0)
    kx, kd, ku, kg, kb = jax.random.split(key, 5)

    x = jax.random.normal(kx, (N, nf, H, W), dtype=jnp.float32)
    # Conv2d(nf -> ni, k=4): weight (out=ni, in=nf, 4, 4)
    w_down_pt = 0.1 * jax.random.normal(kd, (ni, nf, 4, 4), dtype=jnp.float32)
    # ConvTranspose2d(ni -> nf, k=4): weight (in=ni, out=nf, 4, 4)
    w_up_pt = 0.1 * jax.random.normal(ku, (ni, nf, 4, 4), dtype=jnp.float32)
    # BatchNorm2d(nf) affine params
    gamma = 1.0 + 0.1 * jax.random.normal(kg, (nf,), dtype=jnp.float32)
    beta = 0.1 * jax.random.normal(kb, (nf,), dtype=jnp.float32)

    # One-time init-side packing (hoisted out of the per-call path).
    params = init_unet_block_params(w_down_pt, w_up_pt, gamma, beta, H, W)

    out = jax.block_until_ready(unet_block_forward(x, *params))
    assert out.shape == (N, 2 * nf, H, W), out.shape

    ref = jax.block_until_ready(_reference(x, w_down_pt, w_up_pt, gamma, beta))
    err = float(jnp.max(jnp.abs(out - ref)))
    # Tolerance sized for bf16 matmul operands with f32 accumulation: expected max-abs error
    # after BN normalization is O(1e-2); an all-f32 matmul path would be ~1e-5.
    assert jnp.allclose(out, ref, atol=3e-2, rtol=3e-2), err

    print("KERNEL_OK")
</pallas_src>

<mosaic_0001>
module attributes {stable_mosaic.version = 11 : i64} {
  func.func @_unet_block_kernel(%arg0: i32, %arg1: memref<2x1024xf32, #tpu.memory_space<vmem>>, %arg2: memref<1024x512xbf16, #tpu.memory_space<vmem>>, %arg3: memref<512x1024xbf16, #tpu.memory_space<vmem>>, %arg4: memref<4x1024xf32, #tpu.memory_space<vmem>>, %arg5: memref<1x4xf32, #tpu.memory_space<vmem>>, %arg6: memref<1x4xf32, #tpu.memory_space<vmem>>, %arg7: memref<2x2048xf32, #tpu.memory_space<vmem>>) attributes {dimension_semantics = [#tpu.dimension_semantics<arbitrary>], iteration_bounds = array<i64: 1>, scalar_prefetch = 0 : i64, scratch_operands = 0 : i64, tpu.core_type = #tpu.core_type<tc>, window_params = [{pipeline_mode = #tpu.pipeline_mode<synchronous>, transform_indices = @transform_0, window_bounds = array<i64: 2, 1024>}, {pipeline_mode = #tpu.pipeline_mode<synchronous>, transform_indices = @transform_1, window_bounds = array<i64: 1024, 512>}, {pipeline_mode = #tpu.pipeline_mode<synchronous>, transform_indices = @transform_2, window_bounds = array<i64: 512, 1024>}, {pipeline_mode = #tpu.pipeline_mode<synchronous>, transform_indices = @transform_3, window_bounds = array<i64: 4, 1024>}, {pipeline_mode = #tpu.pipeline_mode<synchronous>, transform_indices = @transform_4, window_bounds = array<i64: 1, 4>}, {pipeline_mode = #tpu.pipeline_mode<synchronous>, transform_indices = @transform_5, window_bounds = array<i64: 1, 4>}, {pipeline_mode = #tpu.pipeline_mode<synchronous>, transform_indices = @transform_6, window_bounds = array<i64: 2, 2048>}]} {
    %c0 = arith.constant 0 : index
    %c0_0 = arith.constant 0 : index
    %0 = vector.load %arg1[%c0, %c0_0] : memref<2x1024xf32, #tpu.memory_space<vmem>>, vector<2x1024xf32>
    %cst = arith.constant 0.000000e+00 : f32
    %1 = vector.broadcast %cst : f32 to vector<2x1024xf32>
    %2 = arith.cmpf ogt, %0, %1 : vector<2x1024xf32>
    %cst_1 = arith.constant 2.000000e-01 : f32
    %3 = vector.broadcast %cst_1 : f32 to vector<2x1024xf32>
    %4 = arith.mulf %3, %0 : vector<2x1024xf32>
    %5 = arith.select %2, %0, %4 : vector<2x1024xi1>, vector<2x1024xf32>
    %6 = arith.truncf %5 : vector<2x1024xf32> to vector<2x1024xbf16>
    %c0_2 = arith.constant 0 : index
    %c0_3 = arith.constant 0 : index
    %7 = vector.load %arg2[%c0_2, %c0_3] : memref<1024x512xbf16, #tpu.memory_space<vmem>>, vector<1024x512xbf16>
    %cst_4 = arith.constant dense<0.000000e+00> : vector<2x512xf32>
    %8 = tpu.matmul %6, %7, %cst_4 {dimension_numbers = #tpu.dot_dimension_numbers<[1], [0], [0], [1], [0, 0, 1, 1], [], []>} : vector<2x1024xbf16>, vector<1024x512xbf16>, vector<2x512xf32> -> vector<2x512xf32>
    %cst_5 = arith.constant 0.000000e+00 : f32
    %9 = vector.broadcast %cst_5 : f32 to vector<2x512xf32>
    %10 = arith.maximumf %8, %9 : vector<2x512xf32>
    %11 = arith.truncf %10 : vector<2x512xf32> to vector<2x512xbf16>
    %c0_6 = arith.constant 0 : index
    %c0_7 = arith.constant 0 : index
    %12 = vector.load %arg3[%c0_6, %c0_7] : memref<512x1024xbf16, #tpu.memory_space<vmem>>, vector<512x1024xbf16>
    %cst_8 = arith.constant dense<0.000000e+00> : vector<2x1024xf32>
    %13 = tpu.matmul %11, %12, %cst_8 {dimension_numbers = #tpu.dot_dimension_numbers<[1], [0], [0], [1], [0, 0, 1, 1], [], []>} : vector<2x512xbf16>, vector<512x1024xbf16>, vector<2x1024xf32> -> vector<2x1024xf32>
    %c0_9 = arith.constant 0 : index
    %c0_10 = arith.constant 0 : index
    %14 = vector.load %arg4[%c0_9, %c0_10] : memref<4x1024xf32, #tpu.memory_space<vmem>>, vector<4x1024xf32>
    %cst_11 = arith.constant dense<0.000000e+00> : vector<1024xf32>
    %15 = vector.multi_reduction <add>, %13, %cst_11 [0] : vector<2x1024xf32> to vector<1024xf32>
    %16 = vector.shape_cast %15 : vector<1024xf32> to vector<1x1024xf32>
    %17 = arith.mulf %13, %13 : vector<2x1024xf32>
    %cst_12 = arith.constant dense<0.000000e+00> : vector<1024xf32>
    %18 = vector.multi_reduction <add>, %17, %cst_12 [0] : vector<2x1024xf32> to vector<1024xf32>
    %19 = vector.shape_cast %18 : vector<1024xf32> to vector<1x1024xf32>
    %20 = tpu.concatenate %16, %19 in 0 : vector<1x1024xf32>, vector<1x1024xf32> -> vector<2x1024xf32>
    %cst_13 = arith.constant dense<0.000000e+00> : vector<2x4xf32>
    %21 = tpu.matmul %20, %14, %cst_13 {dimension_numbers = #tpu.dot_dimension_numbers<[1], [1], [0], [0], [0, 0, 1, 0], [], []>} : vector<2x1024xf32>, vector<4x1024xf32>, vector<2x4xf32> -> vector<2x4xf32>
    %22 = vector.extract_strided_slice %21 {offsets = [0, 0], sizes = [1, 4], strides = [1, 1]} : vector<2x4xf32> to vector<1x4xf32>
    %cst_14 = arith.constant 0.001953125 : f32
    %23 = vector.broadcast %cst_14 : f32 to vector<1x4xf32>
    %24 = arith.mulf %22, %23 : vector<1x4xf32>
    %25 = vector.extract_strided_slice %21 {offsets = [1, 0], sizes = [1, 4], strides = [1, 1]} : vector<2x4xf32> to vector<1x4xf32>
    %cst_15 = arith.constant 0.001953125 : f32
    %26 = vector.broadcast %cst_15 : f32 to vector<1x4xf32>
    %27 = arith.mulf %25, %26 : vector<1x4xf32>
    %28 = arith.mulf %24, %24 : vector<1x4xf32>
    %29 = arith.subf %27, %28 : vector<1x4xf32>
    %c0_16 = arith.constant 0 : index
    %c0_17 = arith.constant 0 : index
    %30 = vector.load %arg5[%c0_16, %c0_17] : memref<1x4xf32, #tpu.memory_space<vmem>>, vector<1x4xf32>
    %cst_18 = arith.constant 9.99999974E-6 : f32
    %31 = vector.broadcast %cst_18 : f32 to vector<1x4xf32>
    %32 = arith.addf %29, %31 : vector<1x4xf32>
    %33 = math.rsqrt %32 : vector<1x4xf32>
    %34 = arith.mulf %30, %33 : vector<1x4xf32>
    %c0_19 = arith.constant 0 : index
    %c0_20 = arith.constant 0 : index
    %35 = vector.load %arg6[%c0_19, %c0_20] : memref<1x4xf32, #tpu.memory_space<vmem>>, vector<1x4xf32>
    %36 = arith.mulf %24, %34 : vector<1x4xf32>
    %37 = arith.subf %35, %36 : vector<1x4xf32>
    %38 = tpu.concatenate %34, %37 in 0 : vector<1x4xf32>, vector<1x4xf32> -> vector<2x4xf32>
    %cst_21 = arith.constant dense<0.000000e+00> : vector<2x1024xf32>
    %39 = tpu.matmul %38, %14, %cst_21 {dimension_numbers = #tpu.dot_dimension_numbers<[1], [0], [0], [1], [0, 0, 1, 1], [], []>} : vector<2x4xf32>, vector<4x1024xf32>, vector<2x1024xf32> -> vector<2x1024xf32>
    %40 = vector.extract_strided_slice %39 {offsets = [0, 0], sizes = [1, 1024], strides = [1, 1]} : vector<2x1024xf32> to vector<1x1024xf32>
    %41 = vector.broadcast %40 : vector<1x1024xf32> to vector<2x1024xf32>
    %42 = arith.mulf %13, %41 : vector<2x1024xf32>
    %43 = vector.extract_strided_slice %39 {offsets = [1, 0], sizes = [1, 1024], strides = [1, 1]} : vector<2x1024xf32> to vector<1x1024xf32>
    %44 = vector.broadcast %43 : vector<1x1024xf32> to vector<2x1024xf32>
    %45 = arith.addf %42, %44 : vector<2x1024xf32>
    %c0_22 = arith.constant 0 : index
    %c0_23 = arith.constant 0 : index
    %46 = vector.load %arg7[%c0_22, %c0_23] : memref<2x2048xf32, #tpu.memory_space<vmem>>, vector<2x1024xf32>
    tpu.vector_store %arg7[%c0_22, %c0_23], %0 {strides = array<i32>} : memref<2x2048xf32, #tpu.memory_space<vmem>>, vector<2x1024xf32>,
    %c0_24 = arith.constant 0 : index
    %c1024 = arith.constant 1024 : index
    %47 = vector.load %arg7[%c0_24, %c1024] : memref<2x2048xf32, #tpu.memory_space<vmem>>, vector<2x1024xf32>
    tpu.vector_store %arg7[%c0_24, %c1024], %45 {strides = array<i32>} : memref<2x2048xf32, #tpu.memory_space<vmem>>, vector<2x1024xf32>,
    return
  }
  func.func @transform_0(%arg0: i32) -> (i32, i32) {
    %c0_i32 = arith.constant 0 : i32
    %c0_i32_0 = arith.constant 0 : i32
    %c0_i32_1 = arith.constant 0 : i32
    return %c0_i32, %c0_i32_0 : i32, i32
  }
  func.func @transform_1(%arg0: i32) -> (i32, i32) {
    %c0_i32 = arith.constant 0 : i32
    %c0_i32_0 = arith.constant 0 : i32
    %c0_i32_1 = arith.constant 0 : i32
    return %c0_i32, %c0_i32_0 : i32, i32
  }
  func.func @transform_2(%arg0: i32) -> (i32, i32) {
    %c0_i32 = arith.constant 0 : i32
    %c0_i32_0 = arith.constant 0 : i32
    %c0_i32_1 = arith.constant 0 : i32
    return %c0_i32, %c0_i32_0 : i32, i32
  }
  func.func @transform_3(%arg0: i32) -> (i32, i32) {
    %c0_i32 = arith.constant 0 : i32
    %c0_i32_0 = arith.constant 0 : i32
    %c0_i32_1 = arith.constant 0 : i32
    return %c0_i32, %c0_i32_0 : i32, i32
  }
  func.func @transform_4(%arg0: i32) -> (i32, i32) {
    %c0_i32 = arith.constant 0 : i32
    %c0_i32_0 = arith.constant 0 : i32
    %c0_i32_1 = arith.constant 0 : i32
    return %c0_i32, %c0_i32_0 : i32, i32
  }
  func.func @transform_5(%arg0: i32) -> (i32, i32) {
    %c0_i32 = arith.constant 0 : i32
    %c0_i32_0 = arith.constant 0 : i32
    %c0_i32_1 = arith.constant 0 : i32
    return %c0_i32, %c0_i32_0 : i32, i32
  }
  func.func @transform_6(%arg0: i32) -> (i32, i32) {
    %c0_i32 = arith.constant 0 : i32
    %c0_i32_0 = arith.constant 0 : i32
    %c0_i32_1 = arith.constant 0 : i32
    return %c0_i32, %c0_i32_0 : i32, i32
  }
}

</mosaic_0001>

<llo_original>
// kernel: unet_block_forward.1
$region0: #{unet_block_forward.1}
  #allocation0 [shape = 'u32[]', space=smem, size = 0x4, offset = 0x4, fixed_abs, tag = 'smem constant byte address 0x4 - core index']
  #allocation1 [shape = 'u32[144,128]{1,0:T(1,128)}', space=vmem, size = 0x12000, scoped, tag = 'internal scratch']
  %s0 = inlined_call_operand.vmem [shape: f32[2,1024], index: 0, kind: input, shape index: {}]
  %s1 = inlined_call_operand.hbm [shape: bf16[1024,512], index: 1, kind: input, shape index: {}]
  %s2 = inlined_call_operand.hbm [shape: bf16[512,1024], index: 2, kind: input, shape index: {}]
  %s3 = inlined_call_operand.vmem [shape: f32[4,1024], index: 3, kind: input, shape index: {}]
  %s4 = inlined_call_operand.vmem [shape: f32[1,4], index: 4, kind: input, shape index: {}]
  %s5 = inlined_call_operand.vmem [shape: f32[1,4], index: 5, kind: input, shape index: {}]
  %s6 = inlined_call_operand.vmem [shape: f32[2,2048], index: 6, kind: output, shape index: {}]
  %s7 = sld [smem:[#allocation0]]
  $region42: #{unet_block_forward.1} parent=0
    _
  %s9 = ssub.s32 1, %s7
  %s10 = scalar_select 0, %s9, %s7
  $region1: #{unet_block_forward.1} parent=0
    #allocation2 [shape = 'u8[1048576]{0}', space=vmem, size = 0x100000, scoped, tag = 'input window, operand 1, single buffered']
    #allocation3 [shape = 's32[1]{0}', space=sflag, size = 0x4, scoped, tag = 'scoped memory for unet_block_forward.1']
    #allocation4 [shape = 'u8[1048576]{0}', space=vmem, size = 0x100000, scoped, tag = 'input window, operand 2, single buffered']
    #allocation5 [shape = 's32[1]{0}', space=sflag, size = 0x4, scoped, tag = 'scoped memory for unet_block_forward.1']
    %11 = vsyncpa [#allocation3], 0
    %12 = vsyncpa [#allocation5], 0
    // Predicated region
    $region2: #{unet_block_forward.1} parent=1 // pred_check
      _
    $region3: #{unet_block_forward.1} parent=1 // pred_check_branch
      %14 = sbr.rel (0) target = $region5
    $region4: #{unet_block_forward.1} parent=1 // pred_region
      _
    $region5: #{unet_block_forward.1} parent=1 // pred_fallthru
      _
    // Predicated region
    $region6: #{unet_block_forward.1} parent=1 // pred_check
      _
    $region7: #{unet_block_forward.1} parent=1 // pred_check_branch
      %16 = sbr.rel (0) target = $region9
    $region8: #{unet_block_forward.1} parent=1 // pred_region
      %s18 = ssub.s32 32768, 32768
      %19 = vsyncadd [#allocation3], %s18
      %s20 = sshll.u32 [#allocation2], 4
      %s21 = int_to_ptr.vmem [resolvable:$true] %s20
      %26 = dma.hbm_to_vmem [thread:$0]  %s1, 32768, %s21, [#allocation3], 256, 256, 16
    $region9: #{unet_block_forward.1} parent=1 // pred_fallthru
      _
    // Predicated region
    $region10: #{unet_block_forward.1} parent=1 // pred_check
      _
    $region11: #{unet_block_forward.1} parent=1 // pred_check_branch
      %28 = sbr.rel (0) target = $region13
    $region12: #{unet_block_forward.1} parent=1 // pred_region
      %s30 = ssub.s32 32768, 32768
      %31 = vsyncadd [#allocation5], %s30
      %s32 = sshll.u32 [#allocation4], 4
      %s33 = int_to_ptr.vmem [resolvable:$true] %s32
      %38 = dma.hbm_to_vmem [thread:$0]  %s2, 32768, %s33, [#allocation5], 512, 512, 32
    $region13: #{unet_block_forward.1} parent=1 // pred_fallthru
      _
    // Predicated region
    $region14: #{unet_block_forward.1} parent=1 // pred_check
      _
    $region15: #{unet_block_forward.1} parent=1 // pred_check_branch
      %40 = sbr.rel (0) target = $region17
    $region16: #{unet_block_forward.1} parent=1 // pred_region
      _
    $region17: #{unet_block_forward.1} parent=1 // pred_fallthru
      _
    // Predicated region
    $region18: #{unet_block_forward.1} parent=1 // pred_check
      _
    $region19: #{unet_block_forward.1} parent=1 // pred_check_branch
      %42 = sbr.rel (0) target = $region21
    $region20: #{unet_block_forward.1} parent=1 // pred_region
      _
    $region21: #{unet_block_forward.1} parent=1 // pred_fallthru
      _
    // Predicated region
    $region22: #{unet_block_forward.1} parent=1 // pred_check
      _
    $region23: #{unet_block_forward.1} parent=1 // pred_check_branch
      %44 = sbr.rel (0) target = $region25
    $region24: #{unet_block_forward.1} parent=1 // pred_region
      _
    $region25: #{unet_block_forward.1} parent=1 // pred_fallthru
      _
    // Predicated region
    $region26: #{unet_block_forward.1} parent=1 // pred_check
      _
    $region27: #{unet_block_forward.1} parent=1 // pred_check_branch
      %46 = sbr.rel (0) target = $region29
    $region28: #{unet_block_forward.1} parent=1 // pred_region
      %47 = dma.done [#allocation3], 32768
    $region29: #{unet_block_forward.1} parent=1 // pred_fallthru
      _
    // Predicated region
    $region30: #{unet_block_forward.1} parent=1 // pred_check
      _
    $region31: #{unet_block_forward.1} parent=1 // pred_check_branch
      %49 = sbr.rel (0) target = $region33
    $region32: #{unet_block_forward.1} parent=1 // pred_region
      %50 = dma.done [#allocation5], 32768
    $region33: #{unet_block_forward.1} parent=1 // pred_fallthru
      _
    %v51 = vld [vmem:[%s0] sm:$0xff]
    %v52 = vld [vmem:[%s0 + $0x8] sm:$0xff]
    %vm53 = vcmp.gt.f32.partialorder %v51, 0.0
    %vm54 = vcmp.gt.f32.partialorder %v52, 0.0
    %v55 = vmul.f32 %v51, 0.2
    %v56 = vmul.f32 %v52, 0.2
    %v57 = vsel %vm53, %v51, %v55
    %v58 = vsel %vm54, %v52, %v56
    %v61 = vcombine.high %v57, %v57
    %v63 = vunpack.c.l.s4 1983009808
    %v64 = vunpack.c.0.s8 %v63
    %v65 = vlaneseq
    %v66 = vshrl.u32 %v65, 7
    %v67 = vsub.s32 %v64, %v66
    %v68 = vrot.slane %v57, %v67
    %v70 = vunpack.c.l.s4 1983009808
    %v71 = vunpack.c.0.s8 %v70
    %v72 = vlaneseq
    %v73 = vshrl.u32 %v72, 7
    %v74 = vsub.s32 %v71, %v73
    %v75 = vrot.slane %v61, %v74
    %v76 = vcombine.high %v68, %v68
    %v77 = vcombine.high %v75, %v75
    %v78 = vcombine.high %v58, %v58
    %v80 = vunpack.c.l.s4 1983009808
    %v81 = vunpack.c.0.s8 %v80
    %v82 = vlaneseq
    %v83 = vshrl.u32 %v82, 7
    %v84 = vsub.s32 %v81, %v83
    %v85 = vrot.slane %v58, %v84
    %v87 = vunpack.c.l.s4 1983009808
    %v88 = vunpack.c.0.s8 %v87
    %v89 = vlaneseq
    %v90 = vshrl.u32 %v89, 7
    %v91 = vsub.s32 %v88, %v90
    %v92 = vrot.slane %v78, %v91
    %v93 = vcombine.high %v85, %v85
    %v94 = vcombine.high %v92, %v92
    %v103 = vpack.c.bf16 %v68, %v68
    %v104 = vpack.c.bf16 %v76, %v76
    %v105 = vpack.c.bf16 %v75, %v75
    %v106 = vpack.c.bf16 %v77, %v77
    %v107 = vpack.c.bf16 %v85, %v85
    %v108 = vpack.c.bf16 %v93, %v93
    %v109 = vpack.c.bf16 %v92, %v92
    %v110 = vpack.c.bf16 %v94, %v94
    %v111 = vld [vmem:[#allocation2] sm:$0xff]
    %v112 = vld [vmem:[#allocation2 + $0x8] sm:$0xff]
    %v113 = vld [vmem:[#allocation2 + $0x10] sm:$0xff]
    %v114 = vld [vmem:[#allocation2 + $0x18] sm:$0xff]
    %v115 = vld [vmem:[#allocation2 + $0x20] sm:$0xff]
    %v116 = vld [vmem:[#allocation2 + $0x28] sm:$0xff]
    %v117 = vld [vmem:[#allocation2 + $0x30] sm:$0xff]
    %v118 = vld [vmem:[#allocation2 + $0x38] sm:$0xff]
    %v119 = vld [vmem:[#allocation2 + $0x40] sm:$0xff]
    %v120 = vld [vmem:[#allocation2 + $0x48] sm:$0xff]
    %v121 = vld [vmem:[#allocation2 + $0x50] sm:$0xff]
    %v122 = vld [vmem:[#allocation2 + $0x58] sm:$0xff]
    %v123 = vld [vmem:[#allocation2 + $0x60] sm:$0xff]
    %v124 = vld [vmem:[#allocation2 + $0x68] sm:$0xff]
    %v125 = vld [vmem:[#allocation2 + $0x70] sm:$0xff]
    %v126 = vld [vmem:[#allocation2 + $0x78] sm:$0xff]
    %v127 = vld [vmem:[#allocation2 + $0x80] sm:$0xff]
    %v128 = vld [vmem:[#allocation2 + $0x88] sm:$0xff]
    %v129 = vld [vmem:[#allocation2 + $0x90] sm:$0xff]
    %v130 = vld [vmem:[#allocation2 + $0x98] sm:$0xff]
    %v131 = vld [vmem:[#allocation2 + $0xa0] sm:$0xff]
    %v132 = vld [vmem:[#allocation2 + $0xa8] sm:$0xff]
    %v133 = vld [vmem:[#allocation2 + $0xb0] sm:$0xff]
    %v134 = vld [vmem:[#allocation2 + $0xb8] sm:$0xff]
    %v135 = vld [vmem:[#allocation2 + $0xc0] sm:$0xff]
    %v136 = vld [vmem:[#allocation2 + $0xc8] sm:$0xff]
    %v137 = vld [vmem:[#allocation2 + $0xd0] sm:$0xff]
    %v138 = vld [vmem:[#allocation2 + $0xd8] sm:$0xff]
    %v139 = vld [vmem:[#allocation2 + $0xe0] sm:$0xff]
    %v140 = vld [vmem:[#allocation2 + $0xe8] sm:$0xff]
    %v141 = vld [vmem:[#allocation2 + $0xf0] sm:$0xff]
    %v142 = vld [vmem:[#allocation2 + $0xf8] sm:$0xff]
    %v143 = vld [vmem:[#allocation2 + $0x100] sm:$0xff]
    %v144 = vld [vmem:[#allocation2 + $0x108] sm:$0xff]
    %v145 = vld [vmem:[#allocation2 + $0x110] sm:$0xff]
    %v146 = vld [vmem:[#allocation2 + $0x118] sm:$0xff]
    %v147 = vld [vmem:[#allocation2 + $0x120] sm:$0xff]
    %v148 = vld [vmem:[#allocation2 + $0x128] sm:$0xff]
    %v149 = vld [vmem:[#allocation2 + $0x130] sm:$0xff]
    %v150 = vld [vmem:[#allocation2 + $0x138] sm:$0xff]
    %v151 = vld [vmem:[#allocation2 + $0x140] sm:$0xff]
    %v152 = vld [vmem:[#allocation2 + $0x148] sm:$0xff]
    %v153 = vld [vmem:[#allocation2 + $0x150] sm:$0xff]
    %v154 = vld [vmem:[#allocation2 + $0x158] sm:$0xff]
    %v155 = vld [vmem:[#allocation2 + $0x160] sm:$0xff]
    %v156 = vld [vmem:[#allocation2 + $0x168] sm:$0xff]
    %v157 = vld [vmem:[#allocation2 + $0x170] sm:$0xff]
    %v158 = vld [vmem:[#allocation2 + $0x178] sm:$0xff]
    %v159 = vld [vmem:[#allocation2 + $0x180] sm:$0xff]
    %v160 = vld [vmem:[#allocation2 + $0x188] sm:$0xff]
    %v161 = vld [vmem:[#allocation2 + $0x190] sm:$0xff]
    %v162 = vld [vmem:[#allocation2 + $0x198] sm:$0xff]
    %v163 = vld [vmem:[#allocation2 + $0x1a0] sm:$0xff]
    %v164 = vld [vmem:[#allocation2 + $0x1a8] sm:$0xff]
    %v165 = vld [vmem:[#allocation2 + $0x1b0] sm:$0xff]
    %v166 = vld [vmem:[#allocation2 + $0x1b8] sm:$0xff]
    %v167 = vld [vmem:[#allocation2 + $0x1c0] sm:$0xff]
    %v168 = vld [vmem:[#allocation2 + $0x1c8] sm:$0xff]
    %v169 = vld [vmem:[#allocation2 + $0x1d0] sm:$0xff]
    %v170 = vld [vmem:[#allocation2 + $0x1d8] sm:$0xff]
    %v171 = vld [vmem:[#allocation2 + $0x1e0] sm:$0xff]
    %v172 = vld [vmem:[#allocation2 + $0x1e8] sm:$0xff]
    %v173 = vld [vmem:[#allocation2 + $0x1f0] sm:$0xff]
    %v174 = vld [vmem:[#allocation2 + $0x1f8] sm:$0xff]
    %v175 = vld [vmem:[#allocation2 + $0x200] sm:$0xff]
    %v176 = vld [vmem:[#allocation2 + $0x208] sm:$0xff]
    %v177 = vld [vmem:[#allocation2 + $0x210] sm:$0xff]
    %v178 = vld [vmem:[#allocation2 + $0x218] sm:$0xff]
    %v179 = vld [vmem:[#allocation2 + $0x220] sm:$0xff]
    %v180 = vld [vmem:[#allocation2 + $0x228] sm:$0xff]
    %v181 = vld [vmem:[#allocation2 + $0x230] sm:$0xff]
    %v182 = vld [vmem:[#allocation2 + $0x238] sm:$0xff]
    %v183 = vld [vmem:[#allocation2 + $0x240] sm:$0xff]
    %v184 = vld [vmem:[#allocation2 + $0x248] sm:$0xff]
    %v185 = vld [vmem:[#allocation2 + $0x250] sm:$0xff]
    %v186 = vld [vmem:[#allocation2 + $0x258] sm:$0xff]
    %v187 = vld [vmem:[#allocation2 + $0x260] sm:$0xff]
    %v188 = vld [vmem:[#allocation2 + $0x268] sm:$0xff]
    %v189 = vld [vmem:[#allocation2 + $0x270] sm:$0xff]
    %v190 = vld [vmem:[#allocation2 + $0x278] sm:$0xff]
    %v191 = vld [vmem:[#allocation2 + $0x280] sm:$0xff]
    %v192 = vld [vmem:[#allocation2 + $0x288] sm:$0xff]
    %v193 = vld [vmem:[#allocation2 + $0x290] sm:$0xff]
    %v194 = vld [vmem:[#allocation2 + $0x298] sm:$0xff]
    %v195 = vld [vmem:[#allocation2 + $0x2a0] sm:$0xff]
    %v196 = vld [vmem:[#allocation2 + $0x2a8] sm:$0xff]
    %v197 = vld [vmem:[#allocation2 + $0x2b0] sm:$0xff]
    %v198 = vld [vmem:[#allocation2 + $0x2b8] sm:$0xff]
    %v199 = vld [vmem:[#allocation2 + $0x2c0] sm:$0xff]
    %v200 = vld [vmem:[#allocation2 + $0x2c8] sm:$0xff]
    %v201 = vld [vmem:[#allocation2 + $0x2d0] sm:$0xff]
    %v202 = vld [vmem:[#allocation2 + $0x2d8] sm:$0xff]
    %v203 = vld [vmem:[#allocation2 + $0x2e0] sm:$0xff]
    %v204 = vld [vmem:[#allocation2 + $0x2e8] sm:$0xff]
    %v205 = vld [vmem:[#allocation2 + $0x2f0] sm:$0xff]
    %v206 = vld [vmem:[#allocation2 + $0x2f8] sm:$0xff]
    %v207 = vld [vmem:[#allocation2 + $0x300] sm:$0xff]
    %v208 = vld [vmem:[#allocation2 + $0x308] sm:$0xff]
    %v209 = vld [vmem:[#allocation2 + $0x310] sm:$0xff]
    %v210 = vld [vmem:[#allocation2 + $0x318] sm:$0xff]
    %v211 = vld [vmem:[#allocation2 + $0x320] sm:$0xff]
    %v212 = vld [vmem:[#allocation2 + $0x328] sm:$0xff]
    %v213 = vld [vmem:[#allocation2 + $0x330] sm:$0xff]
    %v214 = vld [vmem:[#allocation2 + $0x338] sm:$0xff]
    %v215 = vld [vmem:[#allocation2 + $0x340] sm:$0xff]
    %v216 = vld [vmem:[#allocation2 + $0x348] sm:$0xff]
    %v217 = vld [vmem:[#allocation2 + $0x350] sm:$0xff]
    %v218 = vld [vmem:[#allocation2 + $0x358] sm:$0xff]
    %v219 = vld [vmem:[#allocation2 + $0x360] sm:$0xff]
    %v220 = vld [vmem:[#allocation2 + $0x368] sm:$0xff]
    %v221 = vld [vmem:[#allocation2 + $0x370] sm:$0xff]
    %v222 = vld [vmem:[#allocation2 + $0x378] sm:$0xff]
    %v223 = vld [vmem:[#allocation2 + $0x380] sm:$0xff]
    %v224 = vld [vmem:[#allocation2 + $0x388] sm:$0xff]
    %v225 = vld [vmem:[#allocation2 + $0x390] sm:$0xff]
    %v226 = vld [vmem:[#allocation2 + $0x398] sm:$0xff]
    %v227 = vld [vmem:[#allocation2 + $0x3a0] sm:$0xff]
    %v228 = vld [vmem:[#allocation2 + $0x3a8] sm:$0xff]
    %v229 = vld [vmem:[#allocation2 + $0x3b0] sm:$0xff]
    %v230 = vld [vmem:[#allocation2 + $0x3b8] sm:$0xff]
    %v231 = vld [vmem:[#allocation2 + $0x3c0] sm:$0xff]
    %v232 = vld [vmem:[#allocation2 + $0x3c8] sm:$0xff]
    %v233 = vld [vmem:[#allocation2 + $0x3d0] sm:$0xff]
    %v234 = vld [vmem:[#allocation2 + $0x3d8] sm:$0xff]
    %v235 = vld [vmem:[#allocation2 + $0x3e0] sm:$0xff]
    %v236 = vld [vmem:[#allocation2 + $0x3e8] sm:$0xff]
    %v237 = vld [vmem:[#allocation2 + $0x3f0] sm:$0xff]
    %v238 = vld [vmem:[#allocation2 + $0x3f8] sm:$0xff]
    %v239 = vld [vmem:[#allocation2 + $0x400] sm:$0xff]
    %v240 = vld [vmem:[#allocation2 + $0x408] sm:$0xff]
    %v241 = vld [vmem:[#allocation2 + $0x410] sm:$0xff]
    %v242 = vld [vmem:[#allocation2 + $0x418] sm:$0xff]
    %v243 = vld [vmem:[#allocation2 + $0x420] sm:$0xff]
    %v244 = vld [vmem:[#allocation2 + $0x428] sm:$0xff]
    %v245 = vld [vmem:[#allocation2 + $0x430] sm:$0xff]
    %v246 = vld [vmem:[#allocation2 + $0x438] sm:$0xff]
    %v247 = vld [vmem:[#allocation2 + $0x440] sm:$0xff]
    %v248 = vld [vmem:[#allocation2 + $0x448] sm:$0xff]
    %v249 = vld [vmem:[#allocation2 + $0x450] sm:$0xff]
    %v250 = vld [vmem:[#allocation2 + $0x458] sm:$0xff]
    %v251 = vld [vmem:[#allocation2 + $0x460] sm:$0xff]
    %v252 = vld [vmem:[#allocation2 + $0x468] sm:$0xff]
    %v253 = vld [vmem:[#allocation2 + $0x470] sm:$0xff]
    %v254 = vld [vmem:[#allocation2 + $0x478] sm:$0xff]
    %v255 = vld [vmem:[#allocation2 + $0x480] sm:$0xff]
    %v256 = vld [vmem:[#allocation2 + $0x488] sm:$0xff]
    %v257 = vld [vmem:[#allocation2 + $0x490] sm:$0xff]
    %v258 = vld [vmem:[#allocation2 + $0x498] sm:$0xff]
    %v259 = vld [vmem:[#allocation2 + $0x4a0] sm:$0xff]
    %v260 = vld [vmem:[#allocation2 + $0x4a8] sm:$0xff]
    %v261 = vld [vmem:[#allocation2 + $0x4b0] sm:$0xff]
    %v262 = vld [vmem:[#allocation2 + $0x4b8] sm:$0xff]
    %v263 = vld [vmem:[#allocation2 + $0x4c0] sm:$0xff]
    %v264 = vld [vmem:[#allocation2 + $0x4c8] sm:$0xff]
    %v265 = vld [vmem:[#allocation2 + $0x4d0] sm:$0xff]
    %v266 = vld [vmem:[#allocation2 + $0x4d8] sm:$0xff]
    %v267 = vld [vmem:[#allocation2 + $0x4e0] sm:$0xff]
    %v268 = vld [vmem:[#allocation2 + $0x4e8] sm:$0xff]
    %v269 = vld [vmem:[#allocation2 + $0x4f0] sm:$0xff]
    %v270 = vld [vmem:[#allocation2 + $0x4f8] sm:$0xff]
    %v271 = vld [vmem:[#allocation2 + $0x500] sm:$0xff]
    %v272 = vld [vmem:[#allocation2 + $0x508] sm:$0xff]
    %v273 = vld [vmem:[#allocation2 + $0x510] sm:$0xff]
    %v274 = vld [vmem:[#allocation2 + $0x518] sm:$0xff]
    %v275 = vld [vmem:[#allocation2 + $0x520] sm:$0xff]
    %v276 = vld [vmem:[#allocation2 + $0x528] sm:$0xff]
    %v277 = vld [vmem:[#allocation2 + $0x530] sm:$0xff]
    %v278 = vld [vmem:[#allocation2 + $0x538] sm:$0xff]
    %v279 = vld [vmem:[#allocation2 + $0x540] sm:$0xff]
    %v280 = vld [vmem:[#allocation2 + $0x548] sm:$0xff]
    %v281 = vld [vmem:[#allocation2 + $0x550] sm:$0xff]
    %v282 = vld [vmem:[#allocation2 + $0x558] sm:$0xff]
    %v283 = vld [vmem:[#allocation2 + $0x560] sm:$0xff]
    %v284 = vld [vmem:[#allocation2 + $0x568] sm:$0xff]
    %v285 = vld [vmem:[#allocation2 + $0x570] sm:$0xff]
    %v286 = vld [vmem:[#allocation2 + $0x578] sm:$0xff]
    %v287 = vld [vmem:[#allocation2 + $0x580] sm:$0xff]
    %v288 = vld [vmem:[#allocation2 + $0x588] sm:$0xff]
    %v289 = vld [vmem:[#allocation2 + $0x590] sm:$0xff]
    %v290 = vld [vmem:[#allocation2 + $0x598] sm:$0xff]
    %v291 = vld [vmem:[#allocation2 + $0x5a0] sm:$0xff]
    %v292 = vld [vmem:[#allocation2 + $0x5a8] sm:$0xff]
    %v293 = vld [vmem:[#allocation2 + $0x5b0] sm:$0xff]
    %v294 = vld [vmem:[#allocation2 + $0x5b8] sm:$0xff]
    %v295 = vld [vmem:[#allocation2 + $0x5c0] sm:$0xff]
    %v296 = vld [vmem:[#allocation2 + $0x5c8] sm:$0xff]
    %v297 = vld [vmem:[#allocation2 + $0x5d0] sm:$0xff]
    %v298 = vld [vmem:[#allocation2 + $0x5d8] sm:$0xff]
    %v299 = vld [vmem:[#allocation2 + $0x5e0] sm:$0xff]
    %v300 = vld [vmem:[#allocation2 + $0x5e8] sm:$0xff]
    %v301 = vld [vmem:[#allocation2 + $0x5f0] sm:$0xff]
    %v302 = vld [vmem:[#allocation2 + $0x5f8] sm:$0xff]
    %v303 = vld [vmem:[#allocation2 + $0x600] sm:$0xff]
    %v304 = vld [vmem:[#allocation2 + $0x608] sm:$0xff]
    %v305 = vld [vmem:[#allocation2 + $0x610] sm:$0xff]
    %v306 = vld [vmem:[#allocation2 + $0x618] sm:$0xff]
    %v307 = vld [vmem:[#allocation2 + $0x620] sm:$0xff]
    %v308 = vld [vmem:[#allocation2 + $0x628] sm:$0xff]
    %v309 = vld [vmem:[#allocation2 + $0x630] sm:$0xff]
    %v310 = vld [vmem:[#allocation2 + $0x638] sm:$0xff]
    %v311 = vld [vmem:[#allocation2 + $0x640] sm:$0xff]
    %v312 = vld [vmem:[#allocation2 + $0x648] sm:$0xff]
    %v313 = vld [vmem:[#allocation2 + $0x650] sm:$0xff]
    %v314 = vld [vmem:[#allocation2 + $0x658] sm:$0xff]
    %v315 = vld [vmem:[#allocation2 + $0x660] sm:$0xff]
    %v316 = vld [vmem:[#allocation2 + $0x668] sm:$0xff]
    %v317 = vld [vmem:[#allocation2 + $0x670] sm:$0xff]
    %v318 = vld [vmem:[#allocation2 + $0x678] sm:$0xff]
    %v319 = vld [vmem:[#allocation2 + $0x680] sm:$0xff]
    %v320 = vld [vmem:[#allocation2 + $0x688] sm:$0xff]
    %v321 = vld [vmem:[#allocation2 + $0x690] sm:$0xff]
    %v322 = vld [vmem:[#allocation2 + $0x698] sm:$0xff]
    %v323 = vld [vmem:[#allocation2 + $0x6a0] sm:$0xff]
    %v324 = vld [vmem:[#allocation2 + $0x6a8] sm:$0xff]
    %v325 = vld [vmem:[#allocation2 + $0x6b0] sm:$0xff]
    %v326 = vld [vmem:[#allocation2 + $0x6b8] sm:$0xff]
    %v327 = vld [vmem:[#allocation2 + $0x6c0] sm:$0xff]
    %v328 = vld [vmem:[#allocation2 + $0x6c8] sm:$0xff]
    %v329 = vld [vmem:[#allocation2 + $0x6d0] sm:$0xff]
    %v330 = vld [vmem:[#allocation2 + $0x6d8] sm:$0xff]
    %v331 = vld [vmem:[#allocation2 + $0x6e0] sm:$0xff]
    %v332 = vld [vmem:[#allocation2 + $0x6e8] sm:$0xff]
    %v333 = vld [vmem:[#allocation2 + $0x6f0] sm:$0xff]
    %v334 = vld [vmem:[#allocation2 + $0x6f8] sm:$0xff]
    %v335 = vld [vmem:[#allocation2 + $0x700] sm:$0xff]
    %v336 = vld [vmem:[#allocation2 + $0x708] sm:$0xff]
    %v337 = vld [vmem:[#allocation2 + $0x710] sm:$0xff]
    %v338 = vld [vmem:[#allocation2 + $0x718] sm:$0xff]
    %v339 = vld [vmem:[#allocation2 + $0x720] sm:$0xff]
    %v340 = vld [vmem:[#allocation2 + $0x728] sm:$0xff]
    %v341 = vld [vmem:[#allocation2 + $0x730] sm:$0xff]
    %v342 = vld [vmem:[#allocation2 + $0x738] sm:$0xff]
    %v343 = vld [vmem:[#allocation2 + $0x740] sm:$0xff]
    %v344 = vld [vmem:[#allocation2 + $0x748] sm:$0xff]
    %v345 = vld [vmem:[#allocation2 + $0x750] sm:$0xff]
    %v346 = vld [vmem:[#allocation2 + $0x758] sm:$0xff]
    %v347 = vld [vmem:[#allocation2 + $0x760] sm:$0xff]
    %v348 = vld [vmem:[#allocation2 + $0x768] sm:$0xff]
    %v349 = vld [vmem:[#allocation2 + $0x770] sm:$0xff]
    %v350 = vld [vmem:[#allocation2 + $0x778] sm:$0xff]
    %v351 = vld [vmem:[#allocation2 + $0x780] sm:$0xff]
    %v352 = vld [vmem:[#allocation2 + $0x788] sm:$0xff]
    %v353 = vld [vmem:[#allocation2 + $0x790] sm:$0xff]
    %v354 = vld [vmem:[#allocation2 + $0x798] sm:$0xff]
    %v355 = vld [vmem:[#allocation2 + $0x7a0] sm:$0xff]
    %v356 = vld [vmem:[#allocation2 + $0x7a8] sm:$0xff]
    %v357 = vld [vmem:[#allocation2 + $0x7b0] sm:$0xff]
    %v358 = vld [vmem:[#allocation2 + $0x7b8] sm:$0xff]
    %v359 = vld [vmem:[#allocation2 + $0x7c0] sm:$0xff]
    %v360 = vld [vmem:[#allocation2 + $0x7c8] sm:$0xff]
    %v361 = vld [vmem:[#allocation2 + $0x7d0] sm:$0xff]
    %v362 = vld [vmem:[#allocation2 + $0x7d8] sm:$0xff]
    %v363 = vld [vmem:[#allocation2 + $0x7e0] sm:$0xff]
    %v364 = vld [vmem:[#allocation2 + $0x7e8] sm:$0xff]
    %v365 = vld [vmem:[#allocation2 + $0x7f0] sm:$0xff]
    %v366 = vld [vmem:[#allocation2 + $0x7f8] sm:$0xff]
    %v623 = vunpack.c.l.b16 %v111
    %v624 = vunpack.c.h.b16 %v111
    %v625 = vunpack.c.l.b16 %v112
    %v626 = vunpack.c.h.b16 %v112
    %v627 = vunpack.c.l.b16 %v113
    %v628 = vunpack.c.h.b16 %v113
    %v629 = vunpack.c.l.b16 %v114
    %v630 = vunpack.c.h.b16 %v114
    %v631 = vunpack.c.l.b16 %v115
    %v632 = vunpack.c.h.b16 %v115
    %v633 = vunpack.c.l.b16 %v116
    %v634 = vunpack.c.h.b16 %v116
    %v635 = vunpack.c.l.b16 %v117
    %v636 = vunpack.c.h.b16 %v117
    %v637 = vunpack.c.l.b16 %v118
    %v638 = vunpack.c.h.b16 %v118
    %v639 = vunpack.c.l.b16 %v119
    %v640 = vunpack.c.h.b16 %v119
    %v641 = vunpack.c.l.b16 %v120
    %v642 = vunpack.c.h.b16 %v120
    %v643 = vunpack.c.l.b16 %v121
    %v644 = vunpack.c.h.b16 %v121
    %v645 = vunpack.c.l.b16 %v122
    %v646 = vunpack.c.h.b16 %v122
    %v647 = vunpack.c.l.b16 %v123
    %v648 = vunpack.c.h.b16 %v123
    %v649 = vunpack.c.l.b16 %v124
    %v650 = vunpack.c.h.b16 %v124
    %v651 = vunpack.c.l.b16 %v125
    %v652 = vunpack.c.h.b16 %v125
    %v653 = vunpack.c.l.b16 %v126
    %v654 = vunpack.c.h.b16 %v126
    %v655 = vunpack.c.l.b16 %v127
    %v656 = vunpack.c.h.b16 %v127
    %v657 = vunpack.c.l.b16 %v128
    %v658 = vunpack.c.h.b16 %v128
    %v659 = vunpack.c.l.b16 %v129
    %v660 = vunpack.c.h.b16 %v129
    %v661 = vunpack.c.l.b16 %v130
    %v662 = vunpack.c.h.b16 %v130
    %v663 = vunpack.c.l.b16 %v131
    %v664 = vunpack.c.h.b16 %v131
    %v665 = vunpack.c.l.b16 %v132
    %v666 = vunpack.c.h.b16 %v132
    %v667 = vunpack.c.l.b16 %v133
    %v668 = vunpack.c.h.b16 %v133
    %v669 = vunpack.c.l.b16 %v134
    %v670 = vunpack.c.h.b16 %v134
    %v671 = vunpack.c.l.b16 %v135
    %v672 = vunpack.c.h.b16 %v135
    %v673 = vunpack.c.l.b16 %v136
    %v674 = vunpack.c.h.b16 %v136
    %v675 = vunpack.c.l.b16 %v137
    %v676 = vunpack.c.h.b16 %v137
    %v677 = vunpack.c.l.b16 %v138
    %v678 = vunpack.c.h.b16 %v138
    %v679 = vunpack.c.l.b16 %v139
    %v680 = vunpack.c.h.b16 %v139
    %v681 = vunpack.c.l.b16 %v140
    %v682 = vunpack.c.h.b16 %v140
    %v683 = vunpack.c.l.b16 %v141
    %v684 = vunpack.c.h.b16 %v141
    %v685 = vunpack.c.l.b16 %v142
    %v686 = vunpack.c.h.b16 %v142
    %v687 = vunpack.c.l.b16 %v143
    %v688 = vunpack.c.h.b16 %v143
    %v689 = vunpack.c.l.b16 %v144
    %v690 = vunpack.c.h.b16 %v144
    %v691 = vunpack.c.l.b16 %v145
    %v692 = vunpack.c.h.b16 %v145
    %v693 = vunpack.c.l.b16 %v146
    %v694 = vunpack.c.h.b16 %v146
    %v695 = vunpack.c.l.b16 %v147
    %v696 = vunpack.c.h.b16 %v147
    %v697 = vunpack.c.l.b16 %v148
    %v698 = vunpack.c.h.b16 %v148
    %v699 = vunpack.c.l.b16 %v149
    %v700 = vunpack.c.h.b16 %v149
    %v701 = vunpack.c.l.b16 %v150
    %v702 = vunpack.c.h.b16 %v150
    %v703 = vunpack.c.l.b16 %v151
    %v704 = vunpack.c.h.b16 %v151
    %v705 = vunpack.c.l.b16 %v152
    %v706 = vunpack.c.h.b16 %v152
    %v707 = vunpack.c.l.b16 %v153
    %v708 = vunpack.c.h.b16 %v153
    %v709 = vunpack.c.l.b16 %v154
    %v710 = vunpack.c.h.b16 %v154
    %v711 = vunpack.c.l.b16 %v155
    %v712 = vunpack.c.h.b16 %v155
    %v713 = vunpack.c.l.b16 %v156
    %v714 = vunpack.c.h.b16 %v156
    %v715 = vunpack.c.l.b16 %v157
    %v716 = vunpack.c.h.b16 %v157
    %v717 = vunpack.c.l.b16 %v158
    %v718 = vunpack.c.h.b16 %v158
    %v719 = vunpack.c.l.b16 %v159
    %v720 = vunpack.c.h.b16 %v159
    %v721 = vunpack.c.l.b16 %v160
    %v722 = vunpack.c.h.b16 %v160
    %v723 = vunpack.c.l.b16 %v161
    %v724 = vunpack.c.h.b16 %v161
    %v725 = vunpack.c.l.b16 %v162
    %v726 = vunpack.c.h.b16 %v162
    %v727 = vunpack.c.l.b16 %v163
    %v728 = vunpack.c.h.b16 %v163
    %v729 = vunpack.c.l.b16 %v164
    %v730 = vunpack.c.h.b16 %v164
    %v731 = vunpack.c.l.b16 %v165
    %v732 = vunpack.c.h.b16 %v165
    %v733 = vunpack.c.l.b16 %v166
    %v734 = vunpack.c.h.b16 %v166
    %v735 = vunpack.c.l.b16 %v167
    %v736 = vunpack.c.h.b16 %v167
    %v737 = vunpack.c.l.b16 %v168
    %v738 = vunpack.c.h.b16 %v168
    %v739 = vunpack.c.l.b16 %v169
    %v740 = vunpack.c.h.b16 %v169
    %v741 = vunpack.c.l.b16 %v170
    %v742 = vunpack.c.h.b16 %v170
    %v743 = vunpack.c.l.b16 %v171
    %v744 = vunpack.c.h.b16 %v171
    %v745 = vunpack.c.l.b16 %v172
    %v746 = vunpack.c.h.b16 %v172
    %v747 = vunpack.c.l.b16 %v173
    %v748 = vunpack.c.h.b16 %v173
    %v749 = vunpack.c.l.b16 %v174
    %v750 = vunpack.c.h.b16 %v174
    %v751 = vunpack.c.l.b16 %v175
    %v752 = vunpack.c.h.b16 %v175
    %v753 = vunpack.c.l.b16 %v176
    %v754 = vunpack.c.h.b16 %v176
    %v755 = vunpack.c.l.b16 %v177
    %v756 = vunpack.c.h.b16 %v177
    %v757 = vunpack.c.l.b16 %v178
    %v758 = vunpack.c.h.b16 %v178
    %v759 = vunpack.c.l.b16 %v179
    %v760 = vunpack.c.h.b16 %v179
    %v761 = vunpack.c.l.b16 %v180
    %v762 = vunpack.c.h.b16 %v180
    %v763 = vunpack.c.l.b16 %v181
    %v764 = vunpack.c.h.b16 %v181
    %v765 = vunpack.c.l.b16 %v182
    %v766 = vunpack.c.h.b16 %v182
    %v767 = vunpack.c.l.b16 %v183
    %v768 = vunpack.c.h.b16 %v183
    %v769 = vunpack.c.l.b16 %v184
    %v770 = vunpack.c.h.b16 %v184
    %v771 = vunpack.c.l.b16 %v185
    %v772 = vunpack.c.h.b16 %v185
    %v773 = vunpack.c.l.b16 %v186
    %v774 = vunpack.c.h.b16 %v186
    %v775 = vunpack.c.l.b16 %v187
    %v776 = vunpack.c.h.b16 %v187
    %v777 = vunpack.c.l.b16 %v188
    %v778 = vunpack.c.h.b16 %v188
    %v779 = vunpack.c.l.b16 %v189
    %v780 = vunpack.c.h.b16 %v189
    %v781 = vunpack.c.l.b16 %v190
    %v782 = vunpack.c.h.b16 %v190
    %v783 = vunpack.c.l.b16 %v191
    %v784 = vunpack.c.h.b16 %v191
    %v785 = vunpack.c.l.b16 %v192
    %v786 = vunpack.c.h.b16 %v192
    %v787 = vunpack.c.l.b16 %v193
    %v788 = vunpack.c.h.b16 %v193
    %v789 = vunpack.c.l.b16 %v194
    %v790 = vunpack.c.h.b16 %v194
    %v791 = vunpack.c.l.b16 %v195
    %v792 = vunpack.c.h.b16 %v195
    %v793 = vunpack.c.l.b16 %v196
    %v794 = vunpack.c.h.b16 %v196
    %v795 = vunpack.c.l.b16 %v197
    %v796 = vunpack.c.h.b16 %v197
    %v797 = vunpack.c.l.b16 %v198
    %v798 = vunpack.c.h.b16 %v198
    %v799 = vunpack.c.l.b16 %v199
    %v800 = vunpack.c.h.b16 %v199
    %v801 = vunpack.c.l.b16 %v200
    %v802 = vunpack.c.h.b16 %v200
    %v803 = vunpack.c.l.b16 %v201
    %v804 = vunpack.c.h.b16 %v201
    %v805 = vunpack.c.l.b16 %v202
    %v806 = vunpack.c.h.b16 %v202
    %v807 = vunpack.c.l.b16 %v203
    %v808 = vunpack.c.h.b16 %v203
    %v809 = vunpack.c.l.b16 %v204
    %v810 = vunpack.c.h.b16 %v204
    %v811 = vunpack.c.l.b16 %v205
    %v812 = vunpack.c.h.b16 %v205
    %v813 = vunpack.c.l.b16 %v206
    %v814 = vunpack.c.h.b16 %v206
    %v815 = vunpack.c.l.b16 %v207
    %v816 = vunpack.c.h.b16 %v207
    %v817 = vunpack.c.l.b16 %v208
    %v818 = vunpack.c.h.b16 %v208
    %v819 = vunpack.c.l.b16 %v209
    %v820 = vunpack.c.h.b16 %v209
    %v821 = vunpack.c.l.b16 %v210
    %v822 = vunpack.c.h.b16 %v210
    %v823 = vunpack.c.l.b16 %v211
    %v824 = vunpack.c.h.b16 %v211
    %v825 = vunpack.c.l.b16 %v212
    %v826 = vunpack.c.h.b16 %v212
    %v827 = vunpack.c.l.b16 %v213
    %v828 = vunpack.c.h.b16 %v213
    %v829 = vunpack.c.l.b16 %v214
    %v830 = vunpack.c.h.b16 %v214
    %v831 = vunpack.c.l.b16 %v215
    %v832 = vunpack.c.h.b16 %v215
    %v833 = vunpack.c.l.b16 %v216
    %v834 = vunpack.c.h.b16 %v216
    %v835 = vunpack.c.l.b16 %v217
    %v836 = vunpack.c.h.b16 %v217
    %v837 = vunpack.c.l.b16 %v218
    %v838 = vunpack.c.h.b16 %v218
    %v839 = vunpack.c.l.b16 %v219
    %v840 = vunpack.c.h.b16 %v219
    %v841 = vunpack.c.l.b16 %v220
    %v842 = vunpack.c.h.b16 %v220
    %v843 = vunpack.c.l.b16 %v221
    %v844 = vunpack.c.h.b16 %v221
    %v845 = vunpack.c.l.b16 %v222
    %v846 = vunpack.c.h.b16 %v222
    %v847 = vunpack.c.l.b16 %v223
    %v848 = vunpack.c.h.b16 %v223
    %v849 = vunpack.c.l.b16 %v224
    %v850 = vunpack.c.h.b16 %v224
    %v851 = vunpack.c.l.b16 %v225
    %v852 = vunpack.c.h.b16 %v225
    %v853 = vunpack.c.l.b16 %v226
    %v854 = vunpack.c.h.b16 %v226
    %v855 = vunpack.c.l.b16 %v227
    %v856 = vunpack.c.h.b16 %v227
    %v857 = vunpack.c.l.b16 %v228
    %v858 = vunpack.c.h.b16 %v228
    %v859 = vunpack.c.l.b16 %v229
    %v860 = vunpack.c.h.b16 %v229
    %v861 = vunpack.c.l.b16 %v230
    %v862 = vunpack.c.h.b16 %v230
    %v863 = vunpack.c.l.b16 %v231
    %v864 = vunpack.c.h.b16 %v231
    %v865 = vunpack.c.l.b16 %v232
    %v866 = vunpack.c.h.b16 %v232
    %v867 = vunpack.c.l.b16 %v233
    %v868 = vunpack.c.h.b16 %v233
    %v869 = vunpack.c.l.b16 %v234
    %v870 = vunpack.c.h.b16 %v234
    %v871 = vunpack.c.l.b16 %v235
    %v872 = vunpack.c.h.b16 %v235
    %v873 = vunpack.c.l.b16 %v236
    %v874 = vunpack.c.h.b16 %v236
    %v875 = vunpack.c.l.b16 %v237
    %v876 = vunpack.c.h.b16 %v237
    %v877 = vunpack.c.l.b16 %v238
    %v878 = vunpack.c.h.b16 %v238
    %v879 = vunpack.c.l.b16 %v239
    %v880 = vunpack.c.h.b16 %v239
    %v881 = vunpack.c.l.b16 %v240
    %v882 = vunpack.c.h.b16 %v240
    %v883 = vunpack.c.l.b16 %v241
    %v884 = vunpack.c.h.b16 %v241
    %v885 = vunpack.c.l.b16 %v242
    %v886 = vunpack.c.h.b16 %v242
    %v887 = vunpack.c.l.b16 %v243
    %v888 = vunpack.c.h.b16 %v243
    %v889 = vunpack.c.l.b16 %v244
    %v890 = vunpack.c.h.b16 %v244
    %v891 = vunpack.c.l.b16 %v245
    %v892 = vunpack.c.h.b16 %v245
    %v893 = vunpack.c.l.b16 %v246
    %v894 = vunpack.c.h.b16 %v246
    %v895 = vunpack.c.l.b16 %v247
    %v896 = vunpack.c.h.b16 %v247
    %v897 = vunpack.c.l.b16 %v248
    %v898 = vunpack.c.h.b16 %v248
    %v899 = vunpack.c.l.b16 %v249
    %v900 = vunpack.c.h.b16 %v249
    %v901 = vunpack.c.l.b16 %v250
    %v902 = vunpack.c.h.b16 %v250
    %v903 = vunpack.c.l.b16 %v251
    %v904 = vunpack.c.h.b16 %v251
    %v905 = vunpack.c.l.b16 %v252
    %v906 = vunpack.c.h.b16 %v252
    %v907 = vunpack.c.l.b16 %v253
    %v908 = vunpack.c.h.b16 %v253
    %v909 = vunpack.c.l.b16 %v254
    %v910 = vunpack.c.h.b16 %v254
    %v911 = vunpack.c.l.b16 %v255
    %v912 = vunpack.c.h.b16 %v255
    %v913 = vunpack.c.l.b16 %v256
    %v914 = vunpack.c.h.b16 %v256
    %v915 = vunpack.c.l.b16 %v257
    %v916 = vunpack.c.h.b16 %v257
    %v917 = vunpack.c.l.b16 %v258
    %v918 = vunpack.c.h.b16 %v258
    %v919 = vunpack.c.l.b16 %v259
    %v920 = vunpack.c.h.b16 %v259
    %v921 = vunpack.c.l.b16 %v260
    %v922 = vunpack.c.h.b16 %v260
    %v923 = vunpack.c.l.b16 %v261
    %v924 = vunpack.c.h.b16 %v261
    %v925 = vunpack.c.l.b16 %v262
    %v926 = vunpack.c.h.b16 %v262
    %v927 = vunpack.c.l.b16 %v263
    %v928 = vunpack.c.h.b16 %v263
    %v929 = vunpack.c.l.b16 %v264
    %v930 = vunpack.c.h.b16 %v264
    %v931 = vunpack.c.l.b16 %v265
    %v932 = vunpack.c.h.b16 %v265
    %v933 = vunpack.c.l.b16 %v266
    %v934 = vunpack.c.h.b16 %v266
    %v935 = vunpack.c.l.b16 %v267
    %v936 = vunpack.c.h.b16 %v267
    %v937 = vunpack.c.l.b16 %v268
    %v938 = vunpack.c.h.b16 %v268
    %v939 = vunpack.c.l.b16 %v269
    %v940 = vunpack.c.h.b16 %v269
    %v941 = vunpack.c.l.b16 %v270
    %v942 = vunpack.c.h.b16 %v270
    %v943 = vunpack.c.l.b16 %v271
    %v944 = vunpack.c.h.b16 %v271
    %v945 = vunpack.c.l.b16 %v272
    %v946 = vunpack.c.h.b16 %v272
    %v947 = vunpack.c.l.b16 %v273
    %v948 = vunpack.c.h.b16 %v273
    %v949 = vunpack.c.l.b16 %v274
    %v950 = vunpack.c.h.b16 %v274
    %v951 = vunpack.c.l.b16 %v275
    %v952 = vunpack.c.h.b16 %v275
    %v953 = vunpack.c.l.b16 %v276
    %v954 = vunpack.c.h.b16 %v276
    %v955 = vunpack.c.l.b16 %v277
    %v956 = vunpack.c.h.b16 %v277
    %v957 = vunpack.c.l.b16 %v278
    %v958 = vunpack.c.h.b16 %v278
    %v959 = vunpack.c.l.b16 %v279
    %v960 = vunpack.c.h.b16 %v279
    %v961 = vunpack.c.l.b16 %v280
    %v962 = vunpack.c.h.b16 %v280
    %v963 = vunpack.c.l.b16 %v281
    %v964 = vunpack.c.h.b16 %v281
    %v965 = vunpack.c.l.b16 %v282
    %v966 = vunpack.c.h.b16 %v282
    %v967 = vunpack.c.l.b16 %v283
    %v968 = vunpack.c.h.b16 %v283
    %v969 = vunpack.c.l.b16 %v284
    %v970 = vunpack.c.h.b16 %v284
    %v971 = vunpack.c.l.b16 %v285
    %v972 = vunpack.c.h.b16 %v285
    %v973 = vunpack.c.l.b16 %v286
    %v974 = vunpack.c.h.b16 %v286
    %v975 = vunpack.c.l.b16 %v287
    %v976 = vunpack.c.h.b16 %v287
    %v977 = vunpack.c.l.b16 %v288
    %v978 = vunpack.c.h.b16 %v288
    %v979 = vunpack.c.l.b16 %v289
    %v980 = vunpack.c.h.b16 %v289
    %v981 = vunpack.c.l.b16 %v290
    %v982 = vunpack.c.h.b16 %v290
    %v983 = vunpack.c.l.b16 %v291
    %v984 = vunpack.c.h.b16 %v291
    %v985 = vunpack.c.l.b16 %v292
    %v986 = vunpack.c.h.b16 %v292
    %v987 = vunpack.c.l.b16 %v293
    %v988 = vunpack.c.h.b16 %v293
    %v989 = vunpack.c.l.b16 %v294
    %v990 = vunpack.c.h.b16 %v294
    %v991 = vunpack.c.l.b16 %v295
    %v992 = vunpack.c.h.b16 %v295
    %v993 = vunpack.c.l.b16 %v296
    %v994 = vunpack.c.h.b16 %v296
    %v995 = vunpack.c.l.b16 %v297
    %v996 = vunpack.c.h.b16 %v297
    %v997 = vunpack.c.l.b16 %v298
    %v998 = vunpack.c.h.b16 %v298
    %v999 = vunpack.c.l.b16 %v299
    %v1000 = vunpack.c.h.b16 %v299
    %v1001 = vunpack.c.l.b16 %v300
    %v1002 = vunpack.c.h.b16 %v300
    %v1003 = vunpack.c.l.b16 %v301
    %v1004 = vunpack.c.h.b16 %v301
    %v1005 = vunpack.c.l.b16 %v302
    %v1006 = vunpack.c.h.b16 %v302
    %v1007 = vunpack.c.l.b16 %v303
    %v1008 = vunpack.c.h.b16 %v303
    %v1009 = vunpack.c.l.b16 %v304
    %v1010 = vunpack.c.h.b16 %v304
    %v1011 = vunpack.c.l.b16 %v305
    %v1012 = vunpack.c.h.b16 %v305
    %v1013 = vunpack.c.l.b16 %v306
    %v1014 = vunpack.c.h.b16 %v306
    %v1015 = vunpack.c.l.b16 %v307
    %v1016 = vunpack.c.h.b16 %v307
    %v1017 = vunpack.c.l.b16 %v308
    %v1018 = vunpack.c.h.b16 %v308
    %v1019 = vunpack.c.l.b16 %v309
    %v1020 = vunpack.c.h.b16 %v309
    %v1021 = vunpack.c.l.b16 %v310
    %v1022 = vunpack.c.h.b16 %v310
    %v1023 = vunpack.c.l.b16 %v311
    %v1024 = vunpack.c.h.b16 %v311
    %v1025 = vunpack.c.l.b16 %v312
    %v1026 = vunpack.c.h.b16 %v312
    %v1027 = vunpack.c.l.b16 %v313
    %v1028 = vunpack.c.h.b16 %v313
    %v1029 = vunpack.c.l.b16 %v314
    %v1030 = vunpack.c.h.b16 %v314
    %v1031 = vunpack.c.l.b16 %v315
    %v1032 = vunpack.c.h.b16 %v315
    %v1033 = vunpack.c.l.b16 %v316
    %v1034 = vunpack.c.h.b16 %v316
    %v1035 = vunpack.c.l.b16 %v317
    %v1036 = vunpack.c.h.b16 %v317
    %v1037 = vunpack.c.l.b16 %v318
    %v1038 = vunpack.c.h.b16 %v318
    %v1039 = vunpack.c.l.b16 %v319
    %v1040 = vunpack.c.h.b16 %v319
    %v1041 = vunpack.c.l.b16 %v320
    %v1042 = vunpack.c.h.b16 %v320
    %v1043 = vunpack.c.l.b16 %v321
    %v1044 = vunpack.c.h.b16 %v321
    %v1045 = vunpack.c.l.b16 %v322
    %v1046 = vunpack.c.h.b16 %v322
    %v1047 = vunpack.c.l.b16 %v323
    %v1048 = vunpack.c.h.b16 %v323
    %v1049 = vunpack.c.l.b16 %v324
    %v1050 = vunpack.c.h.b16 %v324
    %v1051 = vunpack.c.l.b16 %v325
    %v1052 = vunpack.c.h.b16 %v325
    %v1053 = vunpack.c.l.b16 %v326
    %v1054 = vunpack.c.h.b16 %v326
    %v1055 = vunpack.c.l.b16 %v327
    %v1056 = vunpack.c.h.b16 %v327
    %v1057 = vunpack.c.l.b16 %v328
    %v1058 = vunpack.c.h.b16 %v328
    %v1059 = vunpack.c.l.b16 %v329
    %v1060 = vunpack.c.h.b16 %v329
    %v1061 = vunpack.c.l.b16 %v330
    %v1062 = vunpack.c.h.b16 %v330
    %v1063 = vunpack.c.l.b16 %v331
    %v1064 = vunpack.c.h.b16 %v331
    %v1065 = vunpack.c.l.b16 %v332
    %v1066 = vunpack.c.h.b16 %v332
    %v1067 = vunpack.c.l.b16 %v333
    %v1068 = vunpack.c.h.b16 %v333
    %v1069 = vunpack.c.l.b16 %v334
    %v1070 = vunpack.c.h.b16 %v334
    %v1071 = vunpack.c.l.b16 %v335
    %v1072 = vunpack.c.h.b16 %v335
    %v1073 = vunpack.c.l.b16 %v336
    %v1074 = vunpack.c.h.b16 %v336
    %v1075 = vunpack.c.l.b16 %v337
    %v1076 = vunpack.c.h.b16 %v337
    %v1077 = vunpack.c.l.b16 %v338
    %v1078 = vunpack.c.h.b16 %v338
    %v1079 = vunpack.c.l.b16 %v339
    %v1080 = vunpack.c.h.b16 %v339
    %v1081 = vunpack.c.l.b16 %v340
    %v1082 = vunpack.c.h.b16 %v340
    %v1083 = vunpack.c.l.b16 %v341
    %v1084 = vunpack.c.h.b16 %v341
    %v1085 = vunpack.c.l.b16 %v342
    %v1086 = vunpack.c.h.b16 %v342
    %v1087 = vunpack.c.l.b16 %v343
    %v1088 = vunpack.c.h.b16 %v343
    %v1089 = vunpack.c.l.b16 %v344
    %v1090 = vunpack.c.h.b16 %v344
    %v1091 = vunpack.c.l.b16 %v345
    %v1092 = vunpack.c.h.b16 %v345
    %v1093 = vunpack.c.l.b16 %v346
    %v1094 = vunpack.c.h.b16 %v346
    %v1095 = vunpack.c.l.b16 %v347
    %v1096 = vunpack.c.h.b16 %v347
    %v1097 = vunpack.c.l.b16 %v348
    %v1098 = vunpack.c.h.b16 %v348
    %v1099 = vunpack.c.l.b16 %v349
    %v1100 = vunpack.c.h.b16 %v349
    %v1101 = vunpack.c.l.b16 %v350
    %v1102 = vunpack.c.h.b16 %v350
    %v1103 = vunpack.c.l.b16 %v351
    %v1104 = vunpack.c.h.b16 %v351
    %v1105 = vunpack.c.l.b16 %v352
    %v1106 = vunpack.c.h.b16 %v352
    %v1107 = vunpack.c.l.b16 %v353
    %v1108 = vunpack.c.h.b16 %v353
    %v1109 = vunpack.c.l.b16 %v354
    %v1110 = vunpack.c.h.b16 %v354
    %v1111 = vunpack.c.l.b16 %v355
    %v1112 = vunpack.c.h.b16 %v355
    %v1113 = vunpack.c.l.b16 %v356
    %v1114 = vunpack.c.h.b16 %v356
    %v1115 = vunpack.c.l.b16 %v357
    %v1116 = vunpack.c.h.b16 %v357
    %v1117 = vunpack.c.l.b16 %v358
    %v1118 = vunpack.c.h.b16 %v358
    %v1119 = vunpack.c.l.b16 %v359
    %v1120 = vunpack.c.h.b16 %v359
    %v1121 = vunpack.c.l.b16 %v360
    %v1122 = vunpack.c.h.b16 %v360
    %v1123 = vunpack.c.l.b16 %v361
    %v1124 = vunpack.c.h.b16 %v361
    %v1125 = vunpack.c.l.b16 %v362
    %v1126 = vunpack.c.h.b16 %v362
    %v1127 = vunpack.c.l.b16 %v363
    %v1128 = vunpack.c.h.b16 %v363
    %v1129 = vunpack.c.l.b16 %v364
    %v1130 = vunpack.c.h.b16 %v364
    %v1131 = vunpack.c.l.b16 %v365
    %v1132 = vunpack.c.h.b16 %v365
    %v1133 = vunpack.c.l.b16 %v366
    %v1134 = vunpack.c.h.b16 %v366
    %v1135 = vpack.c.b16 %v627, %v623
    %v1136 = vpack.c.b16 %v628, %v624
    %v1137 = vpack.c.b16 %v629, %v625
    %v1138 = vpack.c.b16 %v630, %v626
    %v1139 = vpack.c.b16 %v635, %v631
    %v1140 = vpack.c.b16 %v636, %v632
    %v1141 = vpack.c.b16 %v637, %v633
    %v1142 = vpack.c.b16 %v638, %v634
    %v1143 = vpack.c.b16 %v643, %v639
    %v1144 = vpack.c.b16 %v644, %v640
    %v1145 = vpack.c.b16 %v645, %v641
    %v1146 = vpack.c.b16 %v646, %v642
    %v1147 = vpack.c.b16 %v651, %v647
    %v1148 = vpack.c.b16 %v652, %v648
    %v1149 = vpack.c.b16 %v653, %v649
    %v1150 = vpack.c.b16 %v654, %v650
    %v1151 = vpack.c.b16 %v659, %v655
    %v1152 = vpack.c.b16 %v660, %v656
    %v1153 = vpack.c.b16 %v661, %v657
    %v1154 = vpack.c.b16 %v662, %v658
    %v1155 = vpack.c.b16 %v667, %v663
    %v1156 = vpack.c.b16 %v668, %v664
    %v1157 = vpack.c.b16 %v669, %v665
    %v1158 = vpack.c.b16 %v670, %v666
    %v1159 = vpack.c.b16 %v675, %v671
    %v1160 = vpack.c.b16 %v676, %v672
    %v1161 = vpack.c.b16 %v677, %v673
    %v1162 = vpack.c.b16 %v678, %v674
    %v1163 = vpack.c.b16 %v683, %v679
    %v1164 = vpack.c.b16 %v684, %v680
    %v1165 = vpack.c.b16 %v685, %v681
    %v1166 = vpack.c.b16 %v686, %v682
    %v1167 = vpack.c.b16 %v691, %v687
    %v1168 = vpack.c.b16 %v692, %v688
    %v1169 = vpack.c.b16 %v693, %v689
    %v1170 = vpack.c.b16 %v694, %v690
    %v1171 = vpack.c.b16 %v699, %v695
    %v1172 = vpack.c.b16 %v700, %v696
    %v1173 = vpack.c.b16 %v701, %v697
    %v1174 = vpack.c.b16 %v702, %v698
    %v1175 = vpack.c.b16 %v707, %v703
    %v1176 = vpack.c.b16 %v708, %v704
    %v1177 = vpack.c.b16 %v709, %v705
    %v1178 = vpack.c.b16 %v710, %v706
    %v1179 = vpack.c.b16 %v715, %v711
    %v1180 = vpack.c.b16 %v716, %v712
    %v1181 = vpack.c.b16 %v717, %v713
    %v1182 = vpack.c.b16 %v718, %v714
    %v1183 = vpack.c.b16 %v723, %v719
    %v1184 = vpack.c.b16 %v724, %v720
    %v1185 = vpack.c.b16 %v725, %v721
    %v1186 = vpack.c.b16 %v726, %v722
    %v1187 = vpack.c.b16 %v731, %v727
    %v1188 = vpack.c.b16 %v732, %v728
    %v1189 = vpack.c.b16 %v733, %v729
    %v1190 = vpack.c.b16 %v734, %v730
    %v1191 = vpack.c.b16 %v739, %v735
    %v1192 = vpack.c.b16 %v740, %v736
    %v1193 = vpack.c.b16 %v741, %v737
    %v1194 = vpack.c.b16 %v742, %v738
    %v1195 = vpack.c.b16 %v747, %v743
    %v1196 = vpack.c.b16 %v748, %v744
    %v1197 = vpack.c.b16 %v749, %v745
    %v1198 = vpack.c.b16 %v750, %v746
    %v1199 = vpack.c.b16 %v755, %v751
    %v1200 = vpack.c.b16 %v756, %v752
    %v1201 = vpack.c.b16 %v757, %v753
    %v1202 = vpack.c.b16 %v758, %v754
    %v1203 = vpack.c.b16 %v763, %v759
    %v1204 = vpack.c.b16 %v764, %v760
    %v1205 = vpack.c.b16 %v765, %v761
    %v1206 = vpack.c.b16 %v766, %v762
    %v1207 = vpack.c.b16 %v771, %v767
    %v1208 = vpack.c.b16 %v772, %v768
    %v1209 = vpack.c.b16 %v773, %v769
    %v1210 = vpack.c.b16 %v774, %v770
    %v1211 = vpack.c.b16 %v779, %v775
    %v1212 = vpack.c.b16 %v780, %v776
    %v1213 = vpack.c.b16 %v781, %v777
    %v1214 = vpack.c.b16 %v782, %v778
    %v1215 = vpack.c.b16 %v787, %v783
    %v1216 = vpack.c.b16 %v788, %v784
    %v1217 = vpack.c.b16 %v789, %v785
    %v1218 = vpack.c.b16 %v790, %v786
    %v1219 = vpack.c.b16 %v795, %v791
    %v1220 = vpack.c.b16 %v796, %v792
    %v1221 = vpack.c.b16 %v797, %v793
    %v1222 = vpack.c.b16 %v798, %v794
    %v1223 = vpack.c.b16 %v803, %v799
    %v1224 = vpack.c.b16 %v804, %v800
    %v1225 = vpack.c.b16 %v805, %v801
    %v1226 = vpack.c.b16 %v806, %v802
    %v1227 = vpack.c.b16 %v811, %v807
    %v1228 = vpack.c.b16 %v812, %v808
    %v1229 = vpack.c.b16 %v813, %v809
    %v1230 = vpack.c.b16 %v814, %v810
    %v1231 = vpack.c.b16 %v819, %v815
    %v1232 = vpack.c.b16 %v820, %v816
    %v1233 = vpack.c.b16 %v821, %v817
    %v1234 = vpack.c.b16 %v822, %v818
    %v1235 = vpack.c.b16 %v827, %v823
    %v1236 = vpack.c.b16 %v828, %v824
    %v1237 = vpack.c.b16 %v829, %v825
    %v1238 = vpack.c.b16 %v830, %v826
    %v1239 = vpack.c.b16 %v835, %v831
    %v1240 = vpack.c.b16 %v836, %v832
    %v1241 = vpack.c.b16 %v837, %v833
    %v1242 = vpack.c.b16 %v838, %v834
    %v1243 = vpack.c.b16 %v843, %v839
    %v1244 = vpack.c.b16 %v844, %v840
    %v1245 = vpack.c.b16 %v845, %v841
    %v1246 = vpack.c.b16 %v846, %v842
    %v1247 = vpack.c.b16 %v851, %v847
    %v1248 = vpack.c.b16 %v852, %v848
    %v1249 = vpack.c.b16 %v853, %v849
    %v1250 = vpack.c.b16 %v854, %v850
    %v1251 = vpack.c.b16 %v859, %v855
    %v1252 = vpack.c.b16 %v860, %v856
    %v1253 = vpack.c.b16 %v861, %v857
    %v1254 = vpack.c.b16 %v862, %v858
    %v1255 = vpack.c.b16 %v867, %v863
    %v1256 = vpack.c.b16 %v868, %v864
    %v1257 = vpack.c.b16 %v869, %v865
    %v1258 = vpack.c.b16 %v870, %v866
    %v1259 = vpack.c.b16 %v875, %v871
    %v1260 = vpack.c.b16 %v876, %v872
    %v1261 = vpack.c.b16 %v877, %v873
    %v1262 = vpack.c.b16 %v878, %v874
    %v1263 = vpack.c.b16 %v883, %v879
    %v1264 = vpack.c.b16 %v884, %v880
    %v1265 = vpack.c.b16 %v885, %v881
    %v1266 = vpack.c.b16 %v886, %v882
    %v1267 = vpack.c.b16 %v891, %v887
    %v1268 = vpack.c.b16 %v892, %v888
    %v1269 = vpack.c.b16 %v893, %v889
    %v1270 = vpack.c.b16 %v894, %v890
    %v1271 = vpack.c.b16 %v899, %v895
    %v1272 = vpack.c.b16 %v900, %v896
    %v1273 = vpack.c.b16 %v901, %v897
    %v1274 = vpack.c.b16 %v902, %v898
    %v1275 = vpack.c.b16 %v907, %v903
    %v1276 = vpack.c.b16 %v908, %v904
    %v1277 = vpack.c.b16 %v909, %v905
    %v1278 = vpack.c.b16 %v910, %v906
    %v1279 = vpack.c.b16 %v915, %v911
    %v1280 = vpack.c.b16 %v916, %v912
    %v1281 = vpack.c.b16 %v917, %v913
    %v1282 = vpack.c.b16 %v918, %v914
    %v1283 = vpack.c.b16 %v923, %v919
    %v1284 = vpack.c.b16 %v924, %v920
    %v1285 = vpack.c.b16 %v925, %v921
    %v1286 = vpack.c.b16 %v926, %v922
    %v1287 = vpack.c.b16 %v931, %v927
    %v1288 = vpack.c.b16 %v932, %v928
    %v1289 = vpack.c.b16 %v933, %v929
    %v1290 = vpack.c.b16 %v934, %v930
    %v1291 = vpack.c.b16 %v939, %v935
    %v1292 = vpack.c.b16 %v940, %v936
    %v1293 = vpack.c.b16 %v941, %v937
    %v1294 = vpack.c.b16 %v942, %v938
    %v1295 = vpack.c.b16 %v947, %v943
    %v1296 = vpack.c.b16 %v948, %v944
    %v1297 = vpack.c.b16 %v949, %v945
    %v1298 = vpack.c.b16 %v950, %v946
    %v1299 = vpack.c.b16 %v955, %v951
    %v1300 = vpack.c.b16 %v956, %v952
    %v1301 = vpack.c.b16 %v957, %v953
    %v1302 = vpack.c.b16 %v958, %v954
    %v1303 = vpack.c.b16 %v963, %v959
    %v1304 = vpack.c.b16 %v964, %v960
    %v1305 = vpack.c.b16 %v965, %v961
    %v1306 = vpack.c.b16 %v966, %v962
    %v1307 = vpack.c.b16 %v971, %v967
    %v1308 = vpack.c.b16 %v972, %v968
    %v1309 = vpack.c.b16 %v973, %v969
    %v1310 = vpack.c.b16 %v974, %v970
    %v1311 = vpack.c.b16 %v979, %v975
    %v1312 = vpack.c.b16 %v980, %v976
    %v1313 = vpack.c.b16 %v981, %v977
    %v1314 = vpack.c.b16 %v982, %v978
    %v1315 = vpack.c.b16 %v987, %v983
    %v1316 = vpack.c.b16 %v988, %v984
    %v1317 = vpack.c.b16 %v989, %v985
    %v1318 = vpack.c.b16 %v990, %v986
    %v1319 = vpack.c.b16 %v995, %v991
    %v1320 = vpack.c.b16 %v996, %v992
    %v1321 = vpack.c.b16 %v997, %v993
    %v1322 = vpack.c.b16 %v998, %v994
    %v1323 = vpack.c.b16 %v1003, %v999
    %v1324 = vpack.c.b16 %v1004, %v1000
    %v1325 = vpack.c.b16 %v1005, %v1001
    %v1326 = vpack.c.b16 %v1006, %v1002
    %v1327 = vpack.c.b16 %v1011, %v1007
    %v1328 = vpack.c.b16 %v1012, %v1008
    %v1329 = vpack.c.b16 %v1013, %v1009
    %v1330 = vpack.c.b16 %v1014, %v1010
    %v1331 = vpack.c.b16 %v1019, %v1015
    %v1332 = vpack.c.b16 %v1020, %v1016
    %v1333 = vpack.c.b16 %v1021, %v1017
    %v1334 = vpack.c.b16 %v1022, %v1018
    %v1335 = vpack.c.b16 %v1027, %v1023
    %v1336 = vpack.c.b16 %v1028, %v1024
    %v1337 = vpack.c.b16 %v1029, %v1025
    %v1338 = vpack.c.b16 %v1030, %v1026
    %v1339 = vpack.c.b16 %v1035, %v1031
    %v1340 = vpack.c.b16 %v1036, %v1032
    %v1341 = vpack.c.b16 %v1037, %v1033
    %v1342 = vpack.c.b16 %v1038, %v1034
    %v1343 = vpack.c.b16 %v1043, %v1039
    %v1344 = vpack.c.b16 %v1044, %v1040
    %v1345 = vpack.c.b16 %v1045, %v1041
    %v1346 = vpack.c.b16 %v1046, %v1042
    %v1347 = vpack.c.b16 %v1051, %v1047
    %v1348 = vpack.c.b16 %v1052, %v1048
    %v1349 = vpack.c.b16 %v1053, %v1049
    %v1350 = vpack.c.b16 %v1054, %v1050
    %v1351 = vpack.c.b16 %v1059, %v1055
    %v1352 = vpack.c.b16 %v1060, %v1056
    %v1353 = vpack.c.b16 %v1061, %v1057
    %v1354 = vpack.c.b16 %v1062, %v1058
    %v1355 = vpack.c.b16 %v1067, %v1063
    %v1356 = vpack.c.b16 %v1068, %v1064
    %v1357 = vpack.c.b16 %v1069, %v1065
    %v1358 = vpack.c.b16 %v1070, %v1066
    %v1359 = vpack.c.b16 %v1075, %v1071
    %v1360 = vpack.c.b16 %v1076, %v1072
    %v1361 = vpack.c.b16 %v1077, %v1073
    %v1362 = vpack.c.b16 %v1078, %v1074
    %v1363 = vpack.c.b16 %v1083, %v1079
    %v1364 = vpack.c.b16 %v1084, %v1080
    %v1365 = vpack.c.b16 %v1085, %v1081
    %v1366 = vpack.c.b16 %v1086, %v1082
    %v1367 = vpack.c.b16 %v1091, %v1087
    %v1368 = vpack.c.b16 %v1092, %v1088
    %v1369 = vpack.c.b16 %v1093, %v1089
    %v1370 = vpack.c.b16 %v1094, %v1090
    %v1371 = vpack.c.b16 %v1099, %v1095
    %v1372 = vpack.c.b16 %v1100, %v1096
    %v1373 = vpack.c.b16 %v1101, %v1097
    %v1374 = vpack.c.b16 %v1102, %v1098
    %v1375 = vpack.c.b16 %v1107, %v1103
    %v1376 = vpack.c.b16 %v1108, %v1104
    %v1377 = vpack.c.b16 %v1109, %v1105
    %v1378 = vpack.c.b16 %v1110, %v1106
    %v1379 = vpack.c.b16 %v1115, %v1111
    %v1380 = vpack.c.b16 %v1116, %v1112
    %v1381 = vpack.c.b16 %v1117, %v1113
    %v1382 = vpack.c.b16 %v1118, %v1114
    %v1383 = vpack.c.b16 %v1123, %v1119
    %v1384 = vpack.c.b16 %v1124, %v1120
    %v1385 = vpack.c.b16 %v1125, %v1121
    %v1386 = vpack.c.b16 %v1126, %v1122
    %v1387 = vpack.c.b16 %v1131, %v1127
    %v1388 = vpack.c.b16 %v1132, %v1128
    %v1389 = vpack.c.b16 %v1133, %v1129
    %v1390 = vpack.c.b16 %v1134, %v1130
    %1647 = vmatprep.subr.bf16.mxu0 %v1164
    %1648 = vmatpush1.bf16.msra.mxu0 %v1163
    %1649 = vmatprep.subr.bf16.mxu0 %v1160
    %1650 = vmatpush1.bf16.msra.mxu0 %v1159
    %1651 = vmatprep.subr.bf16.mxu0 %v1156
    %1652 = vmatpush1.bf16.msra.mxu0 %v1155
    %1653 = vmatprep.subr.bf16.mxu0 %v1152
    %1654 = vmatpush1.bf16.msra.mxu0 %v1151
    %1655 = vmatprep.subr.bf16.mxu0 %v1148
    %1656 = vmatpush1.bf16.msra.mxu0 %v1147
    %1657 = vmatprep.subr.bf16.mxu0 %v1144
    %1658 = vmatpush1.bf16.msra.mxu0 %v1143
    %1659 = vmatprep.subr.bf16.mxu0 %v1140
    %1660 = vmatpush1.bf16.msra.mxu0 %v1139
    %1661 = vmatprep.subr.bf16.mxu0 %v1136
    %1662 = vmatpush1.bf16.msra.mxu0 %v1135
    %1663 = vmatprep.subr.bf16.mxu0 %v1196
    %1664 = vmatpush2.bf16.msra.mxu0 %v1195
    %1665 = vmatprep.subr.bf16.mxu0 %v1192
    %1666 = vmatpush2.bf16.msra.mxu0 %v1191
    %1667 = vmatprep.subr.bf16.mxu0 %v1188
    %1668 = vmatpush2.bf16.msra.mxu0 %v1187
    %1669 = vmatprep.subr.bf16.mxu0 %v1184
    %1670 = vmatpush2.bf16.msra.mxu0 %v1183
    %1671 = vmatprep.subr.bf16.mxu0 %v1180
    %1672 = vmatpush2.bf16.msra.mxu0 %v1179
    %1673 = vmatprep.subr.bf16.mxu0 %v1176
    %1674 = vmatpush2.bf16.msra.mxu0 %v1175
    %1675 = vmatprep.subr.bf16.mxu0 %v1172
    %1676 = vmatpush2.bf16.msra.mxu0 %v1171
    %1677 = vmatprep.subr.bf16.mxu0 %v1168
    %1678 = vmatpush2.bf16.msra.mxu0 %v1167
    %1679 = vmatprep.mubr.bf16.mxu0 %v104
    %1680 = vmatmul.mubr.bf16.gmra.mxu0 %v103
    %v1681 = vpop.f32.mrf.mxu0
    %v1682 = vadd.f32 0.0, %v1681
    %v1683 = vpop.f32.mrf.mxu0
    %v1684 = vadd.f32 0.0, %v1683
    %v1685 = vpop.f32.mrf.mxu0
    %v1686 = vpop.f32.mrf.mxu0
    %1687 = vdwg.mxu0
    %1688 = vmatprep.subr.bf16.mxu0 %v1228
    %1689 = vmatpush1.bf16.msra.mxu0 %v1227
    %1690 = vmatprep.subr.bf16.mxu0 %v1224
    %1691 = vmatpush1.bf16.msra.mxu0 %v1223
    %1692 = vmatprep.subr.bf16.mxu0 %v1220
    %1693 = vmatpush1.bf16.msra.mxu0 %v1219
    %1694 = vmatprep.subr.bf16.mxu0 %v1216
    %1695 = vmatpush1.bf16.msra.mxu0 %v1215
    %1696 = vmatprep.subr.bf16.mxu0 %v1212
    %1697 = vmatpush1.bf16.msra.mxu0 %v1211
    %1698 = vmatprep.subr.bf16.mxu0 %v1208
    %1699 = vmatpush1.bf16.msra.mxu0 %v1207
    %1700 = vmatprep.subr.bf16.mxu0 %v1204
    %1701 = vmatpush1.bf16.msra.mxu0 %v1203
    %1702 = vmatprep.subr.bf16.mxu0 %v1200
    %1703 = vmatpush1.bf16.msra.mxu0 %v1199
    %1704 = vmatprep.subr.bf16.mxu0 %v1260
    %1705 = vmatpush2.bf16.msra.mxu0 %v1259
    %1706 = vmatprep.subr.bf16.mxu0 %v1256
    %1707 = vmatpush2.bf16.msra.mxu0 %v1255
    %1708 = vmatprep.subr.bf16.mxu0 %v1252
    %1709 = vmatpush2.bf16.msra.mxu0 %v1251
    %1710 = vmatprep.subr.bf16.mxu0 %v1248
    %1711 = vmatpush2.bf16.msra.mxu0 %v1247
    %1712 = vmatprep.subr.bf16.mxu0 %v1244
    %1713 = vmatpush2.bf16.msra.mxu0 %v1243
    %1714 = vmatprep.subr.bf16.mxu0 %v1240
    %1715 = vmatpush2.bf16.msra.mxu0 %v1239
    %1716 = vmatprep.subr.bf16.mxu0 %v1236
    %1717 = vmatpush2.bf16.msra.mxu0 %v1235
    %1718 = vmatprep.subr.bf16.mxu0 %v1232
    %1719 = vmatpush2.bf16.msra.mxu0 %v1231
    %1720 = vmatprep.mubr.bf16.mxu0 %v106
    %1721 = vmatmul.mubr.bf16.gmra.mxu0 %v105
    %v1722 = vpop.f32.mrf.mxu0
    %v1723 = vadd.f32 %v1682, %v1722
    %v1724 = vpop.f32.mrf.mxu0
    %v1725 = vadd.f32 %v1684, %v1724
    %v1726 = vpop.f32.mrf.mxu0
    %v1727 = vpop.f32.mrf.mxu0
    %1728 = vdwg.mxu0
    %1729 = vmatprep.subr.bf16.mxu0 %v1292
    %1730 = vmatpush1.bf16.msra.mxu0 %v1291
    %1731 = vmatprep.subr.bf16.mxu0 %v1288
    %1732 = vmatpush1.bf16.msra.mxu0 %v1287
    %1733 = vmatprep.subr.bf16.mxu0 %v1284
    %1734 = vmatpush1.bf16.msra.mxu0 %v1283
    %1735 = vmatprep.subr.bf16.mxu0 %v1280
    %1736 = vmatpush1.bf16.msra.mxu0 %v1279
    %1737 = vmatprep.subr.bf16.mxu0 %v1276
    %1738 = vmatpush1.bf16.msra.mxu0 %v1275
    %1739 = vmatprep.subr.bf16.mxu0 %v1272
    %1740 = vmatpush1.bf16.msra.mxu0 %v1271
    %1741 = vmatprep.subr.bf16.mxu0 %v1268
    %1742 = vmatpush1.bf16.msra.mxu0 %v1267
    %1743 = vmatprep.subr.bf16.mxu0 %v1264
    %1744 = vmatpush1.bf16.msra.mxu0 %v1263
    %1745 = vmatprep.subr.bf16.mxu0 %v1324
    %1746 = vmatpush2.bf16.msra.mxu0 %v1323
    %1747 = vmatprep.subr.bf16.mxu0 %v1320
    %1748 = vmatpush2.bf16.msra.mxu0 %v1319
    %1749 = vmatprep.subr.bf16.mxu0 %v1316
    %1750 = vmatpush2.bf16.msra.mxu0 %v1315
    %1751 = vmatprep.subr.bf16.mxu0 %v1312
    %1752 = vmatpush2.bf16.msra.mxu0 %v1311
    %1753 = vmatprep.subr.bf16.mxu0 %v1308
    %1754 = vmatpush2.bf16.msra.mxu0 %v1307
    %1755 = vmatprep.subr.bf16.mxu0 %v1304
    %1756 = vmatpush2.bf16.msra.mxu0 %v1303
    %1757 = vmatprep.subr.bf16.mxu0 %v1300
    %1758 = vmatpush2.bf16.msra.mxu0 %v1299
    %1759 = vmatprep.subr.bf16.mxu0 %v1296
    %1760 = vmatpush2.bf16.msra.mxu0 %v1295
    %1761 = vmatprep.mubr.bf16.mxu0 %v108
    %1762 = vmatmul.mubr.bf16.gmra.mxu0 %v107
    %v1763 = vpop.f32.mrf.mxu0
    %v1764 = vadd.f32 %v1723, %v1763
    %v1765 = vpop.f32.mrf.mxu0
    %v1766 = vadd.f32 %v1725, %v1765
    %v1767 = vpop.f32.mrf.mxu0
    %v1768 = vpop.f32.mrf.mxu0
    %1769 = vdwg.mxu0
    %1770 = vmatprep.subr.bf16.mxu0 %v1356
    %1771 = vmatpush1.bf16.msra.mxu0 %v1355
    %1772 = vmatprep.subr.bf16.mxu0 %v1352
    %1773 = vmatpush1.bf16.msra.mxu0 %v1351
    %1774 = vmatprep.subr.bf16.mxu0 %v1348
    %1775 = vmatpush1.bf16.msra.mxu0 %v1347
    %1776 = vmatprep.subr.bf16.mxu0 %v1344
    %1777 = vmatpush1.bf16.msra.mxu0 %v1343
    %1778 = vmatprep.subr.bf16.mxu0 %v1340
    %1779 = vmatpush1.bf16.msra.mxu0 %v1339
    %1780 = vmatprep.subr.bf16.mxu0 %v1336
    %1781 = vmatpush1.bf16.msra.mxu0 %v1335
    %1782 = vmatprep.subr.bf16.mxu0 %v1332
    %1783 = vmatpush1.bf16.msra.mxu0 %v1331
    %1784 = vmatprep.subr.bf16.mxu0 %v1328
    %1785 = vmatpush1.bf16.msra.mxu0 %v1327
    %1786 = vmatprep.subr.bf16.mxu0 %v1388
    %1787 = vmatpush2.bf16.msra.mxu0 %v1387
    %1788 = vmatprep.subr.bf16.mxu0 %v1384
    %1789 = vmatpush2.bf16.msra.mxu0 %v1383
    %1790 = vmatprep.subr.bf16.mxu0 %v1380
    %1791 = vmatpush2.bf16.msra.mxu0 %v1379
    %1792 = vmatprep.subr.bf16.mxu0 %v1376
    %1793 = vmatpush2.bf16.msra.mxu0 %v1375
    %1794 = vmatprep.subr.bf16.mxu0 %v1372
    %1795 = vmatpush2.bf16.msra.mxu0 %v1371
    %1796 = vmatprep.subr.bf16.mxu0 %v1368
    %1797 = vmatpush2.bf16.msra.mxu0 %v1367
    %1798 = vmatprep.subr.bf16.mxu0 %v1364
    %1799 = vmatpush2.bf16.msra.mxu0 %v1363
    %1800 = vmatprep.subr.bf16.mxu0 %v1360
    %1801 = vmatpush2.bf16.msra.mxu0 %v1359
    %1802 = vmatprep.mubr.bf16.mxu0 %v110
    %1803 = vmatmul.mubr.bf16.gmra.mxu0 %v109
    %v1804 = vpop.f32.mrf.mxu0
    %v1805 = vadd.f32 %v1764, %v1804
    %v1806 = vpop.f32.mrf.mxu0
    %v1807 = vadd.f32 %v1766, %v1806
    %v1808 = vpop.f32.mrf.mxu0
    %v1809 = vpop.f32.mrf.mxu0
    %1810 = vdwg.mxu0
    %1811 = vmatprep.subr.bf16.mxu0 %v1166
    %1812 = vmatpush1.bf16.msra.mxu0 %v1165
    %1813 = vmatprep.subr.bf16.mxu0 %v1162
    %1814 = vmatpush1.bf16.msra.mxu0 %v1161
    %1815 = vmatprep.subr.bf16.mxu0 %v1158
    %1816 = vmatpush1.bf16.msra.mxu0 %v1157
    %1817 = vmatprep.subr.bf16.mxu0 %v1154
    %1818 = vmatpush1.bf16.msra.mxu0 %v1153
    %1819 = vmatprep.subr.bf16.mxu0 %v1150
    %1820 = vmatpush1.bf16.msra.mxu0 %v1149
    %1821 = vmatprep.subr.bf16.mxu0 %v1146
    %1822 = vmatpush1.bf16.msra.mxu0 %v1145
    %1823 = vmatprep.subr.bf16.mxu0 %v1142
    %1824 = vmatpush1.bf16.msra.mxu0 %v1141
    %1825 = vmatprep.subr.bf16.mxu0 %v1138
    %1826 = vmatpush1.bf16.msra.mxu0 %v1137
    %1827 = vmatprep.subr.bf16.mxu0 %v1198
    %1828 = vmatpush2.bf16.msra.mxu0 %v1197
    %1829 = vmatprep.subr.bf16.mxu0 %v1194
    %1830 = vmatpush2.bf16.msra.mxu0 %v1193
    %1831 = vmatprep.subr.bf16.mxu0 %v1190
    %1832 = vmatpush2.bf16.msra.mxu0 %v1189
    %1833 = vmatprep.subr.bf16.mxu0 %v1186
    %1834 = vmatpush2.bf16.msra.mxu0 %v1185
    %1835 = vmatprep.subr.bf16.mxu0 %v1182
    %1836 = vmatpush2.bf16.msra.mxu0 %v1181
    %1837 = vmatprep.subr.bf16.mxu0 %v1178
    %1838 = vmatpush2.bf16.msra.mxu0 %v1177
    %1839 = vmatprep.subr.bf16.mxu0 %v1174
    %1840 = vmatpush2.bf16.msra.mxu0 %v1173
    %1841 = vmatprep.subr.bf16.mxu0 %v1170
    %1842 = vmatpush2.bf16.msra.mxu0 %v1169
    %1843 = vmatprep.mubr.bf16.mxu0 %v104
    %1844 = vmatmul.mubr.bf16.gmra.mxu0 %v103
    %v1845 = vpop.f32.mrf.mxu0
    %v1846 = vadd.f32 0.0, %v1845
    %v1847 = vpop.f32.mrf.mxu0
    %v1848 = vadd.f32 0.0, %v1847
    %v1849 = vpop.f32.mrf.mxu0
    %v1850 = vpop.f32.mrf.mxu0
    %1851 = vdwg.mxu0
    %1852 = vmatprep.subr.bf16.mxu0 %v1230
    %1853 = vmatpush1.bf16.msra.mxu0 %v1229
    %1854 = vmatprep.subr.bf16.mxu0 %v1226
    %1855 = vmatpush1.bf16.msra.mxu0 %v1225
    %1856 = vmatprep.subr.bf16.mxu0 %v1222
    %1857 = vmatpush1.bf16.msra.mxu0 %v1221
    %1858 = vmatprep.subr.bf16.mxu0 %v1218
    %1859 = vmatpush1.bf16.msra.mxu0 %v1217
    %1860 = vmatprep.subr.bf16.mxu0 %v1214
    %1861 = vmatpush1.bf16.msra.mxu0 %v1213
    %1862 = vmatprep.subr.bf16.mxu0 %v1210
    %1863 = vmatpush1.bf16.msra.mxu0 %v1209
    %1864 = vmatprep.subr.bf16.mxu0 %v1206
    %1865 = vmatpush1.bf16.msra.mxu0 %v1205
    %1866 = vmatprep.subr.bf16.mxu0 %v1202
    %1867 = vmatpush1.bf16.msra.mxu0 %v1201
    %1868 = vmatprep.subr.bf16.mxu0 %v1262
    %1869 = vmatpush2.bf16.msra.mxu0 %v1261
    %1870 = vmatprep.subr.bf16.mxu0 %v1258
    %1871 = vmatpush2.bf16.msra.mxu0 %v1257
    %1872 = vmatprep.subr.bf16.mxu0 %v1254
    %1873 = vmatpush2.bf16.msra.mxu0 %v1253
    %1874 = vmatprep.subr.bf16.mxu0 %v1250
    %1875 = vmatpush2.bf16.msra.mxu0 %v1249
    %1876 = vmatprep.subr.bf16.mxu0 %v1246
    %1877 = vmatpush2.bf16.msra.mxu0 %v1245
    %1878 = vmatprep.subr.bf16.mxu0 %v1242
    %1879 = vmatpush2.bf16.msra.mxu0 %v1241
    %1880 = vmatprep.subr.bf16.mxu0 %v1238
    %1881 = vmatpush2.bf16.msra.mxu0 %v1237
    %1882 = vmatprep.subr.bf16.mxu0 %v1234
    %1883 = vmatpush2.bf16.msra.mxu0 %v1233
    %1884 = vmatprep.mubr.bf16.mxu0 %v106
    %1885 = vmatmul.mubr.bf16.gmra.mxu0 %v105
    %v1886 = vpop.f32.mrf.mxu0
    %v1887 = vadd.f32 %v1846, %v1886
    %v1888 = vpop.f32.mrf.mxu0
    %v1889 = vadd.f32 %v1848, %v1888
    %v1890 = vpop.f32.mrf.mxu0
    %v1891 = vpop.f32.mrf.mxu0
    %1892 = vdwg.mxu0
    %1893 = vmatprep.subr.bf16.mxu0 %v1294
    %1894 = vmatpush1.bf16.msra.mxu0 %v1293
    %1895 = vmatprep.subr.bf16.mxu0 %v1290
    %1896 = vmatpush1.bf16.msra.mxu0 %v1289
    %1897 = vmatprep.subr.bf16.mxu0 %v1286
    %1898 = vmatpush1.bf16.msra.mxu0 %v1285
    %1899 = vmatprep.subr.bf16.mxu0 %v1282
    %1900 = vmatpush1.bf16.msra.mxu0 %v1281
    %1901 = vmatprep.subr.bf16.mxu0 %v1278
    %1902 = vmatpush1.bf16.msra.mxu0 %v1277
    %1903 = vmatprep.subr.bf16.mxu0 %v1274
    %1904 = vmatpush1.bf16.msra.mxu0 %v1273
    %1905 = vmatprep.subr.bf16.mxu0 %v1270
    %1906 = vmatpush1.bf16.msra.mxu0 %v1269
    %1907 = vmatprep.subr.bf16.mxu0 %v1266
    %1908 = vmatpush1.bf16.msra.mxu0 %v1265
    %1909 = vmatprep.subr.bf16.mxu0 %v1326
    %1910 = vmatpush2.bf16.msra.mxu0 %v1325
    %1911 = vmatprep.subr.bf16.mxu0 %v1322
    %1912 = vmatpush2.bf16.msra.mxu0 %v1321
    %1913 = vmatprep.subr.bf16.mxu0 %v1318
    %1914 = vmatpush2.bf16.msra.mxu0 %v1317
    %1915 = vmatprep.subr.bf16.mxu0 %v1314
    %1916 = vmatpush2.bf16.msra.mxu0 %v1313
    %1917 = vmatprep.subr.bf16.mxu0 %v1310
    %1918 = vmatpush2.bf16.msra.mxu0 %v1309
    %1919 = vmatprep.subr.bf16.mxu0 %v1306
    %1920 = vmatpush2.bf16.msra.mxu0 %v1305
    %1921 = vmatprep.subr.bf16.mxu0 %v1302
    %1922 = vmatpush2.bf16.msra.mxu0 %v1301
    %1923 = vmatprep.subr.bf16.mxu0 %v1298
    %1924 = vmatpush2.bf16.msra.mxu0 %v1297
    %1925 = vmatprep.mubr.bf16.mxu0 %v108
    %1926 = vmatmul.mubr.bf16.gmra.mxu0 %v107
    %v1927 = vpop.f32.mrf.mxu0
    %v1928 = vadd.f32 %v1887, %v1927
    %v1929 = vpop.f32.mrf.mxu0
    %v1930 = vadd.f32 %v1889, %v1929
    %v1931 = vpop.f32.mrf.mxu0
    %v1932 = vpop.f32.mrf.mxu0
    %1933 = vdwg.mxu0
    %1934 = vmatprep.subr.bf16.mxu0 %v1358
    %1935 = vmatpush1.bf16.msra.mxu0 %v1357
    %1936 = vmatprep.subr.bf16.mxu0 %v1354
    %1937 = vmatpush1.bf16.msra.mxu0 %v1353
    %1938 = vmatprep.subr.bf16.mxu0 %v1350
    %1939 = vmatpush1.bf16.msra.mxu0 %v1349
    %1940 = vmatprep.subr.bf16.mxu0 %v1346
    %1941 = vmatpush1.bf16.msra.mxu0 %v1345
    %1942 = vmatprep.subr.bf16.mxu0 %v1342
    %1943 = vmatpush1.bf16.msra.mxu0 %v1341
    %1944 = vmatprep.subr.bf16.mxu0 %v1338
    %1945 = vmatpush1.bf16.msra.mxu0 %v1337
    %1946 = vmatprep.subr.bf16.mxu0 %v1334
    %1947 = vmatpush1.bf16.msra.mxu0 %v1333
    %1948 = vmatprep.subr.bf16.mxu0 %v1330
    %1949 = vmatpush1.bf16.msra.mxu0 %v1329
    %1950 = vmatprep.subr.bf16.mxu0 %v1390
    %1951 = vmatpush2.bf16.msra.mxu0 %v1389
    %1952 = vmatprep.subr.bf16.mxu0 %v1386
    %1953 = vmatpush2.bf16.msra.mxu0 %v1385
    %1954 = vmatprep.subr.bf16.mxu0 %v1382
    %1955 = vmatpush2.bf16.msra.mxu0 %v1381
    %1956 = vmatprep.subr.bf16.mxu0 %v1378
    %1957 = vmatpush2.bf16.msra.mxu0 %v1377
    %1958 = vmatprep.subr.bf16.mxu0 %v1374
    %1959 = vmatpush2.bf16.msra.mxu0 %v1373
    %1960 = vmatprep.subr.bf16.mxu0 %v1370
    %1961 = vmatpush2.bf16.msra.mxu0 %v1369
    %1962 = vmatprep.subr.bf16.mxu0 %v1366
    %1963 = vmatpush2.bf16.msra.mxu0 %v1365
    %1964 = vmatprep.subr.bf16.mxu0 %v1362
    %1965 = vmatpush2.bf16.msra.mxu0 %v1361
    %1966 = vmatprep.mubr.bf16.mxu0 %v110
    %1967 = vmatmul.mubr.bf16.gmra.mxu0 %v109
    %v1968 = vpop.f32.mrf.mxu0
    %v1969 = vadd.f32 %v1928, %v1968
    %v1970 = vpop.f32.mrf.mxu0
    %v1971 = vadd.f32 %v1930, %v1970
    %v1972 = vpop.f32.mrf.mxu0
    %v1973 = vpop.f32.mrf.mxu0
    %1974 = vdwg.mxu0
    %v1975 = vmax.f32 %v1805, 0.0
    %v1976 = vmax.f32 %v1807, 0.0
    %v1977 = vmax.f32 %v1969, 0.0
    %v1978 = vmax.f32 %v1971, 0.0
    %v1979 = vpack.c.bf16 %v1975, %v1975
    %v1980 = vpack.c.bf16 %v1976, %v1976
    %v1981 = vpack.c.bf16 %v1977, %v1977
    %v1982 = vpack.c.bf16 %v1978, %v1978
    %v1983 = vld [vmem:[#allocation4] sm:$0xff]
    %v1984 = vld [vmem:[#allocation4 + $0x8] sm:$0xff]
    %v1985 = vld [vmem:[#allocation4 + $0x10] sm:$0xff]
    %v1986 = vld [vmem:[#allocation4 + $0x18] sm:$0xff]
    %v1987 = vld [vmem:[#allocation4 + $0x20] sm:$0xff]
    %v1988 = vld [vmem:[#allocation4 + $0x28] sm:$0xff]
    %v1989 = vld [vmem:[#allocation4 + $0x30] sm:$0xff]
    %v1990 = vld [vmem:[#allocation4 + $0x38] sm:$0xff]
    %v1991 = vld [vmem:[#allocation4 + $0x40] sm:$0xff]
    %v1992 = vld [vmem:[#allocation4 + $0x48] sm:$0xff]
    %v1993 = vld [vmem:[#allocation4 + $0x50] sm:$0xff]
    %v1994 = vld [vmem:[#allocation4 + $0x58] sm:$0xff]
    %v1995 = vld [vmem:[#allocation4 + $0x60] sm:$0xff]
    %v1996 = vld [vmem:[#allocation4 + $0x68] sm:$0xff]
    %v1997 = vld [vmem:[#allocation4 + $0x70] sm:$0xff]
    %v1998 = vld [vmem:[#allocation4 + $0x78] sm:$0xff]
    %v1999 = vld [vmem:[#allocation4 + $0x80] sm:$0xff]
    %v2000 = vld [vmem:[#allocation4 + $0x88] sm:$0xff]
    %v2001 = vld [vmem:[#allocation4 + $0x90] sm:$0xff]
    %v2002 = vld [vmem:[#allocation4 + $0x98] sm:$0xff]
    %v2003 = vld [vmem:[#allocation4 + $0xa0] sm:$0xff]
    %v2004 = vld [vmem:[#allocation4 + $0xa8] sm:$0xff]
    %v2005 = vld [vmem:[#allocation4 + $0xb0] sm:$0xff]
    %v2006 = vld [vmem:[#allocation4 + $0xb8] sm:$0xff]
    %v2007 = vld [vmem:[#allocation4 + $0xc0] sm:$0xff]
    %v2008 = vld [vmem:[#allocation4 + $0xc8] sm:$0xff]
    %v2009 = vld [vmem:[#allocation4 + $0xd0] sm:$0xff]
    %v2010 = vld [vmem:[#allocation4 + $0xd8] sm:$0xff]
    %v2011 = vld [vmem:[#allocation4 + $0xe0] sm:$0xff]
    %v2012 = vld [vmem:[#allocation4 + $0xe8] sm:$0xff]
    %v2013 = vld [vmem:[#allocation4 + $0xf0] sm:$0xff]
    %v2014 = vld [vmem:[#allocation4 + $0xf8] sm:$0xff]
    %v2015 = vld [vmem:[#allocation4 + $0x100] sm:$0xff]
    %v2016 = vld [vmem:[#allocation4 + $0x108] sm:$0xff]
    %v2017 = vld [vmem:[#allocation4 + $0x110] sm:$0xff]
    %v2018 = vld [vmem:[#allocation4 + $0x118] sm:$0xff]
    %v2019 = vld [vmem:[#allocation4 + $0x120] sm:$0xff]
    %v2020 = vld [vmem:[#allocation4 + $0x128] sm:$0xff]
    %v2021 = vld [vmem:[#allocation4 + $0x130] sm:$0xff]
    %v2022 = vld [vmem:[#allocation4 + $0x138] sm:$0xff]
    %v2023 = vld [vmem:[#allocation4 + $0x140] sm:$0xff]
    %v2024 = vld [vmem:[#allocation4 + $0x148] sm:$0xff]
    %v2025 = vld [vmem:[#allocation4 + $0x150] sm:$0xff]
    %v2026 = vld [vmem:[#allocation4 + $0x158] sm:$0xff]
    %v2027 = vld [vmem:[#allocation4 + $0x160] sm:$0xff]
    %v2028 = vld [vmem:[#allocation4 + $0x168] sm:$0xff]
    %v2029 = vld [vmem:[#allocation4 + $0x170] sm:$0xff]
    %v2030 = vld [vmem:[#allocation4 + $0x178] sm:$0xff]
    %v2031 = vld [vmem:[#allocation4 + $0x180] sm:$0xff]
    %v2032 = vld [vmem:[#allocation4 + $0x188] sm:$0xff]
    %v2033 = vld [vmem:[#allocation4 + $0x190] sm:$0xff]
    %v2034 = vld [vmem:[#allocation4 + $0x198] sm:$0xff]
    %v2035 = vld [vmem:[#allocation4 + $0x1a0] sm:$0xff]
    %v2036 = vld [vmem:[#allocation4 + $0x1a8] sm:$0xff]
    %v2037 = vld [vmem:[#allocation4 + $0x1b0] sm:$0xff]
    %v2038 = vld [vmem:[#allocation4 + $0x1b8] sm:$0xff]
    %v2039 = vld [vmem:[#allocation4 + $0x1c0] sm:$0xff]
    %v2040 = vld [vmem:[#allocation4 + $0x1c8] sm:$0xff]
    %v2041 = vld [vmem:[#allocation4 + $0x1d0] sm:$0xff]
    %v2042 = vld [vmem:[#allocation4 + $0x1d8] sm:$0xff]
    %v2043 = vld [vmem:[#allocation4 + $0x1e0] sm:$0xff]
    %v2044 = vld [vmem:[#allocation4 + $0x1e8] sm:$0xff]
    %v2045 = vld [vmem:[#allocation4 + $0x1f0] sm:$0xff]
    %v2046 = vld [vmem:[#allocation4 + $0x1f8] sm:$0xff]
    %v2047 = vld [vmem:[#allocation4 + $0x200] sm:$0xff]
    %v2048 = vld [vmem:[#allocation4 + $0x208] sm:$0xff]
    %v2049 = vld [vmem:[#allocation4 + $0x210] sm:$0xff]
    %v2050 = vld [vmem:[#allocation4 + $0x218] sm:$0xff]
    %v2051 = vld [vmem:[#allocation4 + $0x220] sm:$0xff]
    %v2052 = vld [vmem:[#allocation4 + $0x228] sm:$0xff]
    %v2053 = vld [vmem:[#allocation4 + $0x230] sm:$0xff]
    %v2054 = vld [vmem:[#allocation4 + $0x238] sm:$0xff]
    %v2055 = vld [vmem:[#allocation4 + $0x240] sm:$0xff]
    %v2056 = vld [vmem:[#allocation4 + $0x248] sm:$0xff]
    %v2057 = vld [vmem:[#allocation4 + $0x250] sm:$0xff]
    %v2058 = vld [vmem:[#allocation4 + $0x258] sm:$0xff]
    %v2059 = vld [vmem:[#allocation4 + $0x260] sm:$0xff]
    %v2060 = vld [vmem:[#allocation4 + $0x268] sm:$0xff]
    %v2061 = vld [vmem:[#allocation4 + $0x270] sm:$0xff]
    %v2062 = vld [vmem:[#allocation4 + $0x278] sm:$0xff]
    %v2063 = vld [vmem:[#allocation4 + $0x280] sm:$0xff]
    %v2064 = vld [vmem:[#allocation4 + $0x288] sm:$0xff]
    %v2065 = vld [vmem:[#allocation4 + $0x290] sm:$0xff]
    %v2066 = vld [vmem:[#allocation4 + $0x298] sm:$0xff]
    %v2067 = vld [vmem:[#allocation4 + $0x2a0] sm:$0xff]
    %v2068 = vld [vmem:[#allocation4 + $0x2a8] sm:$0xff]
    %v2069 = vld [vmem:[#allocation4 + $0x2b0] sm:$0xff]
    %v2070 = vld [vmem:[#allocation4 + $0x2b8] sm:$0xff]
    %v2071 = vld [vmem:[#allocation4 + $0x2c0] sm:$0xff]
    %v2072 = vld [vmem:[#allocation4 + $0x2c8] sm:$0xff]
    %v2073 = vld [vmem:[#allocation4 + $0x2d0] sm:$0xff]
    %v2074 = vld [vmem:[#allocation4 + $0x2d8] sm:$0xff]
    %v2075 = vld [vmem:[#allocation4 + $0x2e0] sm:$0xff]
    %v2076 = vld [vmem:[#allocation4 + $0x2e8] sm:$0xff]
    %v2077 = vld [vmem:[#allocation4 + $0x2f0] sm:$0xff]
    %v2078 = vld [vmem:[#allocation4 + $0x2f8] sm:$0xff]
    %v2079 = vld [vmem:[#allocation4 + $0x300] sm:$0xff]
    %v2080 = vld [vmem:[#allocation4 + $0x308] sm:$0xff]
    %v2081 = vld [vmem:[#allocation4 + $0x310] sm:$0xff]
    %v2082 = vld [vmem:[#allocation4 + $0x318] sm:$0xff]
    %v2083 = vld [vmem:[#allocation4 + $0x320] sm:$0xff]
    %v2084 = vld [vmem:[#allocation4 + $0x328] sm:$0xff]
    %v2085 = vld [vmem:[#allocation4 + $0x330] sm:$0xff]
    %v2086 = vld [vmem:[#allocation4 + $0x338] sm:$0xff]
    %v2087 = vld [vmem:[#allocation4 + $0x340] sm:$0xff]
    %v2088 = vld [vmem:[#allocation4 + $0x348] sm:$0xff]
    %v2089 = vld [vmem:[#allocation4 + $0x350] sm:$0xff]
    %v2090 = vld [vmem:[#allocation4 + $0x358] sm:$0xff]
    %v2091 = vld [vmem:[#allocation4 + $0x360] sm:$0xff]
    %v2092 = vld [vmem:[#allocation4 + $0x368] sm:$0xff]
    %v2093 = vld [vmem:[#allocation4 + $0x370] sm:$0xff]
    %v2094 = vld [vmem:[#allocation4 + $0x378] sm:$0xff]
    %v2095 = vld [vmem:[#allocation4 + $0x380] sm:$0xff]
    %v2096 = vld [vmem:[#allocation4 + $0x388] sm:$0xff]
    %v2097 = vld [vmem:[#allocation4 + $0x390] sm:$0xff]
    %v2098 = vld [vmem:[#allocation4 + $0x398] sm:$0xff]
    %v2099 = vld [vmem:[#allocation4 + $0x3a0] sm:$0xff]
    %v2100 = vld [vmem:[#allocation4 + $0x3a8] sm:$0xff]
    %v2101 = vld [vmem:[#allocation4 + $0x3b0] sm:$0xff]
    %v2102 = vld [vmem:[#allocation4 + $0x3b8] sm:$0xff]
    %v2103 = vld [vmem:[#allocation4 + $0x3c0] sm:$0xff]
    %v2104 = vld [vmem:[#allocation4 + $0x3c8] sm:$0xff]
    %v2105 = vld [vmem:[#allocation4 + $0x3d0] sm:$0xff]
    %v2106 = vld [vmem:[#allocation4 + $0x3d8] sm:$0xff]
    %v2107 = vld [vmem:[#allocation4 + $0x3e0] sm:$0xff]
    %v2108 = vld [vmem:[#allocation4 + $0x3e8] sm:$0xff]
    %v2109 = vld [vmem:[#allocation4 + $0x3f0] sm:$0xff]
    %v2110 = vld [vmem:[#allocation4 + $0x3f8] sm:$0xff]
    %v2111 = vld [vmem:[#allocation4 + $0x400] sm:$0xff]
    %v2112 = vld [vmem:[#allocation4 + $0x408] sm:$0xff]
    %v2113 = vld [vmem:[#allocation4 + $0x410] sm:$0xff]
    %v2114 = vld [vmem:[#allocation4 + $0x418] sm:$0xff]
    %v2115 = vld [vmem:[#allocation4 + $0x420] sm:$0xff]
    %v2116 = vld [vmem:[#allocation4 + $0x428] sm:$0xff]
    %v2117 = vld [vmem:[#allocation4 + $0x430] sm:$0xff]
    %v2118 = vld [vmem:[#allocation4 + $0x438] sm:$0xff]
    %v2119 = vld [vmem:[#allocation4 + $0x440] sm:$0xff]
    %v2120 = vld [vmem:[#allocation4 + $0x448] sm:$0xff]
    %v2121 = vld [vmem:[#allocation4 + $0x450] sm:$0xff]
    %v2122 = vld [vmem:[#allocation4 + $0x458] sm:$0xff]
    %v2123 = vld [vmem:[#allocation4 + $0x460] sm:$0xff]
    %v2124 = vld [vmem:[#allocation4 + $0x468] sm:$0xff]
    %v2125 = vld [vmem:[#allocation4 + $0x470] sm:$0xff]
    %v2126 = vld [vmem:[#allocation4 + $0x478] sm:$0xff]
    %v2127 = vld [vmem:[#allocation4 + $0x480] sm:$0xff]
    %v2128 = vld [vmem:[#allocation4 + $0x488] sm:$0xff]
    %v2129 = vld [vmem:[#allocation4 + $0x490] sm:$0xff]
    %v2130 = vld [vmem:[#allocation4 + $0x498] sm:$0xff]
    %v2131 = vld [vmem:[#allocation4 + $0x4a0] sm:$0xff]
    %v2132 = vld [vmem:[#allocation4 + $0x4a8] sm:$0xff]
    %v2133 = vld [vmem:[#allocation4 + $0x4b0] sm:$0xff]
    %v2134 = vld [vmem:[#allocation4 + $0x4b8] sm:$0xff]
    %v2135 = vld [vmem:[#allocation4 + $0x4c0] sm:$0xff]
    %v2136 = vld [vmem:[#allocation4 + $0x4c8] sm:$0xff]
    %v2137 = vld [vmem:[#allocation4 + $0x4d0] sm:$0xff]
    %v2138 = vld [vmem:[#allocation4 + $0x4d8] sm:$0xff]
    %v2139 = vld [vmem:[#allocation4 + $0x4e0] sm:$0xff]
    %v2140 = vld [vmem:[#allocation4 + $0x4e8] sm:$0xff]
    %v2141 = vld [vmem:[#allocation4 + $0x4f0] sm:$0xff]
    %v2142 = vld [vmem:[#allocation4 + $0x4f8] sm:$0xff]
    %v2143 = vld [vmem:[#allocation4 + $0x500] sm:$0xff]
    %v2144 = vld [vmem:[#allocation4 + $0x508] sm:$0xff]
    %v2145 = vld [vmem:[#allocation4 + $0x510] sm:$0xff]
    %v2146 = vld [vmem:[#allocation4 + $0x518] sm:$0xff]
    %v2147 = vld [vmem:[#allocation4 + $0x520] sm:$0xff]
    %v2148 = vld [vmem:[#allocation4 + $0x528] sm:$0xff]
    %v2149 = vld [vmem:[#allocation4 + $0x530] sm:$0xff]
    %v2150 = vld [vmem:[#allocation4 + $0x538] sm:$0xff]
    %v2151 = vld [vmem:[#allocation4 + $0x540] sm:$0xff]
    %v2152 = vld [vmem:[#allocation4 + $0x548] sm:$0xff]
    %v2153 = vld [vmem:[#allocation4 + $0x550] sm:$0xff]
    %v2154 = vld [vmem:[#allocation4 + $0x558] sm:$0xff]
    %v2155 = vld [vmem:[#allocation4 + $0x560] sm:$0xff]
    %v2156 = vld [vmem:[#allocation4 + $0x568] sm:$0xff]
    %v2157 = vld [vmem:[#allocation4 + $0x570] sm:$0xff]
    %v2158 = vld [vmem:[#allocation4 + $0x578] sm:$0xff]
    %v2159 = vld [vmem:[#allocation4 + $0x580] sm:$0xff]
    %v2160 = vld [vmem:[#allocation4 + $0x588] sm:$0xff]
    %v2161 = vld [vmem:[#allocation4 + $0x590] sm:$0xff]
    %v2162 = vld [vmem:[#allocation4 + $0x598] sm:$0xff]
    %v2163 = vld [vmem:[#allocation4 + $0x5a0] sm:$0xff]
    %v2164 = vld [vmem:[#allocation4 + $0x5a8] sm:$0xff]
    %v2165 = vld [vmem:[#allocation4 + $0x5b0] sm:$0xff]
    %v2166 = vld [vmem:[#allocation4 + $0x5b8] sm:$0xff]
    %v2167 = vld [vmem:[#allocation4 + $0x5c0] sm:$0xff]
    %v2168 = vld [vmem:[#allocation4 + $0x5c8] sm:$0xff]
    %v2169 = vld [vmem:[#allocation4 + $0x5d0] sm:$0xff]
    %v2170 = vld [vmem:[#allocation4 + $0x5d8] sm:$0xff]
    %v2171 = vld [vmem:[#allocation4 + $0x5e0] sm:$0xff]
    %v2172 = vld [vmem:[#allocation4 + $0x5e8] sm:$0xff]
    %v2173 = vld [vmem:[#allocation4 + $0x5f0] sm:$0xff]
    %v2174 = vld [vmem:[#allocation4 + $0x5f8] sm:$0xff]
    %v2175 = vld [vmem:[#allocation4 + $0x600] sm:$0xff]
    %v2176 = vld [vmem:[#allocation4 + $0x608] sm:$0xff]
    %v2177 = vld [vmem:[#allocation4 + $0x610] sm:$0xff]
    %v2178 = vld [vmem:[#allocation4 + $0x618] sm:$0xff]
    %v2179 = vld [vmem:[#allocation4 + $0x620] sm:$0xff]
    %v2180 = vld [vmem:[#allocation4 + $0x628] sm:$0xff]
    %v2181 = vld [vmem:[#allocation4 + $0x630] sm:$0xff]
    %v2182 = vld [vmem:[#allocation4 + $0x638] sm:$0xff]
    %v2183 = vld [vmem:[#allocation4 + $0x640] sm:$0xff]
    %v2184 = vld [vmem:[#allocation4 + $0x648] sm:$0xff]
    %v2185 = vld [vmem:[#allocation4 + $0x650] sm:$0xff]
    %v2186 = vld [vmem:[#allocation4 + $0x658] sm:$0xff]
    %v2187 = vld [vmem:[#allocation4 + $0x660] sm:$0xff]
    %v2188 = vld [vmem:[#allocation4 + $0x668] sm:$0xff]
    %v2189 = vld [vmem:[#allocation4 + $0x670] sm:$0xff]
    %v2190 = vld [vmem:[#allocation4 + $0x678] sm:$0xff]
    %v2191 = vld [vmem:[#allocation4 + $0x680] sm:$0xff]
    %v2192 = vld [vmem:[#allocation4 + $0x688] sm:$0xff]
    %v2193 = vld [vmem:[#allocation4 + $0x690] sm:$0xff]
    %v2194 = vld [vmem:[#allocation4 + $0x698] sm:$0xff]
    %v2195 = vld [vmem:[#allocation4 + $0x6a0] sm:$0xff]
    %v2196 = vld [vmem:[#allocation4 + $0x6a8] sm:$0xff]
    %v2197 = vld [vmem:[#allocation4 + $0x6b0] sm:$0xff]
    %v2198 = vld [vmem:[#allocation4 + $0x6b8] sm:$0xff]
    %v2199 = vld [vmem:[#allocation4 + $0x6c0] sm:$0xff]
    %v2200 = vld [vmem:[#allocation4 + $0x6c8] sm:$0xff]
    %v2201 = vld [vmem:[#allocation4 + $0x6d0] sm:$0xff]
    %v2202 = vld [vmem:[#allocation4 + $0x6d8] sm:$0xff]
    %v2203 = vld [vmem:[#allocation4 + $0x6e0] sm:$0xff]
    %v2204 = vld [vmem:[#allocation4 + $0x6e8] sm:$0xff]
    %v2205 = vld [vmem:[#allocation4 + $0x6f0] sm:$0xff]
    %v2206 = vld [vmem:[#allocation4 + $0x6f8] sm:$0xff]
    %v2207 = vld [vmem:[#allocation4 + $0x700] sm:$0xff]
    %v2208 = vld [vmem:[#allocation4 + $0x708] sm:$0xff]
    %v2209 = vld [vmem:[#allocation4 + $0x710] sm:$0xff]
    %v2210 = vld [vmem:[#allocation4 + $0x718] sm:$0xff]
    %v2211 = vld [vmem:[#allocation4 + $0x720] sm:$0xff]
    %v2212 = vld [vmem:[#allocation4 + $0x728] sm:$0xff]
    %v2213 = vld [vmem:[#allocation4 + $0x730] sm:$0xff]
    %v2214 = vld [vmem:[#allocation4 + $0x738] sm:$0xff]
    %v2215 = vld [vmem:[#allocation4 + $0x740] sm:$0xff]
    %v2216 = vld [vmem:[#allocation4 + $0x748] sm:$0xff]
    %v2217 = vld [vmem:[#allocation4 + $0x750] sm:$0xff]
    %v2218 = vld [vmem:[#allocation4 + $0x758] sm:$0xff]
    %v2219 = vld [vmem:[#allocation4 + $0x760] sm:$0xff]
    %v2220 = vld [vmem:[#allocation4 + $0x768] sm:$0xff]
    %v2221 = vld [vmem:[#allocation4 + $0x770] sm:$0xff]
    %v2222 = vld [vmem:[#allocation4 + $0x778] sm:$0xff]
    %v2223 = vld [vmem:[#allocation4 + $0x780] sm:$0xff]
    %v2224 = vld [vmem:[#allocation4 + $0x788] sm:$0xff]
    %v2225 = vld [vmem:[#allocation4 + $0x790] sm:$0xff]
    %v2226 = vld [vmem:[#allocation4 + $0x798] sm:$0xff]
    %v2227 = vld [vmem:[#allocation4 + $0x7a0] sm:$0xff]
    %v2228 = vld [vmem:[#allocation4 + $0x7a8] sm:$0xff]
    %v2229 = vld [vmem:[#allocation4 + $0x7b0] sm:$0xff]
    %v2230 = vld [vmem:[#allocation4 + $0x7b8] sm:$0xff]
    %v2231 = vld [vmem:[#allocation4 + $0x7c0] sm:$0xff]
    %v2232 = vld [vmem:[#allocation4 + $0x7c8] sm:$0xff]
    %v2233 = vld [vmem:[#allocation4 + $0x7d0] sm:$0xff]
    %v2234 = vld [vmem:[#allocation4 + $0x7d8] sm:$0xff]
    %v2235 = vld [vmem:[#allocation4 + $0x7e0] sm:$0xff]
    %v2236 = vld [vmem:[#allocation4 + $0x7e8] sm:$0xff]
    %v2237 = vld [vmem:[#allocation4 + $0x7f0] sm:$0xff]
    %v2238 = vld [vmem:[#allocation4 + $0x7f8] sm:$0xff]
    %v2495 = vunpack.c.l.b16 %v1983
    %v2496 = vunpack.c.h.b16 %v1983
    %v2497 = vunpack.c.l.b16 %v1984
    %v2498 = vunpack.c.h.b16 %v1984
    %v2499 = vunpack.c.l.b16 %v1985
    %v2500 = vunpack.c.h.b16 %v1985
    %v2501 = vunpack.c.l.b16 %v1986
    %v2502 = vunpack.c.h.b16 %v1986
    %v2503 = vunpack.c.l.b16 %v1987
    %v2504 = vunpack.c.h.b16 %v1987
    %v2505 = vunpack.c.l.b16 %v1988
    %v2506 = vunpack.c.h.b16 %v1988
    %v2507 = vunpack.c.l.b16 %v1989
    %v2508 = vunpack.c.h.b16 %v1989
    %v2509 = vunpack.c.l.b16 %v1990
    %v2510 = vunpack.c.h.b16 %v1990
    %v2511 = vunpack.c.l.b16 %v1991
    %v2512 = vunpack.c.h.b16 %v1991
    %v2513 = vunpack.c.l.b16 %v1992
    %v2514 = vunpack.c.h.b16 %v1992
    %v2515 = vunpack.c.l.b16 %v1993
    %v2516 = vunpack.c.h.b16 %v1993
    %v2517 = vunpack.c.l.b16 %v1994
    %v2518 = vunpack.c.h.b16 %v1994
    %v2519 = vunpack.c.l.b16 %v1995
    %v2520 = vunpack.c.h.b16 %v1995
    %v2521 = vunpack.c.l.b16 %v1996
    %v2522 = vunpack.c.h.b16 %v1996
    %v2523 = vunpack.c.l.b16 %v1997
    %v2524 = vunpack.c.h.b16 %v1997
    %v2525 = vunpack.c.l.b16 %v1998
    %v2526 = vunpack.c.h.b16 %v1998
    %v2527 = vunpack.c.l.b16 %v1999
    %v2528 = vunpack.c.h.b16 %v1999
    %v2529 = vunpack.c.l.b16 %v2000
    %v2530 = vunpack.c.h.b16 %v2000
    %v2531 = vunpack.c.l.b16 %v2001
    %v2532 = vunpack.c.h.b16 %v2001
    %v2533 = vunpack.c.l.b16 %v2002
    %v2534 = vunpack.c.h.b16 %v2002
    %v2535 = vunpack.c.l.b16 %v2003
    %v2536 = vunpack.c.h.b16 %v2003
    %v2537 = vunpack.c.l.b16 %v2004
    %v2538 = vunpack.c.h.b16 %v2004
    %v2539 = vunpack.c.l.b16 %v2005
    %v2540 = vunpack.c.h.b16 %v2005
    %v2541 = vunpack.c.l.b16 %v2006
    %v2542 = vunpack.c.h.b16 %v2006
    %v2543 = vunpack.c.l.b16 %v2007
    %v2544 = vunpack.c.h.b16 %v2007
    %v2545 = vunpack.c.l.b16 %v2008
    %v2546 = vunpack.c.h.b16 %v2008
    %v2547 = vunpack.c.l.b16 %v2009
    %v2548 = vunpack.c.h.b16 %v2009
    %v2549 = vunpack.c.l.b16 %v2010
    %v2550 = vunpack.c.h.b16 %v2010
    %v2551 = vunpack.c.l.b16 %v2011
    %v2552 = vunpack.c.h.b16 %v2011
    %v2553 = vunpack.c.l.b16 %v2012
    %v2554 = vunpack.c.h.b16 %v2012
    %v2555 = vunpack.c.l.b16 %v2013
    %v2556 = vunpack.c.h.b16 %v2013
    %v2557 = vunpack.c.l.b16 %v2014
    %v2558 = vunpack.c.h.b16 %v2014
    %v2559 = vunpack.c.l.b16 %v2015
    %v2560 = vunpack.c.h.b16 %v2015
    %v2561 = vunpack.c.l.b16 %v2016
    %v2562 = vunpack.c.h.b16 %v2016
    %v2563 = vunpack.c.l.b16 %v2017
    %v2564 = vunpack.c.h.b16 %v2017
    %v2565 = vunpack.c.l.b16 %v2018
    %v2566 = vunpack.c.h.b16 %v2018
    %v2567 = vunpack.c.l.b16 %v2019
    %v2568 = vunpack.c.h.b16 %v2019
    %v2569 = vunpack.c.l.b16 %v2020
    %v2570 = vunpack.c.h.b16 %v2020
    %v2571 = vunpack.c.l.b16 %v2021
    %v2572 = vunpack.c.h.b16 %v2021
    %v2573 = vunpack.c.l.b16 %v2022
    %v2574 = vunpack.c.h.b16 %v2022
    %v2575 = vunpack.c.l.b16 %v2023
    %v2576 = vunpack.c.h.b16 %v2023
    %v2577 = vunpack.c.l.b16 %v2024
    %v2578 = vunpack.c.h.b16 %v2024
    %v2579 = vunpack.c.l.b16 %v2025
    %v2580 = vunpack.c.h.b16 %v2025
    %v2581 = vunpack.c.l.b16 %v2026
    %v2582 = vunpack.c.h.b16 %v2026
    %v2583 = vunpack.c.l.b16 %v2027
    %v2584 = vunpack.c.h.b16 %v2027
    %v2585 = vunpack.c.l.b16 %v2028
    %v2586 = vunpack.c.h.b16 %v2028
    %v2587 = vunpack.c.l.b16 %v2029
    %v2588 = vunpack.c.h.b16 %v2029
    %v2589 = vunpack.c.l.b16 %v2030
    %v2590 = vunpack.c.h.b16 %v2030
    %v2591 = vunpack.c.l.b16 %v2031
    %v2592 = vunpack.c.h.b16 %v2031
    %v2593 = vunpack.c.l.b16 %v2032
    %v2594 = vunpack.c.h.b16 %v2032
    %v2595 = vunpack.c.l.b16 %v2033
    %v2596 = vunpack.c.h.b16 %v2033
    %v2597 = vunpack.c.l.b16 %v2034
    %v2598 = vunpack.c.h.b16 %v2034
    %v2599 = vunpack.c.l.b16 %v2035
    %v2600 = vunpack.c.h.b16 %v2035
    %v2601 = vunpack.c.l.b16 %v2036
    %v2602 = vunpack.c.h.b16 %v2036
    %v2603 = vunpack.c.l.b16 %v2037
    %v2604 = vunpack.c.h.b16 %v2037
    %v2605 = vunpack.c.l.b16 %v2038
    %v2606 = vunpack.c.h.b16 %v2038
    %v2607 = vunpack.c.l.b16 %v2039
    %v2608 = vunpack.c.h.b16 %v2039
    %v2609 = vunpack.c.l.b16 %v2040
    %v2610 = vunpack.c.h.b16 %v2040
    %v2611 = vunpack.c.l.b16 %v2041
    %v2612 = vunpack.c.h.b16 %v2041
    %v2613 = vunpack.c.l.b16 %v2042
    %v2614 = vunpack.c.h.b16 %v2042
    %v2615 = vunpack.c.l.b16 %v2043
    %v2616 = vunpack.c.h.b16 %v2043
    %v2617 = vunpack.c.l.b16 %v2044
    %v2618 = vunpack.c.h.b16 %v2044
    %v2619 = vunpack.c.l.b16 %v2045
    %v2620 = vunpack.c.h.b16 %v2045
    %v2621 = vunpack.c.l.b16 %v2046
    %v2622 = vunpack.c.h.b16 %v2046
    %v2623 = vunpack.c.l.b16 %v2047
    %v2624 = vunpack.c.h.b16 %v2047
    %v2625 = vunpack.c.l.b16 %v2048
    %v2626 = vunpack.c.h.b16 %v2048
    %v2627 = vunpack.c.l.b16 %v2049
    %v2628 = vunpack.c.h.b16 %v2049
    %v2629 = vunpack.c.l.b16 %v2050
    %v2630 = vunpack.c.h.b16 %v2050
    %v2631 = vunpack.c.l.b16 %v2051
    %v2632 = vunpack.c.h.b16 %v2051
    %v2633 = vunpack.c.l.b16 %v2052
    %v2634 = vunpack.c.h.b16 %v2052
    %v2635 = vunpack.c.l.b16 %v2053
    %v2636 = vunpack.c.h.b16 %v2053
    %v2637 = vunpack.c.l.b16 %v2054
    %v2638 = vunpack.c.h.b16 %v2054
    %v2639 = vunpack.c.l.b16 %v2055
    %v2640 = vunpack.c.h.b16 %v2055
    %v2641 = vunpack.c.l.b16 %v2056
    %v2642 = vunpack.c.h.b16 %v2056
    %v2643 = vunpack.c.l.b16 %v2057
    %v2644 = vunpack.c.h.b16 %v2057
    %v2645 = vunpack.c.l.b16 %v2058
    %v2646 = vunpack.c.h.b16 %v2058
    %v2647 = vunpack.c.l.b16 %v2059
    %v2648 = vunpack.c.h.b16 %v2059
    %v2649 = vunpack.c.l.b16 %v2060
    %v2650 = vunpack.c.h.b16 %v2060
    %v2651 = vunpack.c.l.b16 %v2061
    %v2652 = vunpack.c.h.b16 %v2061
    %v2653 = vunpack.c.l.b16 %v2062
    %v2654 = vunpack.c.h.b16 %v2062
    %v2655 = vunpack.c.l.b16 %v2063
    %v2656 = vunpack.c.h.b16 %v2063
    %v2657 = vunpack.c.l.b16 %v2064
    %v2658 = vunpack.c.h.b16 %v2064
    %v2659 = vunpack.c.l.b16 %v2065
    %v2660 = vunpack.c.h.b16 %v2065
    %v2661 = vunpack.c.l.b16 %v2066
    %v2662 = vunpack.c.h.b16 %v2066
    %v2663 = vunpack.c.l.b16 %v2067
    %v2664 = vunpack.c.h.b16 %v2067
    %v2665 = vunpack.c.l.b16 %v2068
    %v2666 = vunpack.c.h.b16 %v2068
    %v2667 = vunpack.c.l.b16 %v2069
    %v2668 = vunpack.c.h.b16 %v2069
    %v2669 = vunpack.c.l.b16 %v2070
    %v2670 = vunpack.c.h.b16 %v2070
    %v2671 = vunpack.c.l.b16 %v2071
    %v2672 = vunpack.c.h.b16 %v2071
    %v2673 = vunpack.c.l.b16 %v2072
    %v2674 = vunpack.c.h.b16 %v2072
    %v2675 = vunpack.c.l.b16 %v2073
    %v2676 = vunpack.c.h.b16 %v2073
    %v2677 = vunpack.c.l.b16 %v2074
    %v2678 = vunpack.c.h.b16 %v2074
    %v2679 = vunpack.c.l.b16 %v2075
    %v2680 = vunpack.c.h.b16 %v2075
    %v2681 = vunpack.c.l.b16 %v2076
    %v2682 = vunpack.c.h.b16 %v2076
    %v2683 = vunpack.c.l.b16 %v2077
    %v2684 = vunpack.c.h.b16 %v2077
    %v2685 = vunpack.c.l.b16 %v2078
    %v2686 = vunpack.c.h.b16 %v2078
    %v2687 = vunpack.c.l.b16 %v2079
    %v2688 = vunpack.c.h.b16 %v2079
    %v2689 = vunpack.c.l.b16 %v2080
    %v2690 = vunpack.c.h.b16 %v2080
    %v2691 = vunpack.c.l.b16 %v2081
    %v2692 = vunpack.c.h.b16 %v2081
    %v2693 = vunpack.c.l.b16 %v2082
    %v2694 = vunpack.c.h.b16 %v2082
    %v2695 = vunpack.c.l.b16 %v2083
    %v2696 = vunpack.c.h.b16 %v2083
    %v2697 = vunpack.c.l.b16 %v2084
    %v2698 = vunpack.c.h.b16 %v2084
    %v2699 = vunpack.c.l.b16 %v2085
    %v2700 = vunpack.c.h.b16 %v2085
    %v2701 = vunpack.c.l.b16 %v2086
    %v2702 = vunpack.c.h.b16 %v2086
    %v2703 = vunpack.c.l.b16 %v2087
    %v2704 = vunpack.c.h.b16 %v2087
    %v2705 = vunpack.c.l.b16 %v2088
    %v2706 = vunpack.c.h.b16 %v2088
    %v2707 = vunpack.c.l.b16 %v2089
    %v2708 = vunpack.c.h.b16 %v2089
    %v2709 = vunpack.c.l.b16 %v2090
    %v2710 = vunpack.c.h.b16 %v2090
    %v2711 = vunpack.c.l.b16 %v2091
    %v2712 = vunpack.c.h.b16 %v2091
    %v2713 = vunpack.c.l.b16 %v2092
    %v2714 = vunpack.c.h.b16 %v2092
    %v2715 = vunpack.c.l.b16 %v2093
    %v2716 = vunpack.c.h.b16 %v2093
    %v2717 = vunpack.c.l.b16 %v2094
    %v2718 = vunpack.c.h.b16 %v2094
    %v2719 = vunpack.c.l.b16 %v2095
    %v2720 = vunpack.c.h.b16 %v2095
    %v2721 = vunpack.c.l.b16 %v2096
    %v2722 = vunpack.c.h.b16 %v2096
    %v2723 = vunpack.c.l.b16 %v2097
    %v2724 = vunpack.c.h.b16 %v2097
    %v2725 = vunpack.c.l.b16 %v2098
    %v2726 = vunpack.c.h.b16 %v2098
    %v2727 = vunpack.c.l.b16 %v2099
    %v2728 = vunpack.c.h.b16 %v2099
    %v2729 = vunpack.c.l.b16 %v2100
    %v2730 = vunpack.c.h.b16 %v2100
    %v2731 = vunpack.c.l.b16 %v2101
    %v2732 = vunpack.c.h.b16 %v2101
    %v2733 = vunpack.c.l.b16 %v2102
    %v2734 = vunpack.c.h.b16 %v2102
    %v2735 = vunpack.c.l.b16 %v2103
    %v2736 = vunpack.c.h.b16 %v2103
    %v2737 = vunpack.c.l.b16 %v2104
    %v2738 = vunpack.c.h.b16 %v2104
    %v2739 = vunpack.c.l.b16 %v2105
    %v2740 = vunpack.c.h.b16 %v2105
    %v2741 = vunpack.c.l.b16 %v2106
    %v2742 = vunpack.c.h.b16 %v2106
    %v2743 = vunpack.c.l.b16 %v2107
    %v2744 = vunpack.c.h.b16 %v2107
    %v2745 = vunpack.c.l.b16 %v2108
    %v2746 = vunpack.c.h.b16 %v2108
    %v2747 = vunpack.c.l.b16 %v2109
    %v2748 = vunpack.c.h.b16 %v2109
    %v2749 = vunpack.c.l.b16 %v2110
    %v2750 = vunpack.c.h.b16 %v2110
    %v2751 = vunpack.c.l.b16 %v2111
    %v2752 = vunpack.c.h.b16 %v2111
    %v2753 = vunpack.c.l.b16 %v2112
    %v2754 = vunpack.c.h.b16 %v2112
    %v2755 = vunpack.c.l.b16 %v2113
    %v2756 = vunpack.c.h.b16 %v2113
    %v2757 = vunpack.c.l.b16 %v2114
    %v2758 = vunpack.c.h.b16 %v2114
    %v2759 = vunpack.c.l.b16 %v2115
    %v2760 = vunpack.c.h.b16 %v2115
    %v2761 = vunpack.c.l.b16 %v2116
    %v2762 = vunpack.c.h.b16 %v2116
    %v2763 = vunpack.c.l.b16 %v2117
    %v2764 = vunpack.c.h.b16 %v2117
    %v2765 = vunpack.c.l.b16 %v2118
    %v2766 = vunpack.c.h.b16 %v2118
    %v2767 = vunpack.c.l.b16 %v2119
    %v2768 = vunpack.c.h.b16 %v2119
    %v2769 = vunpack.c.l.b16 %v2120
    %v2770 = vunpack.c.h.b16 %v2120
    %v2771 = vunpack.c.l.b16 %v2121
    %v2772 = vunpack.c.h.b16 %v2121
    %v2773 = vunpack.c.l.b16 %v2122
    %v2774 = vunpack.c.h.b16 %v2122
    %v2775 = vunpack.c.l.b16 %v2123
    %v2776 = vunpack.c.h.b16 %v2123
    %v2777 = vunpack.c.l.b16 %v2124
    %v2778 = vunpack.c.h.b16 %v2124
    %v2779 = vunpack.c.l.b16 %v2125
    %v2780 = vunpack.c.h.b16 %v2125
    %v2781 = vunpack.c.l.b16 %v2126
    %v2782 = vunpack.c.h.b16 %v2126
    %v2783 = vunpack.c.l.b16 %v2127
    %v2784 = vunpack.c.h.b16 %v2127
    %v2785 = vunpack.c.l.b16 %v2128
    %v2786 = vunpack.c.h.b16 %v2128
    %v2787 = vunpack.c.l.b16 %v2129
    %v2788 = vunpack.c.h.b16 %v2129
    %v2789 = vunpack.c.l.b16 %v2130
    %v2790 = vunpack.c.h.b16 %v2130
    %v2791 = vunpack.c.l.b16 %v2131
    %v2792 = vunpack.c.h.b16 %v2131
    %v2793 = vunpack.c.l.b16 %v2132
    %v2794 = vunpack.c.h.b16 %v2132
    %v2795 = vunpack.c.l.b16 %v2133
    %v2796 = vunpack.c.h.b16 %v2133
    %v2797 = vunpack.c.l.b16 %v2134
    %v2798 = vunpack.c.h.b16 %v2134
    %v2799 = vunpack.c.l.b16 %v2135
    %v2800 = vunpack.c.h.b16 %v2135
    %v2801 = vunpack.c.l.b16 %v2136
    %v2802 = vunpack.c.h.b16 %v2136
    %v2803 = vunpack.c.l.b16 %v2137
    %v2804 = vunpack.c.h.b16 %v2137
    %v2805 = vunpack.c.l.b16 %v2138
    %v2806 = vunpack.c.h.b16 %v2138
    %v2807 = vunpack.c.l.b16 %v2139
    %v2808 = vunpack.c.h.b16 %v2139
    %v2809 = vunpack.c.l.b16 %v2140
    %v2810 = vunpack.c.h.b16 %v2140
    %v2811 = vunpack.c.l.b16 %v2141
    %v2812 = vunpack.c.h.b16 %v2141
    %v2813 = vunpack.c.l.b16 %v2142
    %v2814 = vunpack.c.h.b16 %v2142
    %v2815 = vunpack.c.l.b16 %v2143
    %v2816 = vunpack.c.h.b16 %v2143
    %v2817 = vunpack.c.l.b16 %v2144
    %v2818 = vunpack.c.h.b16 %v2144
    %v2819 = vunpack.c.l.b16 %v2145
    %v2820 = vunpack.c.h.b16 %v2145
    %v2821 = vunpack.c.l.b16 %v2146
    %v2822 = vunpack.c.h.b16 %v2146
    %v2823 = vunpack.c.l.b16 %v2147
    %v2824 = vunpack.c.h.b16 %v2147
    %v2825 = vunpack.c.l.b16 %v2148
    %v2826 = vunpack.c.h.b16 %v2148
    %v2827 = vunpack.c.l.b16 %v2149
    %v2828 = vunpack.c.h.b16 %v2149
    %v2829 = vunpack.c.l.b16 %v2150
    %v2830 = vunpack.c.h.b16 %v2150
    %v2831 = vunpack.c.l.b16 %v2151
    %v2832 = vunpack.c.h.b16 %v2151
    %v2833 = vunpack.c.l.b16 %v2152
    %v2834 = vunpack.c.h.b16 %v2152
    %v2835 = vunpack.c.l.b16 %v2153
    %v2836 = vunpack.c.h.b16 %v2153
    %v2837 = vunpack.c.l.b16 %v2154
    %v2838 = vunpack.c.h.b16 %v2154
    %v2839 = vunpack.c.l.b16 %v2155
    %v2840 = vunpack.c.h.b16 %v2155
    %v2841 = vunpack.c.l.b16 %v2156
    %v2842 = vunpack.c.h.b16 %v2156
    %v2843 = vunpack.c.l.b16 %v2157
    %v2844 = vunpack.c.h.b16 %v2157
    %v2845 = vunpack.c.l.b16 %v2158
    %v2846 = vunpack.c.h.b16 %v2158
    %v2847 = vunpack.c.l.b16 %v2159
    %v2848 = vunpack.c.h.b16 %v2159
    %v2849 = vunpack.c.l.b16 %v2160
    %v2850 = vunpack.c.h.b16 %v2160
    %v2851 = vunpack.c.l.b16 %v2161
    %v2852 = vunpack.c.h.b16 %v2161
    %v2853 = vunpack.c.l.b16 %v2162
    %v2854 = vunpack.c.h.b16 %v2162
    %v2855 = vunpack.c.l.b16 %v2163
    %v2856 = vunpack.c.h.b16 %v2163
    %v2857 = vunpack.c.l.b16 %v2164
    %v2858 = vunpack.c.h.b16 %v2164
    %v2859 = vunpack.c.l.b16 %v2165
    %v2860 = vunpack.c.h.b16 %v2165
    %v2861 = vunpack.c.l.b16 %v2166
    %v2862 = vunpack.c.h.b16 %v2166
    %v2863 = vunpack.c.l.b16 %v2167
    %v2864 = vunpack.c.h.b16 %v2167
    %v2865 = vunpack.c.l.b16 %v2168
    %v2866 = vunpack.c.h.b16 %v2168
    %v2867 = vunpack.c.l.b16 %v2169
    %v2868 = vunpack.c.h.b16 %v2169
    %v2869 = vunpack.c.l.b16 %v2170
    %v2870 = vunpack.c.h.b16 %v2170
    %v2871 = vunpack.c.l.b16 %v2171
    %v2872 = vunpack.c.h.b16 %v2171
    %v2873 = vunpack.c.l.b16 %v2172
    %v2874 = vunpack.c.h.b16 %v2172
    %v2875 = vunpack.c.l.b16 %v2173
    %v2876 = vunpack.c.h.b16 %v2173
    %v2877 = vunpack.c.l.b16 %v2174
    %v2878 = vunpack.c.h.b16 %v2174
    %v2879 = vunpack.c.l.b16 %v2175
    %v2880 = vunpack.c.h.b16 %v2175
    %v2881 = vunpack.c.l.b16 %v2176
    %v2882 = vunpack.c.h.b16 %v2176
    %v2883 = vunpack.c.l.b16 %v2177
    %v2884 = vunpack.c.h.b16 %v2177
    %v2885 = vunpack.c.l.b16 %v2178
    %v2886 = vunpack.c.h.b16 %v2178
    %v2887 = vunpack.c.l.b16 %v2179
    %v2888 = vunpack.c.h.b16 %v2179
    %v2889 = vunpack.c.l.b16 %v2180
    %v2890 = vunpack.c.h.b16 %v2180
    %v2891 = vunpack.c.l.b16 %v2181
    %v2892 = vunpack.c.h.b16 %v2181
    %v2893 = vunpack.c.l.b16 %v2182
    %v2894 = vunpack.c.h.b16 %v2182
    %v2895 = vunpack.c.l.b16 %v2183
    %v2896 = vunpack.c.h.b16 %v2183
    %v2897 = vunpack.c.l.b16 %v2184
    %v2898 = vunpack.c.h.b16 %v2184
    %v2899 = vunpack.c.l.b16 %v2185
    %v2900 = vunpack.c.h.b16 %v2185
    %v2901 = vunpack.c.l.b16 %v2186
    %v2902 = vunpack.c.h.b16 %v2186
    %v2903 = vunpack.c.l.b16 %v2187
    %v2904 = vunpack.c.h.b16 %v2187
    %v2905 = vunpack.c.l.b16 %v2188
    %v2906 = vunpack.c.h.b16 %v2188
    %v2907 = vunpack.c.l.b16 %v2189
    %v2908 = vunpack.c.h.b16 %v2189
    %v2909 = vunpack.c.l.b16 %v2190
    %v2910 = vunpack.c.h.b16 %v2190
    %v2911 = vunpack.c.l.b16 %v2191
    %v2912 = vunpack.c.h.b16 %v2191
    %v2913 = vunpack.c.l.b16 %v2192
    %v2914 = vunpack.c.h.b16 %v2192
    %v2915 = vunpack.c.l.b16 %v2193
    %v2916 = vunpack.c.h.b16 %v2193
    %v2917 = vunpack.c.l.b16 %v2194
    %v2918 = vunpack.c.h.b16 %v2194
    %v2919 = vunpack.c.l.b16 %v2195
    %v2920 = vunpack.c.h.b16 %v2195
    %v2921 = vunpack.c.l.b16 %v2196
    %v2922 = vunpack.c.h.b16 %v2196
    %v2923 = vunpack.c.l.b16 %v2197
    %v2924 = vunpack.c.h.b16 %v2197
    %v2925 = vunpack.c.l.b16 %v2198
    %v2926 = vunpack.c.h.b16 %v2198
    %v2927 = vunpack.c.l.b16 %v2199
    %v2928 = vunpack.c.h.b16 %v2199
    %v2929 = vunpack.c.l.b16 %v2200
    %v2930 = vunpack.c.h.b16 %v2200
    %v2931 = vunpack.c.l.b16 %v2201
    %v2932 = vunpack.c.h.b16 %v2201
    %v2933 = vunpack.c.l.b16 %v2202
    %v2934 = vunpack.c.h.b16 %v2202
    %v2935 = vunpack.c.l.b16 %v2203
    %v2936 = vunpack.c.h.b16 %v2203
    %v2937 = vunpack.c.l.b16 %v2204
    %v2938 = vunpack.c.h.b16 %v2204
    %v2939 = vunpack.c.l.b16 %v2205
    %v2940 = vunpack.c.h.b16 %v2205
    %v2941 = vunpack.c.l.b16 %v2206
    %v2942 = vunpack.c.h.b16 %v2206
    %v2943 = vunpack.c.l.b16 %v2207
    %v2944 = vunpack.c.h.b16 %v2207
    %v2945 = vunpack.c.l.b16 %v2208
    %v2946 = vunpack.c.h.b16 %v2208
    %v2947 = vunpack.c.l.b16 %v2209
    %v2948 = vunpack.c.h.b16 %v2209
    %v2949 = vunpack.c.l.b16 %v2210
    %v2950 = vunpack.c.h.b16 %v2210
    %v2951 = vunpack.c.l.b16 %v2211
    %v2952 = vunpack.c.h.b16 %v2211
    %v2953 = vunpack.c.l.b16 %v2212
    %v2954 = vunpack.c.h.b16 %v2212
    %v2955 = vunpack.c.l.b16 %v2213
    %v2956 = vunpack.c.h.b16 %v2213
    %v2957 = vunpack.c.l.b16 %v2214
    %v2958 = vunpack.c.h.b16 %v2214
    %v2959 = vunpack.c.l.b16 %v2215
    %v2960 = vunpack.c.h.b16 %v2215
    %v2961 = vunpack.c.l.b16 %v2216
    %v2962 = vunpack.c.h.b16 %v2216
    %v2963 = vunpack.c.l.b16 %v2217
    %v2964 = vunpack.c.h.b16 %v2217
    %v2965 = vunpack.c.l.b16 %v2218
    %v2966 = vunpack.c.h.b16 %v2218
    %v2967 = vunpack.c.l.b16 %v2219
    %v2968 = vunpack.c.h.b16 %v2219
    %v2969 = vunpack.c.l.b16 %v2220
    %v2970 = vunpack.c.h.b16 %v2220
    %v2971 = vunpack.c.l.b16 %v2221
    %v2972 = vunpack.c.h.b16 %v2221
    %v2973 = vunpack.c.l.b16 %v2222
    %v2974 = vunpack.c.h.b16 %v2222
    %v2975 = vunpack.c.l.b16 %v2223
    %v2976 = vunpack.c.h.b16 %v2223
    %v2977 = vunpack.c.l.b16 %v2224
    %v2978 = vunpack.c.h.b16 %v2224
    %v2979 = vunpack.c.l.b16 %v2225
    %v2980 = vunpack.c.h.b16 %v2225
    %v2981 = vunpack.c.l.b16 %v2226
    %v2982 = vunpack.c.h.b16 %v2226
    %v2983 = vunpack.c.l.b16 %v2227
    %v2984 = vunpack.c.h.b16 %v2227
    %v2985 = vunpack.c.l.b16 %v2228
    %v2986 = vunpack.c.h.b16 %v2228
    %v2987 = vunpack.c.l.b16 %v2229
    %v2988 = vunpack.c.h.b16 %v2229
    %v2989 = vunpack.c.l.b16 %v2230
    %v2990 = vunpack.c.h.b16 %v2230
    %v2991 = vunpack.c.l.b16 %v2231
    %v2992 = vunpack.c.h.b16 %v2231
    %v2993 = vunpack.c.l.b16 %v2232
    %v2994 = vunpack.c.h.b16 %v2232
    %v2995 = vunpack.c.l.b16 %v2233
    %v2996 = vunpack.c.h.b16 %v2233
    %v2997 = vunpack.c.l.b16 %v2234
    %v2998 = vunpack.c.h.b16 %v2234
    %v2999 = vunpack.c.l.b16 %v2235
    %v3000 = vunpack.c.h.b16 %v2235
    %v3001 = vunpack.c.l.b16 %v2236
    %v3002 = vunpack.c.h.b16 %v2236
    %v3003 = vunpack.c.l.b16 %v2237
    %v3004 = vunpack.c.h.b16 %v2237
    %v3005 = vunpack.c.l.b16 %v2238
    %v3006 = vunpack.c.h.b16 %v2238
    %v3007 = vpack.c.b16 %v2503, %v2495
    %v3008 = vpack.c.b16 %v2504, %v2496
    %v3009 = vpack.c.b16 %v2505, %v2497
    %v3010 = vpack.c.b16 %v2506, %v2498
    %v3011 = vpack.c.b16 %v2507, %v2499
    %v3012 = vpack.c.b16 %v2508, %v2500
    %v3013 = vpack.c.b16 %v2509, %v2501
    %v3014 = vpack.c.b16 %v2510, %v2502
    %v3015 = vpack.c.b16 %v2519, %v2511
    %v3016 = vpack.c.b16 %v2520, %v2512
    %v3017 = vpack.c.b16 %v2521, %v2513
    %v3018 = vpack.c.b16 %v2522, %v2514
    %v3019 = vpack.c.b16 %v2523, %v2515
    %v3020 = vpack.c.b16 %v2524, %v2516
    %v3021 = vpack.c.b16 %v2525, %v2517
    %v3022 = vpack.c.b16 %v2526, %v2518
    %v3023 = vpack.c.b16 %v2535, %v2527
    %v3024 = vpack.c.b16 %v2536, %v2528
    %v3025 = vpack.c.b16 %v2537, %v2529
    %v3026 = vpack.c.b16 %v2538, %v2530
    %v3027 = vpack.c.b16 %v2539, %v2531
    %v3028 = vpack.c.b16 %v2540, %v2532
    %v3029 = vpack.c.b16 %v2541, %v2533
    %v3030 = vpack.c.b16 %v2542, %v2534
    %v3031 = vpack.c.b16 %v2551, %v2543
    %v3032 = vpack.c.b16 %v2552, %v2544
    %v3033 = vpack.c.b16 %v2553, %v2545
    %v3034 = vpack.c.b16 %v2554, %v2546
    %v3035 = vpack.c.b16 %v2555, %v2547
    %v3036 = vpack.c.b16 %v2556, %v2548
    %v3037 = vpack.c.b16 %v2557, %v2549
    %v3038 = vpack.c.b16 %v2558, %v2550
    %v3039 = vpack.c.b16 %v2567, %v2559
    %v3040 = vpack.c.b16 %v2568, %v2560
    %v3041 = vpack.c.b16 %v2569, %v2561
    %v3042 = vpack.c.b16 %v2570, %v2562
    %v3043 = vpack.c.b16 %v2571, %v2563
    %v3044 = vpack.c.b16 %v2572, %v2564
    %v3045 = vpack.c.b16 %v2573, %v2565
    %v3046 = vpack.c.b16 %v2574, %v2566
    %v3047 = vpack.c.b16 %v2583, %v2575
    %v3048 = vpack.c.b16 %v2584, %v2576
    %v3049 = vpack.c.b16 %v2585, %v2577
    %v3050 = vpack.c.b16 %v2586, %v2578
    %v3051 = vpack.c.b16 %v2587, %v2579
    %v3052 = vpack.c.b16 %v2588, %v2580
    %v3053 = vpack.c.b16 %v2589, %v2581
    %v3054 = vpack.c.b16 %v2590, %v2582
    %v3055 = vpack.c.b16 %v2599, %v2591
    %v3056 = vpack.c.b16 %v2600, %v2592
    %v3057 = vpack.c.b16 %v2601, %v2593
    %v3058 = vpack.c.b16 %v2602, %v2594
    %v3059 = vpack.c.b16 %v2603, %v2595
    %v3060 = vpack.c.b16 %v2604, %v2596
    %v3061 = vpack.c.b16 %v2605, %v2597
    %v3062 = vpack.c.b16 %v2606, %v2598
    %v3063 = vpack.c.b16 %v2615, %v2607
    %v3064 = vpack.c.b16 %v2616, %v2608
    %v3065 = vpack.c.b16 %v2617, %v2609
    %v3066 = vpack.c.b16 %v2618, %v2610
    %v3067 = vpack.c.b16 %v2619, %v2611
    %v3068 = vpack.c.b16 %v2620, %v2612
    %v3069 = vpack.c.b16 %v2621, %v2613
    %v3070 = vpack.c.b16 %v2622, %v2614
    %v3071 = vpack.c.b16 %v2631, %v2623
    %v3072 = vpack.c.b16 %v2632, %v2624
    %v3073 = vpack.c.b16 %v2633, %v2625
    %v3074 = vpack.c.b16 %v2634, %v2626
    %v3075 = vpack.c.b16 %v2635, %v2627
    %v3076 = vpack.c.b16 %v2636, %v2628
    %v3077 = vpack.c.b16 %v2637, %v2629
    %v3078 = vpack.c.b16 %v2638, %v2630
    %v3079 = vpack.c.b16 %v2647, %v2639
    %v3080 = vpack.c.b16 %v2648, %v2640
    %v3081 = vpack.c.b16 %v2649, %v2641
    %v3082 = vpack.c.b16 %v2650, %v2642
    %v3083 = vpack.c.b16 %v2651, %v2643
    %v3084 = vpack.c.b16 %v2652, %v2644
    %v3085 = vpack.c.b16 %v2653, %v2645
    %v3086 = vpack.c.b16 %v2654, %v2646
    %v3087 = vpack.c.b16 %v2663, %v2655
    %v3088 = vpack.c.b16 %v2664, %v2656
    %v3089 = vpack.c.b16 %v2665, %v2657
    %v3090 = vpack.c.b16 %v2666, %v2658
    %v3091 = vpack.c.b16 %v2667, %v2659
    %v3092 = vpack.c.b16 %v2668, %v2660
    %v3093 = vpack.c.b16 %v2669, %v2661
    %v3094 = vpack.c.b16 %v2670, %v2662
    %v3095 = vpack.c.b16 %v2679, %v2671
    %v3096 = vpack.c.b16 %v2680, %v2672
    %v3097 = vpack.c.b16 %v2681, %v2673
    %v3098 = vpack.c.b16 %v2682, %v2674
    %v3099 = vpack.c.b16 %v2683, %v2675
    %v3100 = vpack.c.b16 %v2684, %v2676
    %v3101 = vpack.c.b16 %v2685, %v2677
    %v3102 = vpack.c.b16 %v2686, %v2678
    %v3103 = vpack.c.b16 %v2695, %v2687
    %v3104 = vpack.c.b16 %v2696, %v2688
    %v3105 = vpack.c.b16 %v2697, %v2689
    %v3106 = vpack.c.b16 %v2698, %v2690
    %v3107 = vpack.c.b16 %v2699, %v2691
    %v3108 = vpack.c.b16 %v2700, %v2692
    %v3109 = vpack.c.b16 %v2701, %v2693
    %v3110 = vpack.c.b16 %v2702, %v2694
    %v3111 = vpack.c.b16 %v2711, %v2703
    %v3112 = vpack.c.b16 %v2712, %v2704
    %v3113 = vpack.c.b16 %v2713, %v2705
    %v3114 = vpack.c.b16 %v2714, %v2706
    %v3115 = vpack.c.b16 %v2715, %v2707
    %v3116 = vpack.c.b16 %v2716, %v2708
    %v3117 = vpack.c.b16 %v2717, %v2709
    %v3118 = vpack.c.b16 %v2718, %v2710
    %v3119 = vpack.c.b16 %v2727, %v2719
    %v3120 = vpack.c.b16 %v2728, %v2720
    %v3121 = vpack.c.b16 %v2729, %v2721
    %v3122 = vpack.c.b16 %v2730, %v2722
    %v3123 = vpack.c.b16 %v2731, %v2723
    %v3124 = vpack.c.b16 %v2732, %v2724
    %v3125 = vpack.c.b16 %v2733, %v2725
    %v3126 = vpack.c.b16 %v2734, %v2726
    %v3127 = vpack.c.b16 %v2743, %v2735
    %v3128 = vpack.c.b16 %v2744, %v2736
    %v3129 = vpack.c.b16 %v2745, %v2737
    %v3130 = vpack.c.b16 %v2746, %v2738
    %v3131 = vpack.c.b16 %v2747, %v2739
    %v3132 = vpack.c.b16 %v2748, %v2740
    %v3133 = vpack.c.b16 %v2749, %v2741
    %v3134 = vpack.c.b16 %v2750, %v2742
    %v3135 = vpack.c.b16 %v2759, %v2751
    %v3136 = vpack.c.b16 %v2760, %v2752
    %v3137 = vpack.c.b16 %v2761, %v2753
    %v3138 = vpack.c.b16 %v2762, %v2754
    %v3139 = vpack.c.b16 %v2763, %v2755
    %v3140 = vpack.c.b16 %v2764, %v2756
    %v3141 = vpack.c.b16 %v2765, %v2757
    %v3142 = vpack.c.b16 %v2766, %v2758
    %v3143 = vpack.c.b16 %v2775, %v2767
    %v3144 = vpack.c.b16 %v2776, %v2768
    %v3145 = vpack.c.b16 %v2777, %v2769
    %v3146 = vpack.c.b16 %v2778, %v2770
    %v3147 = vpack.c.b16 %v2779, %v2771
    %v3148 = vpack.c.b16 %v2780, %v2772
    %v3149 = vpack.c.b16 %v2781, %v2773
    %v3150 = vpack.c.b16 %v2782, %v2774
    %v3151 = vpack.c.b16 %v2791, %v2783
    %v3152 = vpack.c.b16 %v2792, %v2784
    %v3153 = vpack.c.b16 %v2793, %v2785
    %v3154 = vpack.c.b16 %v2794, %v2786
    %v3155 = vpack.c.b16 %v2795, %v2787
    %v3156 = vpack.c.b16 %v2796, %v2788
    %v3157 = vpack.c.b16 %v2797, %v2789
    %v3158 = vpack.c.b16 %v2798, %v2790
    %v3159 = vpack.c.b16 %v2807, %v2799
    %v3160 = vpack.c.b16 %v2808, %v2800
    %v3161 = vpack.c.b16 %v2809, %v2801
    %v3162 = vpack.c.b16 %v2810, %v2802
    %v3163 = vpack.c.b16 %v2811, %v2803
    %v3164 = vpack.c.b16 %v2812, %v2804
    %v3165 = vpack.c.b16 %v2813, %v2805
    %v3166 = vpack.c.b16 %v2814, %v2806
    %v3167 = vpack.c.b16 %v2823, %v2815
    %v3168 = vpack.c.b16 %v2824, %v2816
    %v3169 = vpack.c.b16 %v2825, %v2817
    %v3170 = vpack.c.b16 %v2826, %v2818
    %v3171 = vpack.c.b16 %v2827, %v2819
    %v3172 = vpack.c.b16 %v2828, %v2820
    %v3173 = vpack.c.b16 %v2829, %v2821
    %v3174 = vpack.c.b16 %v2830, %v2822
    %v3175 = vpack.c.b16 %v2839, %v2831
    %v3176 = vpack.c.b16 %v2840, %v2832
    %v3177 = vpack.c.b16 %v2841, %v2833
    %v3178 = vpack.c.b16 %v2842, %v2834
    %v3179 = vpack.c.b16 %v2843, %v2835
    %v3180 = vpack.c.b16 %v2844, %v2836
    %v3181 = vpack.c.b16 %v2845, %v2837
    %v3182 = vpack.c.b16 %v2846, %v2838
    %v3183 = vpack.c.b16 %v2855, %v2847
    %v3184 = vpack.c.b16 %v2856, %v2848
    %v3185 = vpack.c.b16 %v2857, %v2849
    %v3186 = vpack.c.b16 %v2858, %v2850
    %v3187 = vpack.c.b16 %v2859, %v2851
    %v3188 = vpack.c.b16 %v2860, %v2852
    %v3189 = vpack.c.b16 %v2861, %v2853
    %v3190 = vpack.c.b16 %v2862, %v2854
    %v3191 = vpack.c.b16 %v2871, %v2863
    %v3192 = vpack.c.b16 %v2872, %v2864
    %v3193 = vpack.c.b16 %v2873, %v2865
    %v3194 = vpack.c.b16 %v2874, %v2866
    %v3195 = vpack.c.b16 %v2875, %v2867
    %v3196 = vpack.c.b16 %v2876, %v2868
    %v3197 = vpack.c.b16 %v2877, %v2869
    %v3198 = vpack.c.b16 %v2878, %v2870
    %v3199 = vpack.c.b16 %v2887, %v2879
    %v3200 = vpack.c.b16 %v2888, %v2880
    %v3201 = vpack.c.b16 %v2889, %v2881
    %v3202 = vpack.c.b16 %v2890, %v2882
    %v3203 = vpack.c.b16 %v2891, %v2883
    %v3204 = vpack.c.b16 %v2892, %v2884
    %v3205 = vpack.c.b16 %v2893, %v2885
    %v3206 = vpack.c.b16 %v2894, %v2886
    %v3207 = vpack.c.b16 %v2903, %v2895
    %v3208 = vpack.c.b16 %v2904, %v2896
    %v3209 = vpack.c.b16 %v2905, %v2897
    %v3210 = vpack.c.b16 %v2906, %v2898
    %v3211 = vpack.c.b16 %v2907, %v2899
    %v3212 = vpack.c.b16 %v2908, %v2900
    %v3213 = vpack.c.b16 %v2909, %v2901
    %v3214 = vpack.c.b16 %v2910, %v2902
    %v3215 = vpack.c.b16 %v2919, %v2911
    %v3216 = vpack.c.b16 %v2920, %v2912
    %v3217 = vpack.c.b16 %v2921, %v2913
    %v3218 = vpack.c.b16 %v2922, %v2914
    %v3219 = vpack.c.b16 %v2923, %v2915
    %v3220 = vpack.c.b16 %v2924, %v2916
    %v3221 = vpack.c.b16 %v2925, %v2917
    %v3222 = vpack.c.b16 %v2926, %v2918
    %v3223 = vpack.c.b16 %v2935, %v2927
    %v3224 = vpack.c.b16 %v2936, %v2928
    %v3225 = vpack.c.b16 %v2937, %v2929
    %v3226 = vpack.c.b16 %v2938, %v2930
    %v3227 = vpack.c.b16 %v2939, %v2931
    %v3228 = vpack.c.b16 %v2940, %v2932
    %v3229 = vpack.c.b16 %v2941, %v2933
    %v3230 = vpack.c.b16 %v2942, %v2934
    %v3231 = vpack.c.b16 %v2951, %v2943
    %v3232 = vpack.c.b16 %v2952, %v2944
    %v3233 = vpack.c.b16 %v2953, %v2945
    %v3234 = vpack.c.b16 %v2954, %v2946
    %v3235 = vpack.c.b16 %v2955, %v2947
    %v3236 = vpack.c.b16 %v2956, %v2948
    %v3237 = vpack.c.b16 %v2957, %v2949
    %v3238 = vpack.c.b16 %v2958, %v2950
    %v3239 = vpack.c.b16 %v2967, %v2959
    %v3240 = vpack.c.b16 %v2968, %v2960
    %v3241 = vpack.c.b16 %v2969, %v2961
    %v3242 = vpack.c.b16 %v2970, %v2962
    %v3243 = vpack.c.b16 %v2971, %v2963
    %v3244 = vpack.c.b16 %v2972, %v2964
    %v3245 = vpack.c.b16 %v2973, %v2965
    %v3246 = vpack.c.b16 %v2974, %v2966
    %v3247 = vpack.c.b16 %v2983, %v2975
    %v3248 = vpack.c.b16 %v2984, %v2976
    %v3249 = vpack.c.b16 %v2985, %v2977
    %v3250 = vpack.c.b16 %v2986, %v2978
    %v3251 = vpack.c.b16 %v2987, %v2979
    %v3252 = vpack.c.b16 %v2988, %v2980
    %v3253 = vpack.c.b16 %v2989, %v2981
    %v3254 = vpack.c.b16 %v2990, %v2982
    %v3255 = vpack.c.b16 %v2999, %v2991
    %v3256 = vpack.c.b16 %v3000, %v2992
    %v3257 = vpack.c.b16 %v3001, %v2993
    %v3258 = vpack.c.b16 %v3002, %v2994
    %v3259 = vpack.c.b16 %v3003, %v2995
    %v3260 = vpack.c.b16 %v3004, %v2996
    %v3261 = vpack.c.b16 %v3005, %v2997
    %v3262 = vpack.c.b16 %v3006, %v2998
    %3519 = vmatprep.subr.bf16.mxu0 %v3064
    %3520 = vmatpush1.bf16.msra.mxu0 %v3063
    %3521 = vmatprep.subr.bf16.mxu0 %v3056
    %3522 = vmatpush1.bf16.msra.mxu0 %v3055
    %3523 = vmatprep.subr.bf16.mxu0 %v3048
    %3524 = vmatpush1.bf16.msra.mxu0 %v3047
    %3525 = vmatprep.subr.bf16.mxu0 %v3040
    %3526 = vmatpush1.bf16.msra.mxu0 %v3039
    %3527 = vmatprep.subr.bf16.mxu0 %v3032
    %3528 = vmatpush1.bf16.msra.mxu0 %v3031
    %3529 = vmatprep.subr.bf16.mxu0 %v3024
    %3530 = vmatpush1.bf16.msra.mxu0 %v3023
    %3531 = vmatprep.subr.bf16.mxu0 %v3016
    %3532 = vmatpush1.bf16.msra.mxu0 %v3015
    %3533 = vmatprep.subr.bf16.mxu0 %v3008
    %3534 = vmatpush1.bf16.msra.mxu0 %v3007
    %3535 = vmatprep.subr.bf16.mxu0 %v3128
    %3536 = vmatpush2.bf16.msra.mxu0 %v3127
    %3537 = vmatprep.subr.bf16.mxu0 %v3120
    %3538 = vmatpush2.bf16.msra.mxu0 %v3119
    %3539 = vmatprep.subr.bf16.mxu0 %v3112
    %3540 = vmatpush2.bf16.msra.mxu0 %v3111
    %3541 = vmatprep.subr.bf16.mxu0 %v3104
    %3542 = vmatpush2.bf16.msra.mxu0 %v3103
    %3543 = vmatprep.subr.bf16.mxu0 %v3096
    %3544 = vmatpush2.bf16.msra.mxu0 %v3095
    %3545 = vmatprep.subr.bf16.mxu0 %v3088
    %3546 = vmatpush2.bf16.msra.mxu0 %v3087
    %3547 = vmatprep.subr.bf16.mxu0 %v3080
    %3548 = vmatpush2.bf16.msra.mxu0 %v3079
    %3549 = vmatprep.subr.bf16.mxu0 %v3072
    %3550 = vmatpush2.bf16.msra.mxu0 %v3071
    %3551 = vmatprep.mubr.bf16.mxu0 %v1980
    %3552 = vmatmul.mubr.bf16.gmra.mxu0 %v1979
    %v3553 = vpop.f32.mrf.mxu0
    %v3554 = vadd.f32 0.0, %v3553
    %v3555 = vpop.f32.mrf.mxu0
    %v3556 = vadd.f32 0.0, %v3555
    %v3557 = vpop.f32.mrf.mxu0
    %v3558 = vpop.f32.mrf.mxu0
    %3559 = vdwg.mxu0
    %3560 = vmatprep.subr.bf16.mxu0 %v3192
    %3561 = vmatpush1.bf16.msra.mxu0 %v3191
    %3562 = vmatprep.subr.bf16.mxu0 %v3184
    %3563 = vmatpush1.bf16.msra.mxu0 %v3183
    %3564 = vmatprep.subr.bf16.mxu0 %v3176
    %3565 = vmatpush1.bf16.msra.mxu0 %v3175
    %3566 = vmatprep.subr.bf16.mxu0 %v3168
    %3567 = vmatpush1.bf16.msra.mxu0 %v3167
    %3568 = vmatprep.subr.bf16.mxu0 %v3160
    %3569 = vmatpush1.bf16.msra.mxu0 %v3159
    %3570 = vmatprep.subr.bf16.mxu0 %v3152
    %3571 = vmatpush1.bf16.msra.mxu0 %v3151
    %3572 = vmatprep.subr.bf16.mxu0 %v3144
    %3573 = vmatpush1.bf16.msra.mxu0 %v3143
    %3574 = vmatprep.subr.bf16.mxu0 %v3136
    %3575 = vmatpush1.bf16.msra.mxu0 %v3135
    %3576 = vmatprep.subr.bf16.mxu0 %v3256
    %3577 = vmatpush2.bf16.msra.mxu0 %v3255
    %3578 = vmatprep.subr.bf16.mxu0 %v3248
    %3579 = vmatpush2.bf16.msra.mxu0 %v3247
    %3580 = vmatprep.subr.bf16.mxu0 %v3240
    %3581 = vmatpush2.bf16.msra.mxu0 %v3239
    %3582 = vmatprep.subr.bf16.mxu0 %v3232
    %3583 = vmatpush2.bf16.msra.mxu0 %v3231
    %3584 = vmatprep.subr.bf16.mxu0 %v3224
    %3585 = vmatpush2.bf16.msra.mxu0 %v3223
    %3586 = vmatprep.subr.bf16.mxu0 %v3216
    %3587 = vmatpush2.bf16.msra.mxu0 %v3215
    %3588 = vmatprep.subr.bf16.mxu0 %v3208
    %3589 = vmatpush2.bf16.msra.mxu0 %v3207
    %3590 = vmatprep.subr.bf16.mxu0 %v3200
    %3591 = vmatpush2.bf16.msra.mxu0 %v3199
    %3592 = vmatprep.mubr.bf16.mxu0 %v1982
    %3593 = vmatmul.mubr.bf16.gmra.mxu0 %v1981
    %v3594 = vpop.f32.mrf.mxu0
    %v3595 = vadd.f32 %v3554, %v3594
    %v3596 = vpop.f32.mrf.mxu0
    %v3597 = vadd.f32 %v3556, %v3596
    %v3598 = vpop.f32.mrf.mxu0
    %v3599 = vpop.f32.mrf.mxu0
    %3600 = vdwg.mxu0
    %3601 = vmatprep.subr.bf16.mxu0 %v3066
    %3602 = vmatpush1.bf16.msra.mxu0 %v3065
    %3603 = vmatprep.subr.bf16.mxu0 %v3058
    %3604 = vmatpush1.bf16.msra.mxu0 %v3057
    %3605 = vmatprep.subr.bf16.mxu0 %v3050
    %3606 = vmatpush1.bf16.msra.mxu0 %v3049
    %3607 = vmatprep.subr.bf16.mxu0 %v3042
    %3608 = vmatpush1.bf16.msra.mxu0 %v3041
    %3609 = vmatprep.subr.bf16.mxu0 %v3034
    %3610 = vmatpush1.bf16.msra.mxu0 %v3033
    %3611 = vmatprep.subr.bf16.mxu0 %v3026
    %3612 = vmatpush1.bf16.msra.mxu0 %v3025
    %3613 = vmatprep.subr.bf16.mxu0 %v3018
    %3614 = vmatpush1.bf16.msra.mxu0 %v3017
    %3615 = vmatprep.subr.bf16.mxu0 %v3010
    %3616 = vmatpush1.bf16.msra.mxu0 %v3009
    %3617 = vmatprep.subr.bf16.mxu0 %v3130
    %3618 = vmatpush2.bf16.msra.mxu0 %v3129
    %3619 = vmatprep.subr.bf16.mxu0 %v3122
    %3620 = vmatpush2.bf16.msra.mxu0 %v3121
    %3621 = vmatprep.subr.bf16.mxu0 %v3114
    %3622 = vmatpush2.bf16.msra.mxu0 %v3113
    %3623 = vmatprep.subr.bf16.mxu0 %v3106
    %3624 = vmatpush2.bf16.msra.mxu0 %v3105
    %3625 = vmatprep.subr.bf16.mxu0 %v3098
    %3626 = vmatpush2.bf16.msra.mxu0 %v3097
    %3627 = vmatprep.subr.bf16.mxu0 %v3090
    %3628 = vmatpush2.bf16.msra.mxu0 %v3089
    %3629 = vmatprep.subr.bf16.mxu0 %v3082
    %3630 = vmatpush2.bf16.msra.mxu0 %v3081
    %3631 = vmatprep.subr.bf16.mxu0 %v3074
    %3632 = vmatpush2.bf16.msra.mxu0 %v3073
    %3633 = vmatprep.mubr.bf16.mxu0 %v1980
    %3634 = vmatmul.mubr.bf16.gmra.mxu0 %v1979
    %v3635 = vpop.f32.mrf.mxu0
    %v3636 = vadd.f32 0.0, %v3635
    %v3637 = vpop.f32.mrf.mxu0
    %v3638 = vadd.f32 0.0, %v3637
    %v3639 = vpop.f32.mrf.mxu0
    %v3640 = vpop.f32.mrf.mxu0
    %3641 = vdwg.mxu0
    %3642 = vmatprep.subr.bf16.mxu0 %v3194
    %3643 = vmatpush1.bf16.msra.mxu0 %v3193
    %3644 = vmatprep.subr.bf16.mxu0 %v3186
    %3645 = vmatpush1.bf16.msra.mxu0 %v3185
    %3646 = vmatprep.subr.bf16.mxu0 %v3178
    %3647 = vmatpush1.bf16.msra.mxu0 %v3177
    %3648 = vmatprep.subr.bf16.mxu0 %v3170
    %3649 = vmatpush1.bf16.msra.mxu0 %v3169
    %3650 = vmatprep.subr.bf16.mxu0 %v3162
    %3651 = vmatpush1.bf16.msra.mxu0 %v3161
    %3652 = vmatprep.subr.bf16.mxu0 %v3154
    %3653 = vmatpush1.bf16.msra.mxu0 %v3153
    %3654 = vmatprep.subr.bf16.mxu0 %v3146
    %3655 = vmatpush1.bf16.msra.mxu0 %v3145
    %3656 = vmatprep.subr.bf16.mxu0 %v3138
    %3657 = vmatpush1.bf16.msra.mxu0 %v3137
    %3658 = vmatprep.subr.bf16.mxu0 %v3258
    %3659 = vmatpush2.bf16.msra.mxu0 %v3257
    %3660 = vmatprep.subr.bf16.mxu0 %v3250
    %3661 = vmatpush2.bf16.msra.mxu0 %v3249
    %3662 = vmatprep.subr.bf16.mxu0 %v3242
    %3663 = vmatpush2.bf16.msra.mxu0 %v3241
    %3664 = vmatprep.subr.bf16.mxu0 %v3234
    %3665 = vmatpush2.bf16.msra.mxu0 %v3233
    %3666 = vmatprep.subr.bf16.mxu0 %v3226
    %3667 = vmatpush2.bf16.msra.mxu0 %v3225
    %3668 = vmatprep.subr.bf16.mxu0 %v3218
    %3669 = vmatpush2.bf16.msra.mxu0 %v3217
    %3670 = vmatprep.subr.bf16.mxu0 %v3210
    %3671 = vmatpush2.bf16.msra.mxu0 %v3209
    %3672 = vmatprep.subr.bf16.mxu0 %v3202
    %3673 = vmatpush2.bf16.msra.mxu0 %v3201
    %3674 = vmatprep.mubr.bf16.mxu0 %v1982
    %3675 = vmatmul.mubr.bf16.gmra.mxu0 %v1981
    %v3676 = vpop.f32.mrf.mxu0
    %v3677 = vadd.f32 %v3636, %v3676
    %v3678 = vpop.f32.mrf.mxu0
    %v3679 = vadd.f32 %v3638, %v3678
    %v3680 = vpop.f32.mrf.mxu0
    %v3681 = vpop.f32.mrf.mxu0
    %3682 = vdwg.mxu0
    %3683 = vmatprep.subr.bf16.mxu0 %v3068
    %3684 = vmatpush1.bf16.msra.mxu0 %v3067
    %3685 = vmatprep.subr.bf16.mxu0 %v3060
    %3686 = vmatpush1.bf16.msra.mxu0 %v3059
    %3687 = vmatprep.subr.bf16.mxu0 %v3052
    %3688 = vmatpush1.bf16.msra.mxu0 %v3051
    %3689 = vmatprep.subr.bf16.mxu0 %v3044
    %3690 = vmatpush1.bf16.msra.mxu0 %v3043
    %3691 = vmatprep.subr.bf16.mxu0 %v3036
    %3692 = vmatpush1.bf16.msra.mxu0 %v3035
    %3693 = vmatprep.subr.bf16.mxu0 %v3028
    %3694 = vmatpush1.bf16.msra.mxu0 %v3027
    %3695 = vmatprep.subr.bf16.mxu0 %v3020
    %3696 = vmatpush1.bf16.msra.mxu0 %v3019
    %3697 = vmatprep.subr.bf16.mxu0 %v3012
    %3698 = vmatpush1.bf16.msra.mxu0 %v3011
    %3699 = vmatprep.subr.bf16.mxu0 %v3132
    %3700 = vmatpush2.bf16.msra.mxu0 %v3131
    %3701 = vmatprep.subr.bf16.mxu0 %v3124
    %3702 = vmatpush2.bf16.msra.mxu0 %v3123
    %3703 = vmatprep.subr.bf16.mxu0 %v3116
    %3704 = vmatpush2.bf16.msra.mxu0 %v3115
    %3705 = vmatprep.subr.bf16.mxu0 %v3108
    %3706 = vmatpush2.bf16.msra.mxu0 %v3107
    %3707 = vmatprep.subr.bf16.mxu0 %v3100
    %3708 = vmatpush2.bf16.msra.mxu0 %v3099
    %3709 = vmatprep.subr.bf16.mxu0 %v3092
    %3710 = vmatpush2.bf16.msra.mxu0 %v3091
    %3711 = vmatprep.subr.bf16.mxu0 %v3084
    %3712 = vmatpush2.bf16.msra.mxu0 %v3083
    %3713 = vmatprep.subr.bf16.mxu0 %v3076
    %3714 = vmatpush2.bf16.msra.mxu0 %v3075
    %3715 = vmatprep.mubr.bf16.mxu0 %v1980
    %3716 = vmatmul.mubr.bf16.gmra.mxu0 %v1979
    %v3717 = vpop.f32.mrf.mxu0
    %v3718 = vadd.f32 0.0, %v3717
    %v3719 = vpop.f32.mrf.mxu0
    %v3720 = vadd.f32 0.0, %v3719
    %v3721 = vpop.f32.mrf.mxu0
    %v3722 = vpop.f32.mrf.mxu0
    %3723 = vdwg.mxu0
    %3724 = vmatprep.subr.bf16.mxu0 %v3196
    %3725 = vmatpush1.bf16.msra.mxu0 %v3195
    %3726 = vmatprep.subr.bf16.mxu0 %v3188
    %3727 = vmatpush1.bf16.msra.mxu0 %v3187
    %3728 = vmatprep.subr.bf16.mxu0 %v3180
    %3729 = vmatpush1.bf16.msra.mxu0 %v3179
    %3730 = vmatprep.subr.bf16.mxu0 %v3172
    %3731 = vmatpush1.bf16.msra.mxu0 %v3171
    %3732 = vmatprep.subr.bf16.mxu0 %v3164
    %3733 = vmatpush1.bf16.msra.mxu0 %v3163
    %3734 = vmatprep.subr.bf16.mxu0 %v3156
    %3735 = vmatpush1.bf16.msra.mxu0 %v3155
    %3736 = vmatprep.subr.bf16.mxu0 %v3148
    %3737 = vmatpush1.bf16.msra.mxu0 %v3147
    %3738 = vmatprep.subr.bf16.mxu0 %v3140
    %3739 = vmatpush1.bf16.msra.mxu0 %v3139
    %3740 = vmatprep.subr.bf16.mxu0 %v3260
    %3741 = vmatpush2.bf16.msra.mxu0 %v3259
    %3742 = vmatprep.subr.bf16.mxu0 %v3252
    %3743 = vmatpush2.bf16.msra.mxu0 %v3251
    %3744 = vmatprep.subr.bf16.mxu0 %v3244
    %3745 = vmatpush2.bf16.msra.mxu0 %v3243
    %3746 = vmatprep.subr.bf16.mxu0 %v3236
    %3747 = vmatpush2.bf16.msra.mxu0 %v3235
    %3748 = vmatprep.subr.bf16.mxu0 %v3228
    %3749 = vmatpush2.bf16.msra.mxu0 %v3227
    %3750 = vmatprep.subr.bf16.mxu0 %v3220
    %3751 = vmatpush2.bf16.msra.mxu0 %v3219
    %3752 = vmatprep.subr.bf16.mxu0 %v3212
    %3753 = vmatpush2.bf16.msra.mxu0 %v3211
    %3754 = vmatprep.subr.bf16.mxu0 %v3204
    %3755 = vmatpush2.bf16.msra.mxu0 %v3203
    %3756 = vmatprep.mubr.bf16.mxu0 %v1982
    %3757 = vmatmul.mubr.bf16.gmra.mxu0 %v1981
    %v3758 = vpop.f32.mrf.mxu0
    %v3759 = vadd.f32 %v3718, %v3758
    %v3760 = vpop.f32.mrf.mxu0
    %v3761 = vadd.f32 %v3720, %v3760
    %v3762 = vpop.f32.mrf.mxu0
    %v3763 = vpop.f32.mrf.mxu0
    %3764 = vdwg.mxu0
    %3765 = vmatprep.subr.bf16.mxu0 %v3070
    %3766 = vmatpush1.bf16.msra.mxu0 %v3069
    %3767 = vmatprep.subr.bf16.mxu0 %v3062
    %3768 = vmatpush1.bf16.msra.mxu0 %v3061
    %3769 = vmatprep.subr.bf16.mxu0 %v3054
    %3770 = vmatpush1.bf16.msra.mxu0 %v3053
    %3771 = vmatprep.subr.bf16.mxu0 %v3046
    %3772 = vmatpush1.bf16.msra.mxu0 %v3045
    %3773 = vmatprep.subr.bf16.mxu0 %v3038
    %3774 = vmatpush1.bf16.msra.mxu0 %v3037
    %3775 = vmatprep.subr.bf16.mxu0 %v3030
    %3776 = vmatpush1.bf16.msra.mxu0 %v3029
    %3777 = vmatprep.subr.bf16.mxu0 %v3022
    %3778 = vmatpush1.bf16.msra.mxu0 %v3021
    %3779 = vmatprep.subr.bf16.mxu0 %v3014
    %3780 = vmatpush1.bf16.msra.mxu0 %v3013
    %3781 = vmatprep.subr.bf16.mxu0 %v3134
    %3782 = vmatpush2.bf16.msra.mxu0 %v3133
    %3783 = vmatprep.subr.bf16.mxu0 %v3126
    %3784 = vmatpush2.bf16.msra.mxu0 %v3125
    %3785 = vmatprep.subr.bf16.mxu0 %v3118
    %3786 = vmatpush2.bf16.msra.mxu0 %v3117
    %3787 = vmatprep.subr.bf16.mxu0 %v3110
    %3788 = vmatpush2.bf16.msra.mxu0 %v3109
    %3789 = vmatprep.subr.bf16.mxu0 %v3102
    %3790 = vmatpush2.bf16.msra.mxu0 %v3101
    %3791 = vmatprep.subr.bf16.mxu0 %v3094
    %3792 = vmatpush2.bf16.msra.mxu0 %v3093
    %3793 = vmatprep.subr.bf16.mxu0 %v3086
    %3794 = vmatpush2.bf16.msra.mxu0 %v3085
    %3795 = vmatprep.subr.bf16.mxu0 %v3078
    %3796 = vmatpush2.bf16.msra.mxu0 %v3077
    %3797 = vmatprep.mubr.bf16.mxu0 %v1980
    %3798 = vmatmul.mubr.bf16.gmra.mxu0 %v1979
    %v3799 = vpop.f32.mrf.mxu0
    %v3800 = vadd.f32 0.0, %v3799
    %v3801 = vpop.f32.mrf.mxu0
    %v3802 = vadd.f32 0.0, %v3801
    %v3803 = vpop.f32.mrf.mxu0
    %v3804 = vpop.f32.mrf.mxu0
    %3805 = vdwg.mxu0
    %3806 = vmatprep.subr.bf16.mxu0 %v3198
    %3807 = vmatpush1.bf16.msra.mxu0 %v3197
    %3808 = vmatprep.subr.bf16.mxu0 %v3190
    %3809 = vmatpush1.bf16.msra.mxu0 %v3189
    %3810 = vmatprep.subr.bf16.mxu0 %v3182
    %3811 = vmatpush1.bf16.msra.mxu0 %v3181
    %3812 = vmatprep.subr.bf16.mxu0 %v3174
    %3813 = vmatpush1.bf16.msra.mxu0 %v3173
    %3814 = vmatprep.subr.bf16.mxu0 %v3166
    %3815 = vmatpush1.bf16.msra.mxu0 %v3165
    %3816 = vmatprep.subr.bf16.mxu0 %v3158
    %3817 = vmatpush1.bf16.msra.mxu0 %v3157
    %3818 = vmatprep.subr.bf16.mxu0 %v3150
    %3819 = vmatpush1.bf16.msra.mxu0 %v3149
    %3820 = vmatprep.subr.bf16.mxu0 %v3142
    %3821 = vmatpush1.bf16.msra.mxu0 %v3141
    %3822 = vmatprep.subr.bf16.mxu0 %v3262
    %3823 = vmatpush2.bf16.msra.mxu0 %v3261
    %3824 = vmatprep.subr.bf16.mxu0 %v3254
    %3825 = vmatpush2.bf16.msra.mxu0 %v3253
    %3826 = vmatprep.subr.bf16.mxu0 %v3246
    %3827 = vmatpush2.bf16.msra.mxu0 %v3245
    %3828 = vmatprep.subr.bf16.mxu0 %v3238
    %3829 = vmatpush2.bf16.msra.mxu0 %v3237
    %3830 = vmatprep.subr.bf16.mxu0 %v3230
    %3831 = vmatpush2.bf16.msra.mxu0 %v3229
    %3832 = vmatprep.subr.bf16.mxu0 %v3222
    %3833 = vmatpush2.bf16.msra.mxu0 %v3221
    %3834 = vmatprep.subr.bf16.mxu0 %v3214
    %3835 = vmatpush2.bf16.msra.mxu0 %v3213
    %3836 = vmatprep.subr.bf16.mxu0 %v3206
    %3837 = vmatpush2.bf16.msra.mxu0 %v3205
    %3838 = vmatprep.mubr.bf16.mxu0 %v1982
    %3839 = vmatmul.mubr.bf16.gmra.mxu0 %v1981
    %v3840 = vpop.f32.mrf.mxu0
    %v3841 = vadd.f32 %v3800, %v3840
    %v3842 = vpop.f32.mrf.mxu0
    %v3843 = vadd.f32 %v3802, %v3842
    %v3844 = vpop.f32.mrf.mxu0
    %v3845 = vpop.f32.mrf.mxu0
    %3846 = vdwg.mxu0
    %v3847 = vld [vmem:[%s3] sm:$0xff]
    %v3848 = vld [vmem:[%s3 + $0x8] sm:$0xff]
    %v3849 = vld [vmem:[%s3 + $0x10] sm:$0xff]
    %v3850 = vld [vmem:[%s3 + $0x18] sm:$0xff]
    %vm3851 = vcmask 1041408
    %v3852 = vsel %vm3851, %v3595, 0.0
    %v3853 = vrot.slane %v3852, 4
    %v3854 = vadd.f32 %v3852, %v3853
    %v3855 = vrot.slane %v3854, 2
    %v3856 = vadd.f32 %v3854, %v3855
    %v3857 = vrot.slane %v3856, 1
    %v3858 = vadd.f32 %v3856, %v3857
    %v3859 = vsel %vm3851, %v3597, 0.0
    %v3860 = vrot.slane %v3859, 4
    %v3861 = vadd.f32 %v3859, %v3860
    %v3862 = vrot.slane %v3861, 2
    %v3863 = vadd.f32 %v3861, %v3862
    %v3864 = vrot.slane %v3863, 1
    %v3865 = vadd.f32 %v3863, %v3864
    %v3866 = vsel %vm3851, %v3677, 0.0
    %v3867 = vrot.slane %v3866, 4
    %v3868 = vadd.f32 %v3866, %v3867
    %v3869 = vrot.slane %v3868, 2
    %v3870 = vadd.f32 %v3868, %v3869
    %v3871 = vrot.slane %v3870, 1
    %v3872 = vadd.f32 %v3870, %v3871
    %v3873 = vsel %vm3851, %v3679, 0.0
    %v3874 = vrot.slane %v3873, 4
    %v3875 = vadd.f32 %v3873, %v3874
    %v3876 = vrot.slane %v3875, 2
    %v3877 = vadd.f32 %v3875, %v3876
    %v3878 = vrot.slane %v3877, 1
    %v3879 = vadd.f32 %v3877, %v3878
    %v3880 = vsel %vm3851, %v3759, 0.0
    %v3881 = vrot.slane %v3880, 4
    %v3882 = vadd.f32 %v3880, %v3881
    %v3883 = vrot.slane %v3882, 2
    %v3884 = vadd.f32 %v3882, %v3883
    %v3885 = vrot.slane %v3884, 1
    %v3886 = vadd.f32 %v3884, %v3885
    %v3887 = vsel %vm3851, %v3761, 0.0
    %v3888 = vrot.slane %v3887, 4
    %v3889 = vadd.f32 %v3887, %v3888
    %v3890 = vrot.slane %v3889, 2
    %v3891 = vadd.f32 %v3889, %v3890
    %v3892 = vrot.slane %v3891, 1
    %v3893 = vadd.f32 %v3891, %v3892
    %v3894 = vsel %vm3851, %v3841, 0.0
    %v3895 = vrot.slane %v3894, 4
    %v3896 = vadd.f32 %v3894, %v3895
    %v3897 = vrot.slane %v3896, 2
    %v3898 = vadd.f32 %v3896, %v3897
    %v3899 = vrot.slane %v3898, 1
    %v3900 = vadd.f32 %v3898, %v3899
    %v3901 = vsel %vm3851, %v3843, 0.0
    %v3902 = vrot.slane %v3901, 4
    %v3903 = vadd.f32 %v3901, %v3902
    %v3904 = vrot.slane %v3903, 2
    %v3905 = vadd.f32 %v3903, %v3904
    %v3906 = vrot.slane %v3905, 1
    %v3907 = vadd.f32 %v3905, %v3906
    %v3908 = vmul.f32 %v3595, %v3595
    %v3909 = vmul.f32 %v3597, %v3597
    %v3910 = vmul.f32 %v3677, %v3677
    %v3911 = vmul.f32 %v3679, %v3679
    %v3912 = vmul.f32 %v3759, %v3759
    %v3913 = vmul.f32 %v3761, %v3761
    %v3914 = vmul.f32 %v3841, %v3841
    %v3915 = vmul.f32 %v3843, %v3843
    %v3916 = vsel %vm3851, %v3908, 0.0
    %v3917 = vrot.slane %v3916, 4
    %v3918 = vadd.f32 %v3916, %v3917
    %v3919 = vrot.slane %v3918, 2
    %v3920 = vadd.f32 %v3918, %v3919
    %v3921 = vrot.slane %v3920, 1
    %v3922 = vadd.f32 %v3920, %v3921
    %v3923 = vsel %vm3851, %v3909, 0.0
    %v3924 = vrot.slane %v3923, 4
    %v3925 = vadd.f32 %v3923, %v3924
    %v3926 = vrot.slane %v3925, 2
    %v3927 = vadd.f32 %v3925, %v3926
    %v3928 = vrot.slane %v3927, 1
    %v3929 = vadd.f32 %v3927, %v3928
    %v3930 = vsel %vm3851, %v3910, 0.0
    %v3931 = vrot.slane %v3930, 4
    %v3932 = vadd.f32 %v3930, %v3931
    %v3933 = vrot.slane %v3932, 2
    %v3934 = vadd.f32 %v3932, %v3933
    %v3935 = vrot.slane %v3934, 1
    %v3936 = vadd.f32 %v3934, %v3935
    %v3937 = vsel %vm3851, %v3911, 0.0
    %v3938 = vrot.slane %v3937, 4
    %v3939 = vadd.f32 %v3937, %v3938
    %v3940 = vrot.slane %v3939, 2
    %v3941 = vadd.f32 %v3939, %v3940
    %v3942 = vrot.slane %v3941, 1
    %v3943 = vadd.f32 %v3941, %v3942
    %v3944 = vsel %vm3851, %v3912, 0.0
    %v3945 = vrot.slane %v3944, 4
    %v3946 = vadd.f32 %v3944, %v3945
    %v3947 = vrot.slane %v3946, 2
    %v3948 = vadd.f32 %v3946, %v3947
    %v3949 = vrot.slane %v3948, 1
    %v3950 = vadd.f32 %v3948, %v3949
    %v3951 = vsel %vm3851, %v3913, 0.0
    %v3952 = vrot.slane %v3951, 4
    %v3953 = vadd.f32 %v3951, %v3952
    %v3954 = vrot.slane %v3953, 2
    %v3955 = vadd.f32 %v3953, %v3954
    %v3956 = vrot.slane %v3955, 1
    %v3957 = vadd.f32 %v3955, %v3956
    %v3958 = vsel %vm3851, %v3914, 0.0
    %v3959 = vrot.slane %v3958, 4
    %v3960 = vadd.f32 %v3958, %v3959
    %v3961 = vrot.slane %v3960, 2
    %v3962 = vadd.f32 %v3960, %v3961
    %v3963 = vrot.slane %v3962, 1
    %v3964 = vadd.f32 %v3962, %v3963
    %v3965 = vsel %vm3851, %v3915, 0.0
    %v3966 = vrot.slane %v3965, 4
    %v3967 = vadd.f32 %v3965, %v3966
    %v3968 = vrot.slane %v3967, 2
    %v3969 = vadd.f32 %v3967, %v3968
    %v3970 = vrot.slane %v3969, 1
    %v3971 = vadd.f32 %v3969, %v3970
    %vm3972 = vcmask 1040384
    %v3973 = vsel %vm3972, %v3858, %v3922
    %v3974 = vsel %vm3972, %v3865, %v3929
    %v3975 = vsel %vm3972, %v3872, %v3936
    %v3976 = vsel %vm3972, %v3879, %v3943
    %v3977 = vsel %vm3972, %v3886, %v3950
    %v3978 = vsel %vm3972, %v3893, %v3957
    %v3979 = vsel %vm3972, %v3900, %v3964
    %v3980 = vsel %vm3972, %v3907, %v3971
    %v3985 = vcombine.high %v3847, %v3847
    %v3986 = vcombine.high %v3848, %v3848
    %v3987 = vcombine.high %v3849, %v3849
    %v3988 = vcombine.high %v3850, %v3850
    %3993 = vmatprep.subr.mxu0 0.0
    %3994 = vmatpush1.xpose.msra.mxu0 0.0
    %3995 = vmatprep.subr.mxu0 0.0
    %3996 = vmatpush1.xpose.msra.mxu0 0.0
    %3997 = vmatprep.subr.mxu0 0.0
    %3998 = vmatpush1.xpose.msra.mxu0 0.0
    %3999 = vmatprep.subr.mxu0 0.0
    %4000 = vmatpush1.xpose.msra.mxu0 0.0
    %4001 = vmatprep.subr.mxu0 0.0
    %4002 = vmatpush1.xpose.msra.mxu0 0.0
    %4003 = vmatprep.subr.mxu0 0.0
    %4004 = vmatpush1.xpose.msra.mxu0 0.0
    %4005 = vmatprep.subr.mxu0 0.0
    %4006 = vmatpush1.xpose.msra.mxu0 0.0
    %4007 = vmatprep.subr.mxu0 0.0
    %4008 = vmatpush1.xpose.msra.mxu0 0.0
    %4009 = vmatprep.subr.mxu0 0.0
    %4010 = vmatpush1.xpose.msra.mxu0 0.0
    %4011 = vmatprep.subr.mxu0 0.0
    %4012 = vmatpush1.xpose.msra.mxu0 0.0
    %4013 = vmatprep.subr.mxu0 0.0
    %4014 = vmatpush1.xpose.msra.mxu0 0.0
    %4015 = vmatprep.subr.mxu0 0.0
    %4016 = vmatpush1.xpose.msra.mxu0 0.0
    %4017 = vmatprep.subr.mxu0 0.0
    %4018 = vmatpush1.xpose.msra.mxu0 0.0
    %4019 = vmatprep.subr.mxu0 0.0
    %4020 = vmatpush1.xpose.msra.mxu0 0.0
    %4021 = vmatprep.subr.mxu0 0.0
    %4022 = vmatpush1.xpose.msra.mxu0 0.0
    %4023 = vmatprep.subr.mxu0 %v3985
    %4024 = vmatpush1.xpose.msra.mxu0 %v3847
    %4025 = vmatprep.subr.mxu0 0.0
    %4026 = vmatpush2.xpose.msra.mxu0 0.0
    %4027 = vmatprep.subr.mxu0 0.0
    %4028 = vmatpush2.xpose.msra.mxu0 0.0
    %4029 = vmatprep.subr.mxu0 0.0
    %4030 = vmatpush2.xpose.msra.mxu0 0.0
    %4031 = vmatprep.subr.mxu0 0.0
    %4032 = vmatpush2.xpose.msra.mxu0 0.0
    %4033 = vmatprep.subr.mxu0 0.0
    %4034 = vmatpush2.xpose.msra.mxu0 0.0
    %4035 = vmatprep.subr.mxu0 0.0
    %4036 = vmatpush2.xpose.msra.mxu0 0.0
    %4037 = vmatprep.subr.mxu0 0.0
    %4038 = vmatpush2.xpose.msra.mxu0 0.0
    %4039 = vmatprep.subr.mxu0 0.0
    %4040 = vmatpush2.xpose.msra.mxu0 0.0
    %4041 = vmatprep.subr.mxu0 0.0
    %4042 = vmatpush2.xpose.msra.mxu0 0.0
    %4043 = vmatprep.subr.mxu0 0.0
    %4044 = vmatpush2.xpose.msra.mxu0 0.0
    %4045 = vmatprep.subr.mxu0 0.0
    %4046 = vmatpush2.xpose.msra.mxu0 0.0
    %4047 = vmatprep.subr.mxu0 0.0
    %4048 = vmatpush2.xpose.msra.mxu0 0.0
    %4049 = vmatprep.subr.mxu0 0.0
    %4050 = vmatpush2.xpose.msra.mxu0 0.0
    %4051 = vmatprep.subr.mxu0 0.0
    %4052 = vmatpush2.xpose.msra.mxu0 0.0
    %4053 = vmatprep.subr.mxu0 0.0
    %4054 = vmatpush2.xpose.msra.mxu0 0.0
    %4055 = vmatprep.subr.mxu0 0.0
    %4056 = vmatpush2.xpose.msra.mxu0 0.0
    %4057 = vmatprep.mubr.f32.mxu0 %v3974
    %4058 = vmatmul.mubr.f32.gmra.mxu0 %v3973
    %v4059 = vpop.f32.mrf.mxu0
    %v4060 = vadd.f32 0.0, %v4059
    %v4061 = vpop.f32.mrf.mxu0
    %4062 = vdwg.mxu0
    %4063 = vmatprep.subr.mxu0 0.0
    %4064 = vmatpush1.xpose.msra.mxu0 0.0
    %4065 = vmatprep.subr.mxu0 0.0
    %4066 = vmatpush1.xpose.msra.mxu0 0.0
    %4067 = vmatprep.subr.mxu0 0.0
    %4068 = vmatpush1.xpose.msra.mxu0 0.0
    %4069 = vmatprep.subr.mxu0 0.0
    %4070 = vmatpush1.xpose.msra.mxu0 0.0
    %4071 = vmatprep.subr.mxu0 0.0
    %4072 = vmatpush1.xpose.msra.mxu0 0.0
    %4073 = vmatprep.subr.mxu0 0.0
    %4074 = vmatpush1.xpose.msra.mxu0 0.0
    %4075 = vmatprep.subr.mxu0 0.0
    %4076 = vmatpush1.xpose.msra.mxu0 0.0
    %4077 = vmatprep.subr.mxu0 0.0
    %4078 = vmatpush1.xpose.msra.mxu0 0.0
    %4079 = vmatprep.subr.mxu0 0.0
    %4080 = vmatpush1.xpose.msra.mxu0 0.0
    %4081 = vmatprep.subr.mxu0 0.0
    %4082 = vmatpush1.xpose.msra.mxu0 0.0
    %4083 = vmatprep.subr.mxu0 0.0
    %4084 = vmatpush1.xpose.msra.mxu0 0.0
    %4085 = vmatprep.subr.mxu0 0.0
    %4086 = vmatpush1.xpose.msra.mxu0 0.0
    %4087 = vmatprep.subr.mxu0 0.0
    %4088 = vmatpush1.xpose.msra.mxu0 0.0
    %4089 = vmatprep.subr.mxu0 0.0
    %4090 = vmatpush1.xpose.msra.mxu0 0.0
    %4091 = vmatprep.subr.mxu0 0.0
    %4092 = vmatpush1.xpose.msra.mxu0 0.0
    %4093 = vmatprep.subr.mxu0 %v3986
    %4094 = vmatpush1.xpose.msra.mxu0 %v3848
    %4095 = vmatprep.subr.mxu0 0.0
    %4096 = vmatpush2.xpose.msra.mxu0 0.0
    %4097 = vmatprep.subr.mxu0 0.0
    %4098 = vmatpush2.xpose.msra.mxu0 0.0
    %4099 = vmatprep.subr.mxu0 0.0
    %4100 = vmatpush2.xpose.msra.mxu0 0.0
    %4101 = vmatprep.subr.mxu0 0.0
    %4102 = vmatpush2.xpose.msra.mxu0 0.0
    %4103 = vmatprep.subr.mxu0 0.0
    %4104 = vmatpush2.xpose.msra.mxu0 0.0
    %4105 = vmatprep.subr.mxu0 0.0
    %4106 = vmatpush2.xpose.msra.mxu0 0.0
    %4107 = vmatprep.subr.mxu0 0.0
    %4108 = vmatpush2.xpose.msra.mxu0 0.0
    %4109 = vmatprep.subr.mxu0 0.0
    %4110 = vmatpush2.xpose.msra.mxu0 0.0
    %4111 = vmatprep.subr.mxu0 0.0
    %4112 = vmatpush2.xpose.msra.mxu0 0.0
    %4113 = vmatprep.subr.mxu0 0.0
    %4114 = vmatpush2.xpose.msra.mxu0 0.0
    %4115 = vmatprep.subr.mxu0 0.0
    %4116 = vmatpush2.xpose.msra.mxu0 0.0
    %4117 = vmatprep.subr.mxu0 0.0
    %4118 = vmatpush2.xpose.msra.mxu0 0.0
    %4119 = vmatprep.subr.mxu0 0.0
    %4120 = vmatpush2.xpose.msra.mxu0 0.0
    %4121 = vmatprep.subr.mxu0 0.0
    %4122 = vmatpush2.xpose.msra.mxu0 0.0
    %4123 = vmatprep.subr.mxu0 0.0
    %4124 = vmatpush2.xpose.msra.mxu0 0.0
    %4125 = vmatprep.subr.mxu0 0.0
    %4126 = vmatpush2.xpose.msra.mxu0 0.0
    %4127 = vmatprep.mubr.f32.mxu0 %v3976
    %4128 = vmatmul.mubr.f32.gmra.mxu0 %v3975
    %v4129 = vpop.f32.mrf.mxu0
    %v4130 = vadd.f32 %v4060, %v4129
    %v4131 = vpop.f32.mrf.mxu0
    %4132 = vdwg.mxu0
    %4133 = vmatprep.subr.mxu0 0.0
    %4134 = vmatpush1.xpose.msra.mxu0 0.0
    %4135 = vmatprep.subr.mxu0 0.0
    %4136 = vmatpush1.xpose.msra.mxu0 0.0
    %4137 = vmatprep.subr.mxu0 0.0
    %4138 = vmatpush1.xpose.msra.mxu0 0.0
    %4139 = vmatprep.subr.mxu0 0.0
    %4140 = vmatpush1.xpose.msra.mxu0 0.0
    %4141 = vmatprep.subr.mxu0 0.0
    %4142 = vmatpush1.xpose.msra.mxu0 0.0
    %4143 = vmatprep.subr.mxu0 0.0
    %4144 = vmatpush1.xpose.msra.mxu0 0.0
    %4145 = vmatprep.subr.mxu0 0.0
    %4146 = vmatpush1.xpose.msra.mxu0 0.0
    %4147 = vmatprep.subr.mxu0 0.0
    %4148 = vmatpush1.xpose.msra.mxu0 0.0
    %4149 = vmatprep.subr.mxu0 0.0
    %4150 = vmatpush1.xpose.msra.mxu0 0.0
    %4151 = vmatprep.subr.mxu0 0.0
    %4152 = vmatpush1.xpose.msra.mxu0 0.0
    %4153 = vmatprep.subr.mxu0 0.0
    %4154 = vmatpush1.xpose.msra.mxu0 0.0
    %4155 = vmatprep.subr.mxu0 0.0
    %4156 = vmatpush1.xpose.msra.mxu0 0.0
    %4157 = vmatprep.subr.mxu0 0.0
    %4158 = vmatpush1.xpose.msra.mxu0 0.0
    %4159 = vmatprep.subr.mxu0 0.0
    %4160 = vmatpush1.xpose.msra.mxu0 0.0
    %4161 = vmatprep.subr.mxu0 0.0
    %4162 = vmatpush1.xpose.msra.mxu0 0.0
    %4163 = vmatprep.subr.mxu0 %v3987
    %4164 = vmatpush1.xpose.msra.mxu0 %v3849
    %4165 = vmatprep.subr.mxu0 0.0
    %4166 = vmatpush2.xpose.msra.mxu0 0.0
    %4167 = vmatprep.subr.mxu0 0.0
    %4168 = vmatpush2.xpose.msra.mxu0 0.0
    %4169 = vmatprep.subr.mxu0 0.0
    %4170 = vmatpush2.xpose.msra.mxu0 0.0
    %4171 = vmatprep.subr.mxu0 0.0
    %4172 = vmatpush2.xpose.msra.mxu0 0.0
    %4173 = vmatprep.subr.mxu0 0.0
    %4174 = vmatpush2.xpose.msra.mxu0 0.0
    %4175 = vmatprep.subr.mxu0 0.0
    %4176 = vmatpush2.xpose.msra.mxu0 0.0
    %4177 = vmatprep.subr.mxu0 0.0
    %4178 = vmatpush2.xpose.msra.mxu0 0.0
    %4179 = vmatprep.subr.mxu0 0.0
    %4180 = vmatpush2.xpose.msra.mxu0 0.0
    %4181 = vmatprep.subr.mxu0 0.0
    %4182 = vmatpush2.xpose.msra.mxu0 0.0
    %4183 = vmatprep.subr.mxu0 0.0
    %4184 = vmatpush2.xpose.msra.mxu0 0.0
    %4185 = vmatprep.subr.mxu0 0.0
    %4186 = vmatpush2.xpose.msra.mxu0 0.0
    %4187 = vmatprep.subr.mxu0 0.0
    %4188 = vmatpush2.xpose.msra.mxu0 0.0
    %4189 = vmatprep.subr.mxu0 0.0
    %4190 = vmatpush2.xpose.msra.mxu0 0.0
    %4191 = vmatprep.subr.mxu0 0.0
    %4192 = vmatpush2.xpose.msra.mxu0 0.0
    %4193 = vmatprep.subr.mxu0 0.0
    %4194 = vmatpush2.xpose.msra.mxu0 0.0
    %4195 = vmatprep.subr.mxu0 0.0
    %4196 = vmatpush2.xpose.msra.mxu0 0.0
    %4197 = vmatprep.mubr.f32.mxu0 %v3978
    %4198 = vmatmul.mubr.f32.gmra.mxu0 %v3977
    %v4199 = vpop.f32.mrf.mxu0
    %v4200 = vadd.f32 %v4130, %v4199
    %v4201 = vpop.f32.mrf.mxu0
    %4202 = vdwg.mxu0
    %4203 = vmatprep.subr.mxu0 0.0
    %4204 = vmatpush1.xpose.msra.mxu0 0.0
    %4205 = vmatprep.subr.mxu0 0.0
    %4206 = vmatpush1.xpose.msra.mxu0 0.0
    %4207 = vmatprep.subr.mxu0 0.0
    %4208 = vmatpush1.xpose.msra.mxu0 0.0
    %4209 = vmatprep.subr.mxu0 0.0
    %4210 = vmatpush1.xpose.msra.mxu0 0.0
    %4211 = vmatprep.subr.mxu0 0.0
    %4212 = vmatpush1.xpose.msra.mxu0 0.0
    %4213 = vmatprep.subr.mxu0 0.0
    %4214 = vmatpush1.xpose.msra.mxu0 0.0
    %4215 = vmatprep.subr.mxu0 0.0
    %4216 = vmatpush1.xpose.msra.mxu0 0.0
    %4217 = vmatprep.subr.mxu0 0.0
    %4218 = vmatpush1.xpose.msra.mxu0 0.0
    %4219 = vmatprep.subr.mxu0 0.0
    %4220 = vmatpush1.xpose.msra.mxu0 0.0
    %4221 = vmatprep.subr.mxu0 0.0
    %4222 = vmatpush1.xpose.msra.mxu0 0.0
    %4223 = vmatprep.subr.mxu0 0.0
    %4224 = vmatpush1.xpose.msra.mxu0 0.0
    %4225 = vmatprep.subr.mxu0 0.0
    %4226 = vmatpush1.xpose.msra.mxu0 0.0
    %4227 = vmatprep.subr.mxu0 0.0
    %4228 = vmatpush1.xpose.msra.mxu0 0.0
    %4229 = vmatprep.subr.mxu0 0.0
    %4230 = vmatpush1.xpose.msra.mxu0 0.0
    %4231 = vmatprep.subr.mxu0 0.0
    %4232 = vmatpush1.xpose.msra.mxu0 0.0
    %4233 = vmatprep.subr.mxu0 %v3988
    %4234 = vmatpush1.xpose.msra.mxu0 %v3850
    %4235 = vmatprep.subr.mxu0 0.0
    %4236 = vmatpush2.xpose.msra.mxu0 0.0
    %4237 = vmatprep.subr.mxu0 0.0
    %4238 = vmatpush2.xpose.msra.mxu0 0.0
    %4239 = vmatprep.subr.mxu0 0.0
    %4240 = vmatpush2.xpose.msra.mxu0 0.0
    %4241 = vmatprep.subr.mxu0 0.0
    %4242 = vmatpush2.xpose.msra.mxu0 0.0
    %4243 = vmatprep.subr.mxu0 0.0
    %4244 = vmatpush2.xpose.msra.mxu0 0.0
    %4245 = vmatprep.subr.mxu0 0.0
    %4246 = vmatpush2.xpose.msra.mxu0 0.0
    %4247 = vmatprep.subr.mxu0 0.0
    %4248 = vmatpush2.xpose.msra.mxu0 0.0
    %4249 = vmatprep.subr.mxu0 0.0
    %4250 = vmatpush2.xpose.msra.mxu0 0.0
    %4251 = vmatprep.subr.mxu0 0.0
    %4252 = vmatpush2.xpose.msra.mxu0 0.0
    %4253 = vmatprep.subr.mxu0 0.0
    %4254 = vmatpush2.xpose.msra.mxu0 0.0
    %4255 = vmatprep.subr.mxu0 0.0
    %4256 = vmatpush2.xpose.msra.mxu0 0.0
    %4257 = vmatprep.subr.mxu0 0.0
    %4258 = vmatpush2.xpose.msra.mxu0 0.0
    %4259 = vmatprep.subr.mxu0 0.0
    %4260 = vmatpush2.xpose.msra.mxu0 0.0
    %4261 = vmatprep.subr.mxu0 0.0
    %4262 = vmatpush2.xpose.msra.mxu0 0.0
    %4263 = vmatprep.subr.mxu0 0.0
    %4264 = vmatpush2.xpose.msra.mxu0 0.0
    %4265 = vmatprep.subr.mxu0 0.0
    %4266 = vmatpush2.xpose.msra.mxu0 0.0
    %4267 = vmatprep.mubr.f32.mxu0 %v3980
    %4268 = vmatmul.mubr.f32.gmra.mxu0 %v3979
    %v4269 = vpop.f32.mrf.mxu0
    %v4270 = vadd.f32 %v4200, %v4269
    %v4271 = vpop.f32.mrf.mxu0
    %4272 = vdwg.mxu0
    %v4273 = vmul.f32 %v4270, 0.001953125
    %v4274 = vmul.f32 %v4273, %v4273
    %v4276 = vrot.slane %v4274, 7
    %v4278 = vsub.f32 %v4273, %v4276
    %v4279 = vld [vmem:[%s4] sm:$0x1]
    %v4280 = vadd.f32 %v4278, 1e-05
    %v4281 = vrsqrt.pop %v4280
    %v4284 = vunpack.c.l.s4 1966171168
    %v4285 = vunpack.c.0.s8 %v4284
    %v4286 = vlaneseq
    %v4287 = vshrl.u32 %v4286, 7
    %v4288 = vsub.s32 %v4285, %v4287
    %v4289 = vrot.slane %v4281, %v4288
    %v4290 = vcombine.high %v4289, %v4289
    %v4292 = vunpack.c.l.s4 1966171168
    %v4293 = vunpack.c.0.s8 %v4292
    %v4294 = vlaneseq
    %v4295 = vshrl.u32 %v4294, 7
    %v4296 = vsub.s32 %v4293, %v4295
    %v4297 = vrot.slane %v4290, %v4296
    %v4299 = vmul.f32 %v4279, %v4297
    %v4300 = vld [vmem:[%s5] sm:$0x1]
    %v4301 = vmul.f32 %v4273, %v4299
    %v4302 = vsub.f32 %v4300, %v4301
    %v4304 = vlaneseq
    %v4305 = vshrl.u32 %v4304, 7
    %v4306 = vsub.s32 0, %v4305
    %v4307 = vrot.slane %v4302, %v4306
    %v4309 = vsel %vm3972, %v4299, %v4307
    %vm4310 = vcmask 31744
    %v4312 = vsel %vm4310, %v4309, 0
    %vm4314 = vcmask 1043456
    %v4315 = vsel %vm4314, %v3847, 0
    %v4317 = vsel %vm4314, %v3985, 0
    %v4319 = vsel %vm4314, %v3848, 0
    %v4321 = vsel %vm4314, %v3986, 0
    %v4323 = vsel %vm4314, %v3849, 0
    %v4325 = vsel %vm4314, %v3987, 0
    %v4327 = vsel %vm4314, %v3850, 0
    %v4329 = vsel %vm4314, %v3988, 0
    %4331 = vmatprep.subr.mxu0 0.0
    %4332 = vmatpush1.msra.mxu0 0.0
    %4333 = vmatprep.subr.mxu0 0.0
    %4334 = vmatpush1.msra.mxu0 0.0
    %4335 = vmatprep.subr.mxu0 0.0
    %4336 = vmatpush1.msra.mxu0 0.0
    %4337 = vmatprep.subr.mxu0 0.0
    %4338 = vmatpush1.msra.mxu0 0.0
    %4339 = vmatprep.subr.mxu0 0.0
    %4340 = vmatpush1.msra.mxu0 0.0
    %4341 = vmatprep.subr.mxu0 0.0
    %4342 = vmatpush1.msra.mxu0 0.0
    %4343 = vmatprep.subr.mxu0 0.0
    %4344 = vmatpush1.msra.mxu0 0.0
    %4345 = vmatprep.subr.mxu0 0.0
    %4346 = vmatpush1.msra.mxu0 0.0
    %4347 = vmatprep.subr.mxu0 0.0
    %4348 = vmatpush1.msra.mxu0 0.0
    %4349 = vmatprep.subr.mxu0 0.0
    %4350 = vmatpush1.msra.mxu0 0.0
    %4351 = vmatprep.subr.mxu0 0.0
    %4352 = vmatpush1.msra.mxu0 0.0
    %4353 = vmatprep.subr.mxu0 0.0
    %4354 = vmatpush1.msra.mxu0 0.0
    %4355 = vmatprep.subr.mxu0 0.0
    %4356 = vmatpush1.msra.mxu0 0.0
    %4357 = vmatprep.subr.mxu0 0.0
    %4358 = vmatpush1.msra.mxu0 0.0
    %4359 = vmatprep.subr.mxu0 0.0
    %4360 = vmatpush1.msra.mxu0 0.0
    %4361 = vmatprep.subr.mxu0 %v4317
    %4362 = vmatpush1.msra.mxu0 %v4315
    %4363 = vmatprep.subr.mxu0 0.0
    %4364 = vmatpush2.msra.mxu0 0.0
    %4365 = vmatprep.subr.mxu0 0.0
    %4366 = vmatpush2.msra.mxu0 0.0
    %4367 = vmatprep.subr.mxu0 0.0
    %4368 = vmatpush2.msra.mxu0 0.0
    %4369 = vmatprep.subr.mxu0 0.0
    %4370 = vmatpush2.msra.mxu0 0.0
    %4371 = vmatprep.subr.mxu0 0.0
    %4372 = vmatpush2.msra.mxu0 0.0
    %4373 = vmatprep.subr.mxu0 0.0
    %4374 = vmatpush2.msra.mxu0 0.0
    %4375 = vmatprep.subr.mxu0 0.0
    %4376 = vmatpush2.msra.mxu0 0.0
    %4377 = vmatprep.subr.mxu0 0.0
    %4378 = vmatpush2.msra.mxu0 0.0
    %4379 = vmatprep.subr.mxu0 0.0
    %4380 = vmatpush2.msra.mxu0 0.0
    %4381 = vmatprep.subr.mxu0 0.0
    %4382 = vmatpush2.msra.mxu0 0.0
    %4383 = vmatprep.subr.mxu0 0.0
    %4384 = vmatpush2.msra.mxu0 0.0
    %4385 = vmatprep.subr.mxu0 0.0
    %4386 = vmatpush2.msra.mxu0 0.0
    %4387 = vmatprep.subr.mxu0 0.0
    %4388 = vmatpush2.msra.mxu0 0.0
    %4389 = vmatprep.subr.mxu0 0.0
    %4390 = vmatpush2.msra.mxu0 0.0
    %4391 = vmatprep.subr.mxu0 0.0
    %4392 = vmatpush2.msra.mxu0 0.0
    %4393 = vmatprep.subr.mxu0 0.0
    %4394 = vmatpush2.msra.mxu0 0.0
    %4395 = vmatprep.mubr.f32.mxu0 0.0
    %4396 = vmatmul.mubr.f32.gmra.mxu0 %v4312
    %v4397 = vpop.f32.mrf.mxu0
    %v4398 = vadd.f32 0.0, %v4397
    %v4399 = vpop.f32.mrf.mxu0
    %v4400 = vadd.f32 0.0, %v4399
    %4401 = vdwg.mxu0
    %4402 = vmatprep.subr.mxu0 0.0
    %4403 = vmatpush1.msra.mxu0 0.0
    %4404 = vmatprep.subr.mxu0 0.0
    %4405 = vmatpush1.msra.mxu0 0.0
    %4406 = vmatprep.subr.mxu0 0.0
    %4407 = vmatpush1.msra.mxu0 0.0
    %4408 = vmatprep.subr.mxu0 0.0
    %4409 = vmatpush1.msra.mxu0 0.0
    %4410 = vmatprep.subr.mxu0 0.0
    %4411 = vmatpush1.msra.mxu0 0.0
    %4412 = vmatprep.subr.mxu0 0.0
    %4413 = vmatpush1.msra.mxu0 0.0
    %4414 = vmatprep.subr.mxu0 0.0
    %4415 = vmatpush1.msra.mxu0 0.0
    %4416 = vmatprep.subr.mxu0 0.0
    %4417 = vmatpush1.msra.mxu0 0.0
    %4418 = vmatprep.subr.mxu0 0.0
    %4419 = vmatpush1.msra.mxu0 0.0
    %4420 = vmatprep.subr.mxu0 0.0
    %4421 = vmatpush1.msra.mxu0 0.0
    %4422 = vmatprep.subr.mxu0 0.0
    %4423 = vmatpush1.msra.mxu0 0.0
    %4424 = vmatprep.subr.mxu0 0.0
    %4425 = vmatpush1.msra.mxu0 0.0
    %4426 = vmatprep.subr.mxu0 0.0
    %4427 = vmatpush1.msra.mxu0 0.0
    %4428 = vmatprep.subr.mxu0 0.0
    %4429 = vmatpush1.msra.mxu0 0.0
    %4430 = vmatprep.subr.mxu0 0.0
    %4431 = vmatpush1.msra.mxu0 0.0
    %4432 = vmatprep.subr.mxu0 %v4321
    %4433 = vmatpush1.msra.mxu0 %v4319
    %4434 = vmatprep.subr.mxu0 0.0
    %4435 = vmatpush2.msra.mxu0 0.0
    %4436 = vmatprep.subr.mxu0 0.0
    %4437 = vmatpush2.msra.mxu0 0.0
    %4438 = vmatprep.subr.mxu0 0.0
    %4439 = vmatpush2.msra.mxu0 0.0
    %4440 = vmatprep.subr.mxu0 0.0
    %4441 = vmatpush2.msra.mxu0 0.0
    %4442 = vmatprep.subr.mxu0 0.0
    %4443 = vmatpush2.msra.mxu0 0.0
    %4444 = vmatprep.subr.mxu0 0.0
    %4445 = vmatpush2.msra.mxu0 0.0
    %4446 = vmatprep.subr.mxu0 0.0
    %4447 = vmatpush2.msra.mxu0 0.0
    %4448 = vmatprep.subr.mxu0 0.0
    %4449 = vmatpush2.msra.mxu0 0.0
    %4450 = vmatprep.subr.mxu0 0.0
    %4451 = vmatpush2.msra.mxu0 0.0
    %4452 = vmatprep.subr.mxu0 0.0
    %4453 = vmatpush2.msra.mxu0 0.0
    %4454 = vmatprep.subr.mxu0 0.0
    %4455 = vmatpush2.msra.mxu0 0.0
    %4456 = vmatprep.subr.mxu0 0.0
    %4457 = vmatpush2.msra.mxu0 0.0
    %4458 = vmatprep.subr.mxu0 0.0
    %4459 = vmatpush2.msra.mxu0 0.0
    %4460 = vmatprep.subr.mxu0 0.0
    %4461 = vmatpush2.msra.mxu0 0.0
    %4462 = vmatprep.subr.mxu0 0.0
    %4463 = vmatpush2.msra.mxu0 0.0
    %4464 = vmatprep.subr.mxu0 0.0
    %4465 = vmatpush2.msra.mxu0 0.0
    %4466 = vmatprep.mubr.f32.mxu0 0.0
    %4467 = vmatmul.mubr.f32.gmra.mxu0 %v4312
    %v4468 = vpop.f32.mrf.mxu0
    %v4469 = vadd.f32 0.0, %v4468
    %v4470 = vpop.f32.mrf.mxu0
    %v4471 = vadd.f32 0.0, %v4470
    %4472 = vdwg.mxu0
    %4473 = vmatprep.subr.mxu0 0.0
    %4474 = vmatpush1.msra.mxu0 0.0
    %4475 = vmatprep.subr.mxu0 0.0
    %4476 = vmatpush1.msra.mxu0 0.0
    %4477 = vmatprep.subr.mxu0 0.0
    %4478 = vmatpush1.msra.mxu0 0.0
    %4479 = vmatprep.subr.mxu0 0.0
    %4480 = vmatpush1.msra.mxu0 0.0
    %4481 = vmatprep.subr.mxu0 0.0
    %4482 = vmatpush1.msra.mxu0 0.0
    %4483 = vmatprep.subr.mxu0 0.0
    %4484 = vmatpush1.msra.mxu0 0.0
    %4485 = vmatprep.subr.mxu0 0.0
    %4486 = vmatpush1.msra.mxu0 0.0
    %4487 = vmatprep.subr.mxu0 0.0
    %4488 = vmatpush1.msra.mxu0 0.0
    %4489 = vmatprep.subr.mxu0 0.0
    %4490 = vmatpush1.msra.mxu0 0.0
    %4491 = vmatprep.subr.mxu0 0.0
    %4492 = vmatpush1.msra.mxu0 0.0
    %4493 = vmatprep.subr.mxu0 0.0
    %4494 = vmatpush1.msra.mxu0 0.0
    %4495 = vmatprep.subr.mxu0 0.0
    %4496 = vmatpush1.msra.mxu0 0.0
    %4497 = vmatprep.subr.mxu0 0.0
    %4498 = vmatpush1.msra.mxu0 0.0
    %4499 = vmatprep.subr.mxu0 0.0
    %4500 = vmatpush1.msra.mxu0 0.0
    %4501 = vmatprep.subr.mxu0 0.0
    %4502 = vmatpush1.msra.mxu0 0.0
    %4503 = vmatprep.subr.mxu0 %v4325
    %4504 = vmatpush1.msra.mxu0 %v4323
    %4505 = vmatprep.subr.mxu0 0.0
    %4506 = vmatpush2.msra.mxu0 0.0
    %4507 = vmatprep.subr.mxu0 0.0
    %4508 = vmatpush2.msra.mxu0 0.0
    %4509 = vmatprep.subr.mxu0 0.0
    %4510 = vmatpush2.msra.mxu0 0.0
    %4511 = vmatprep.subr.mxu0 0.0
    %4512 = vmatpush2.msra.mxu0 0.0
    %4513 = vmatprep.subr.mxu0 0.0
    %4514 = vmatpush2.msra.mxu0 0.0
    %4515 = vmatprep.subr.mxu0 0.0
    %4516 = vmatpush2.msra.mxu0 0.0
    %4517 = vmatprep.subr.mxu0 0.0
    %4518 = vmatpush2.msra.mxu0 0.0
    %4519 = vmatprep.subr.mxu0 0.0
    %4520 = vmatpush2.msra.mxu0 0.0
    %4521 = vmatprep.subr.mxu0 0.0
    %4522 = vmatpush2.msra.mxu0 0.0
    %4523 = vmatprep.subr.mxu0 0.0
    %4524 = vmatpush2.msra.mxu0 0.0
    %4525 = vmatprep.subr.mxu0 0.0
    %4526 = vmatpush2.msra.mxu0 0.0
    %4527 = vmatprep.subr.mxu0 0.0
    %4528 = vmatpush2.msra.mxu0 0.0
    %4529 = vmatprep.subr.mxu0 0.0
    %4530 = vmatpush2.msra.mxu0 0.0
    %4531 = vmatprep.subr.mxu0 0.0
    %4532 = vmatpush2.msra.mxu0 0.0
    %4533 = vmatprep.subr.mxu0 0.0
    %4534 = vmatpush2.msra.mxu0 0.0
    %4535 = vmatprep.subr.mxu0 0.0
    %4536 = vmatpush2.msra.mxu0 0.0
    %4537 = vmatprep.mubr.f32.mxu0 0.0
    %4538 = vmatmul.mubr.f32.gmra.mxu0 %v4312
    %v4539 = vpop.f32.mrf.mxu0
    %v4540 = vadd.f32 0.0, %v4539
    %v4541 = vpop.f32.mrf.mxu0
    %v4542 = vadd.f32 0.0, %v4541
    %4543 = vdwg.mxu0
    %4544 = vmatprep.subr.mxu0 0.0
    %4545 = vmatpush1.msra.mxu0 0.0
    %4546 = vmatprep.subr.mxu0 0.0
    %4547 = vmatpush1.msra.mxu0 0.0
    %4548 = vmatprep.subr.mxu0 0.0
    %4549 = vmatpush1.msra.mxu0 0.0
    %4550 = vmatprep.subr.mxu0 0.0
    %4551 = vmatpush1.msra.mxu0 0.0
    %4552 = vmatprep.subr.mxu0 0.0
    %4553 = vmatpush1.msra.mxu0 0.0
    %4554 = vmatprep.subr.mxu0 0.0
    %4555 = vmatpush1.msra.mxu0 0.0
    %4556 = vmatprep.subr.mxu0 0.0
    %4557 = vmatpush1.msra.mxu0 0.0
    %4558 = vmatprep.subr.mxu0 0.0
    %4559 = vmatpush1.msra.mxu0 0.0
    %4560 = vmatprep.subr.mxu0 0.0
    %4561 = vmatpush1.msra.mxu0 0.0
    %4562 = vmatprep.subr.mxu0 0.0
    %4563 = vmatpush1.msra.mxu0 0.0
    %4564 = vmatprep.subr.mxu0 0.0
    %4565 = vmatpush1.msra.mxu0 0.0
    %4566 = vmatprep.subr.mxu0 0.0
    %4567 = vmatpush1.msra.mxu0 0.0
    %4568 = vmatprep.subr.mxu0 0.0
    %4569 = vmatpush1.msra.mxu0 0.0
    %4570 = vmatprep.subr.mxu0 0.0
    %4571 = vmatpush1.msra.mxu0 0.0
    %4572 = vmatprep.subr.mxu0 0.0
    %4573 = vmatpush1.msra.mxu0 0.0
    %4574 = vmatprep.subr.mxu0 %v4329
    %4575 = vmatpush1.msra.mxu0 %v4327
    %4576 = vmatprep.subr.mxu0 0.0
    %4577 = vmatpush2.msra.mxu0 0.0
    %4578 = vmatprep.subr.mxu0 0.0
    %4579 = vmatpush2.msra.mxu0 0.0
    %4580 = vmatprep.subr.mxu0 0.0
    %4581 = vmatpush2.msra.mxu0 0.0
    %4582 = vmatprep.subr.mxu0 0.0
    %4583 = vmatpush2.msra.mxu0 0.0
    %4584 = vmatprep.subr.mxu0 0.0
    %4585 = vmatpush2.msra.mxu0 0.0
    %4586 = vmatprep.subr.mxu0 0.0
    %4587 = vmatpush2.msra.mxu0 0.0
    %4588 = vmatprep.subr.mxu0 0.0
    %4589 = vmatpush2.msra.mxu0 0.0
    %4590 = vmatprep.subr.mxu0 0.0
    %4591 = vmatpush2.msra.mxu0 0.0
    %4592 = vmatprep.subr.mxu0 0.0
    %4593 = vmatpush2.msra.mxu0 0.0
    %4594 = vmatprep.subr.mxu0 0.0
    %4595 = vmatpush2.msra.mxu0 0.0
    %4596 = vmatprep.subr.mxu0 0.0
    %4597 = vmatpush2.msra.mxu0 0.0
    %4598 = vmatprep.subr.mxu0 0.0
    %4599 = vmatpush2.msra.mxu0 0.0
    %4600 = vmatprep.subr.mxu0 0.0
    %4601 = vmatpush2.msra.mxu0 0.0
    %4602 = vmatprep.subr.mxu0 0.0
    %4603 = vmatpush2.msra.mxu0 0.0
    %4604 = vmatprep.subr.mxu0 0.0
    %4605 = vmatpush2.msra.mxu0 0.0
    %4606 = vmatprep.subr.mxu0 0.0
    %4607 = vmatpush2.msra.mxu0 0.0
    %4608 = vmatprep.mubr.f32.mxu0 0.0
    %4609 = vmatmul.mubr.f32.gmra.mxu0 %v4312
    %v4610 = vpop.f32.mrf.mxu0
    %v4611 = vadd.f32 0.0, %v4610
    %v4612 = vpop.f32.mrf.mxu0
    %v4613 = vadd.f32 0.0, %v4612
    %4614 = vdwg.mxu0
    %v4615 = vlaneseq
    %v4616 = vshrl.u32 %v4615, 7
    %v4617 = vsub.s32 0, %v4616
    %v4618 = vrot.slane %v4398, %v4617
    %v4619 = vlaneseq
    %v4620 = vshrl.u32 %v4619, 7
    %v4621 = vsub.s32 0, %v4620
    %v4622 = vrot.slane %v4400, %v4621
    %v4623 = vlaneseq
    %v4624 = vshrl.u32 %v4623, 7
    %v4625 = vsub.s32 0, %v4624
    %v4626 = vrot.slane %v4469, %v4625
    %v4627 = vlaneseq
    %v4628 = vshrl.u32 %v4627, 7
    %v4629 = vsub.s32 0, %v4628
    %v4630 = vrot.slane %v4471, %v4629
    %v4631 = vlaneseq
    %v4632 = vshrl.u32 %v4631, 7
    %v4633 = vsub.s32 0, %v4632
    %v4634 = vrot.slane %v4540, %v4633
    %v4635 = vlaneseq
    %v4636 = vshrl.u32 %v4635, 7
    %v4637 = vsub.s32 0, %v4636
    %v4638 = vrot.slane %v4542, %v4637
    %v4639 = vlaneseq
    %v4640 = vshrl.u32 %v4639, 7
    %v4641 = vsub.s32 0, %v4640
    %v4642 = vrot.slane %v4611, %v4641
    %v4643 = vlaneseq
    %v4644 = vshrl.u32 %v4643, 7
    %v4645 = vsub.s32 0, %v4644
    %v4646 = vrot.slane %v4613, %v4645
    %v4647 = vmul.f32 %v3595, %v4618
    %v4648 = vmul.f32 %v3597, %v4622
    %v4649 = vmul.f32 %v3677, %v4626
    %v4650 = vmul.f32 %v3679, %v4630
    %v4651 = vmul.f32 %v3759, %v4634
    %v4652 = vmul.f32 %v3761, %v4638
    %v4653 = vmul.f32 %v3841, %v4642
    %v4654 = vmul.f32 %v3843, %v4646
    %v4655 = vlaneseq
    %v4656 = vshrl.u32 %v4655, 7
    %v4657 = vsub.s32 1, %v4656
    %v4658 = vrot.slane %v4398, %v4657
    %v4659 = vlaneseq
    %v4660 = vshrl.u32 %v4659, 7
    %v4661 = vsub.s32 1, %v4660
    %v4662 = vrot.slane %v4400, %v4661
    %v4663 = vlaneseq
    %v4664 = vshrl.u32 %v4663, 7
    %v4665 = vsub.s32 1, %v4664
    %v4666 = vrot.slane %v4469, %v4665
    %v4667 = vlaneseq
    %v4668 = vshrl.u32 %v4667, 7
    %v4669 = vsub.s32 1, %v4668
    %v4670 = vrot.slane %v4471, %v4669
    %v4671 = vlaneseq
    %v4672 = vshrl.u32 %v4671, 7
    %v4673 = vsub.s32 1, %v4672
    %v4674 = vrot.slane %v4540, %v4673
    %v4675 = vlaneseq
    %v4676 = vshrl.u32 %v4675, 7
    %v4677 = vsub.s32 1, %v4676
    %v4678 = vrot.slane %v4542, %v4677
    %v4679 = vlaneseq
    %v4680 = vshrl.u32 %v4679, 7
    %v4681 = vsub.s32 1, %v4680
    %v4682 = vrot.slane %v4611, %v4681
    %v4683 = vlaneseq
    %v4684 = vshrl.u32 %v4683, 7
    %v4685 = vsub.s32 1, %v4684
    %v4686 = vrot.slane %v4613, %v4685
    %v4687 = vadd.f32 %v4647, %v4658
    %v4688 = vadd.f32 %v4648, %v4662
    %v4689 = vadd.f32 %v4649, %v4666
    %v4690 = vadd.f32 %v4650, %v4670
    %v4691 = vadd.f32 %v4651, %v4674
    %v4692 = vadd.f32 %v4652, %v4678
    %v4693 = vadd.f32 %v4653, %v4682
    %v4694 = vadd.f32 %v4654, %v4686
    %4695 = vst [vmem:[%s6] sm:$0xff] %v51
    %4696 = vst [vmem:[%s6 + $0x8] sm:$0xff] %v52
    %v4705 = vcombine.low %v4687, %v4688
    %v4706 = vcombine.low %v4689, %v4690
    %v4708 = vunpack.c.l.s4 1983009808
    %v4709 = vunpack.c.0.s8 %v4708
    %v4710 = vlaneseq
    %v4711 = vshrl.u32 %v4710, 7
    %v4712 = vsub.s32 %v4709, %v4711
    %v4713 = vrot.slane %v4705, %v4712
    %v4715 = vunpack.c.l.s4 1983009808
    %v4716 = vunpack.c.0.s8 %v4715
    %v4717 = vlaneseq
    %v4718 = vshrl.u32 %v4717, 7
    %v4719 = vsub.s32 %v4716, %v4718
    %v4720 = vrot.slane %v4706, %v4719
    %v4721 = vcombine.low %v4713, %v4720
    %v4722 = vcombine.low %v4691, %v4692
    %v4723 = vcombine.low %v4693, %v4694
    %v4725 = vunpack.c.l.s4 1983009808
    %v4726 = vunpack.c.0.s8 %v4725
    %v4727 = vlaneseq
    %v4728 = vshrl.u32 %v4727, 7
    %v4729 = vsub.s32 %v4726, %v4728
    %v4730 = vrot.slane %v4722, %v4729
    %v4732 = vunpack.c.l.s4 1983009808
    %v4733 = vunpack.c.0.s8 %v4732
    %v4734 = vlaneseq
    %v4735 = vshrl.u32 %v4734, 7
    %v4736 = vsub.s32 %v4733, %v4735
    %v4737 = vrot.slane %v4723, %v4736
    %v4738 = vcombine.low %v4730, %v4737
    %4741 = vst [vmem:[%s6 + $0x10] sm:$0xff] %v4721
    %4742 = vst [vmem:[%s6 + $0x18] sm:$0xff] %v4738
    // Predicated region
    $region34: #{unet_block_forward.1} parent=1 // pred_check
      _
    $region35: #{unet_block_forward.1} parent=1 // pred_check_branch
      %4744 = sbr.rel (0) target = $region37
    $region36: #{unet_block_forward.1} parent=1 // pred_region
      _
    $region37: #{unet_block_forward.1} parent=1 // pred_fallthru
      _
    // Predicated region
    $region38: #{unet_block_forward.1} parent=1 // pred_check
      _
    $region39: #{unet_block_forward.1} parent=1 // pred_check_branch
      %4746 = sbr.rel (0) target = $region41
    $region40: #{unet_block_forward.1} parent=1 // pred_region
      _
    $region41: #{unet_block_forward.1} parent=1 // pred_fallthru
      _
    %4747 = vsyncpa [#allocation3], 1
    %4748 = vsyncpa [#allocation5], 1

</llo_original>
